<compile_context>
chip_gen: v7x
topology: tpu7x:2x2x1
jax: 0.10.0
libtpu: 0.0.40
codegen_flags: <defaults>
</compile_context>

<pallas_src>
import jax
import jax.numpy as jnp
from jax.experimental import pallas as pl
from jax.experimental.pallas import tpu as pltpu


def _block_kernel(x_ref, w1_ref, b1_ref, w2_ref, b2_ref,
                  wf1_ref, bf1_ref, wf2_ref, bf2_ref, out_ref, pad_ref):
    _, H, W, C = out_ref.shape

    x_in = x_ref[0].astype(jnp.float32)                       # (H, W, C)

    # --- build zero-padded input in VMEM (halo constructed in-kernel) -------
    pad_ref[...] = jnp.zeros(pad_ref.shape, pad_ref.dtype)     # border := 0
    pad_ref[1:H + 1, 1:W + 1, :] = x_in

    def im2col(p):
        # p: (H+2, W+2, C) -> (H*W, 9*C); tap order (dy, dx) matches the
        # HWIO weight reshape (3,3,C,C) -> (9*C, C) done in the wrapper.
        return jnp.concatenate(
            [p[dy:dy + H, dx:dx + W, :].reshape(H * W, C)
             for dy in range(3) for dx in range(3)], axis=-1)

    xp = pad_ref[...]                                          # (H+2, W+2, C)

    # --- conv1 (single matmul) + bias + LeakyReLU(0.2) ----------------------
    y1 = jnp.dot(im2col(xp), w1_ref[...], preferred_element_type=jnp.float32)
    y1 = y1 + b1_ref[...]
    y1 = jnp.where(y1 > 0, y1, 0.2 * y1)                       # (H*W, C)

    # --- conv2: reuse the same scratch (border is still zero) ---------------
    pad_ref[1:H + 1, 1:W + 1, :] = y1.reshape(H, W, C)
    y1p = pad_ref[...]
    y2 = jnp.dot(im2col(y1p), w2_ref[...], preferred_element_type=jnp.float32)
    y2 = y2 + b2_ref[...]                                      # (H*W, C)

    # --- LightweightGate: global avg pool -> fc1 -> ReLU -> fc2 -> sigmoid --
    pooled = jnp.mean(y2, axis=0, keepdims=True)               # (1, C)
    hid = jnp.dot(pooled, wf1_ref[...], preferred_element_type=jnp.float32)
    hid = jnp.maximum(hid + bf1_ref[...], 0.0)                 # (1, C//r)
    gate = jax.nn.sigmoid(
        jnp.dot(hid, wf2_ref[...], preferred_element_type=jnp.float32)
        + bf2_ref[...])                                        # (1, C)

    # --- residual add with channel gating ------------------------------------
    out = x_in.reshape(H * W, C) + y2 * gate
    out_ref[0] = out.reshape(H, W, C).astype(out_ref.dtype)


@jax.jit
def light_residual_block(x, w1, b1, w2, b2, wf1, bf1, wf2, bf2):
    """LightResidualBlock forward.  x: (B, H, W, C) NHWC float32.

    w1, w2 : (3, 3, C, C) HWIO conv weights;  b1, b2 : (C,)
    wf1    : (C, C//r)  gate fc1 weight (pre-transposed);  bf1 : (C//r,)
    wf2    : (C//r, C)  gate fc2 weight (pre-transposed);  bf2 : (C,)
    """
    B, H, W, C = x.shape
    Cr = wf1.shape[1]

    # Pre-reshape conv weights to im2col form once, outside the kernel.
    w1r = w1.reshape(9 * C, C)
    w2r = w2.reshape(9 * C, C)
    b1r = b1.reshape(1, C)
    b2r = b2.reshape(1, C)
    bf1r = bf1.reshape(1, Cr)
    bf2r = bf2.reshape(1, C)

    grid_spec = pltpu.PrefetchScalarGridSpec(
        num_scalar_prefetch=0,
        grid=(B,),
        in_specs=[
            pl.BlockSpec((1, H, W, C), lambda b: (b, 0, 0, 0)),   # x (unpadded)
            pl.BlockSpec((9 * C, C), lambda b: (0, 0)),           # conv1 W
            pl.BlockSpec((1, C), lambda b: (0, 0)),               # conv1 b
            pl.BlockSpec((9 * C, C), lambda b: (0, 0)),           # conv2 W
            pl.BlockSpec((1, C), lambda b: (0, 0)),               # conv2 b
            pl.BlockSpec((C, Cr), lambda b: (0, 0)),              # gate fc1 W
            pl.BlockSpec((1, Cr), lambda b: (0, 0)),              # gate fc1 b
            pl.BlockSpec((Cr, C), lambda b: (0, 0)),              # gate fc2 W
            pl.BlockSpec((1, C), lambda b: (0, 0)),               # gate fc2 b
        ],
        out_specs=pl.BlockSpec((1, H, W, C), lambda b: (b, 0, 0, 0)),
        scratch_shapes=[pltpu.VMEM((H + 2, W + 2, C), jnp.float32)],
    )

    return pl.pallas_call(
        _block_kernel,
        out_shape=jax.ShapeDtypeStruct((B, H, W, C), x.dtype),
        grid_spec=grid_spec,
        compiler_params=pltpu.CompilerParams(
            dimension_semantics=("parallel",)),
    )(x, w1r, b1r, w2r, b2r, wf1, bf1r, wf2, bf2r)


def reference_forward(x, w1, b1, w2, b2, wf1, bf1, wf2, bf2):
    """Pure-JAX reference (same math as the PyTorch module, NHWC layout)."""
    dn = ("NHWC", "HWIO", "NHWC")

    def conv(inp, w, b):
        y = jax.lax.conv_general_dilated(inp, w, (1, 1), "SAME",
                                         dimension_numbers=dn)
        return y + b.reshape(1, 1, 1, -1)

    y1 = conv(x, w1, b1)
    y1 = jnp.where(y1 > 0, y1, 0.2 * y1)          # LeakyReLU(0.2)
    y2 = conv(y1, w2, b2)
    pooled = jnp.mean(y2, axis=(1, 2))            # (B, C) global avg pool
    hid = jnp.maximum(pooled @ wf1 + bf1, 0.0)    # fc1 + ReLU
    g = jax.nn.sigmoid(hid @ wf2 + bf2)           # fc2 + sigmoid
    return x + y2 * g[:, None, None, :]


if __name__ == "__main__":
    # channels must be >= reduction (8) for the gate's bottleneck FC.
    B, C, H, W = 2, 32, 16, 16
    R = 8

    key = jax.random.PRNGKey(0)
    ks = jax.random.split(key, 9)

    x = jax.random.normal(ks[0], (B, H, W, C), jnp.float32)
    w1 = 0.1 * jax.random.normal(ks[1], (3, 3, C, C), jnp.float32)
    b1 = 0.1 * jax.random.normal(ks[2], (C,), jnp.float32)
    w2 = 0.1 * jax.random.normal(ks[3], (3, 3, C, C), jnp.float32)
    b2 = 0.1 * jax.random.normal(ks[4], (C,), jnp.float32)
    wf1 = 0.1 * jax.random.normal(ks[5], (C, C // R), jnp.float32)
    bf1 = 0.1 * jax.random.normal(ks[6], (C // R,), jnp.float32)
    wf2 = 0.1 * jax.random.normal(ks[7], (C // R, C), jnp.float32)
    bf2 = 0.1 * jax.random.normal(ks[8], (C,), jnp.float32)

    out = light_residual_block(x, w1, b1, w2, b2, wf1, bf1, wf2, bf2)
    out = jax.block_until_ready(out)

    ref = reference_forward(x, w1, b1, w2, b2, wf1, bf1, wf2, bf2)
    max_err = float(jnp.max(jnp.abs(out - ref)))
    if max_err > 1e-4:
        raise AssertionError(f"Pallas kernel mismatch, max abs err = {max_err}")

    print("KERNEL_OK")
</pallas_src>

<mosaic_0001>
module attributes {stable_mosaic.version = 11 : i64} {
  func.func @_block_kernel(%arg0: i32, %arg1: memref<1x16x16x32xf32, #tpu.memory_space<vmem>>, %arg2: memref<288x32xf32, #tpu.memory_space<vmem>>, %arg3: memref<1x32xf32, #tpu.memory_space<vmem>>, %arg4: memref<288x32xf32, #tpu.memory_space<vmem>>, %arg5: memref<1x32xf32, #tpu.memory_space<vmem>>, %arg6: memref<32x4xf32, #tpu.memory_space<vmem>>, %arg7: memref<1x4xf32, #tpu.memory_space<vmem>>, %arg8: memref<4x32xf32, #tpu.memory_space<vmem>>, %arg9: memref<1x32xf32, #tpu.memory_space<vmem>>, %arg10: memref<1x16x16x32xf32, #tpu.memory_space<vmem>>, %arg11: memref<18x18x32xf32, #tpu.memory_space<vmem>>) attributes {dimension_semantics = [#tpu.dimension_semantics<parallel>], iteration_bounds = array<i64: 2>, scalar_prefetch = 0 : i64, scratch_operands = 1 : i64, tpu.core_type = #tpu.core_type<tc>, window_params = [{transform_indices = @transform_0, window_bounds = array<i64: 1, 16, 16, 32>}, {pipeline_mode = #tpu.pipeline_mode<synchronous>, transform_indices = @transform_1, window_bounds = array<i64: 288, 32>}, {pipeline_mode = #tpu.pipeline_mode<synchronous>, transform_indices = @transform_2, window_bounds = array<i64: 1, 32>}, {pipeline_mode = #tpu.pipeline_mode<synchronous>, transform_indices = @transform_3, window_bounds = array<i64: 288, 32>}, {pipeline_mode = #tpu.pipeline_mode<synchronous>, transform_indices = @transform_4, window_bounds = array<i64: 1, 32>}, {pipeline_mode = #tpu.pipeline_mode<synchronous>, transform_indices = @transform_5, window_bounds = array<i64: 32, 4>}, {pipeline_mode = #tpu.pipeline_mode<synchronous>, transform_indices = @transform_6, window_bounds = array<i64: 1, 4>}, {pipeline_mode = #tpu.pipeline_mode<synchronous>, transform_indices = @transform_7, window_bounds = array<i64: 4, 32>}, {pipeline_mode = #tpu.pipeline_mode<synchronous>, transform_indices = @transform_8, window_bounds = array<i64: 1, 32>}, {transform_indices = @transform_9, window_bounds = array<i64: 1, 16, 16, 32>}]} {
    %c0 = arith.constant 0 : index
    %c0_0 = arith.constant 0 : index
    %c0_1 = arith.constant 0 : index
    %c0_2 = arith.constant 0 : index
    %0 = vector.load %arg1[%c0, %c0_0, %c0_1, %c0_2] : memref<1x16x16x32xf32, #tpu.memory_space<vmem>>, vector<1x16x16x32xf32>
    %1 = vector.shape_cast %0 : vector<1x16x16x32xf32> to vector<16x16x32xf32>
    %cst = arith.constant 0.000000e+00 : f32
    %2 = vector.broadcast %cst : f32 to vector<18x18x32xf32>
    %c0_3 = arith.constant 0 : index
    %c0_4 = arith.constant 0 : index
    %c0_5 = arith.constant 0 : index
    %3 = vector.load %arg11[%c0_3, %c0_4, %c0_5] : memref<18x18x32xf32, #tpu.memory_space<vmem>>, vector<18x18x32xf32>
    tpu.vector_store %arg11[%c0_3, %c0_4, %c0_5], %2 {strides = array<i32>} : memref<18x18x32xf32, #tpu.memory_space<vmem>>, vector<18x18x32xf32>,
    %c1 = arith.constant 1 : index
    %c1_6 = arith.constant 1 : index
    %c0_7 = arith.constant 0 : index
    %4 = vector.load %arg11[%c1, %c1_6, %c0_7] : memref<18x18x32xf32, #tpu.memory_space<vmem>>, vector<16x16x32xf32>
    tpu.vector_store %arg11[%c1, %c1_6, %c0_7], %1 {strides = array<i32>} : memref<18x18x32xf32, #tpu.memory_space<vmem>>, vector<16x16x32xf32>,
    %c0_8 = arith.constant 0 : index
    %c0_9 = arith.constant 0 : index
    %c0_10 = arith.constant 0 : index
    %5 = vector.load %arg11[%c0_8, %c0_9, %c0_10] : memref<18x18x32xf32, #tpu.memory_space<vmem>>, vector<18x18x32xf32>
    %6 = vector.extract_strided_slice %5 {offsets = [0, 0, 0], sizes = [16, 16, 32], strides = [1, 1, 1]} : vector<18x18x32xf32> to vector<16x16x32xf32>
    %7 = vector.shape_cast %6 : vector<16x16x32xf32> to vector<256x32xf32>
    %8 = vector.extract_strided_slice %5 {offsets = [0, 1, 0], sizes = [16, 16, 32], strides = [1, 1, 1]} : vector<18x18x32xf32> to vector<16x16x32xf32>
    %9 = vector.shape_cast %8 : vector<16x16x32xf32> to vector<256x32xf32>
    %10 = vector.extract_strided_slice %5 {offsets = [0, 2, 0], sizes = [16, 16, 32], strides = [1, 1, 1]} : vector<18x18x32xf32> to vector<16x16x32xf32>
    %11 = vector.shape_cast %10 : vector<16x16x32xf32> to vector<256x32xf32>
    %12 = vector.extract_strided_slice %5 {offsets = [1, 0, 0], sizes = [16, 16, 32], strides = [1, 1, 1]} : vector<18x18x32xf32> to vector<16x16x32xf32>
    %13 = vector.shape_cast %12 : vector<16x16x32xf32> to vector<256x32xf32>
    %14 = vector.extract_strided_slice %5 {offsets = [1, 1, 0], sizes = [16, 16, 32], strides = [1, 1, 1]} : vector<18x18x32xf32> to vector<16x16x32xf32>
    %15 = vector.shape_cast %14 : vector<16x16x32xf32> to vector<256x32xf32>
    %16 = vector.extract_strided_slice %5 {offsets = [1, 2, 0], sizes = [16, 16, 32], strides = [1, 1, 1]} : vector<18x18x32xf32> to vector<16x16x32xf32>
    %17 = vector.shape_cast %16 : vector<16x16x32xf32> to vector<256x32xf32>
    %18 = vector.extract_strided_slice %5 {offsets = [2, 0, 0], sizes = [16, 16, 32], strides = [1, 1, 1]} : vector<18x18x32xf32> to vector<16x16x32xf32>
    %19 = vector.shape_cast %18 : vector<16x16x32xf32> to vector<256x32xf32>
    %20 = vector.extract_strided_slice %5 {offsets = [2, 1, 0], sizes = [16, 16, 32], strides = [1, 1, 1]} : vector<18x18x32xf32> to vector<16x16x32xf32>
    %21 = vector.shape_cast %20 : vector<16x16x32xf32> to vector<256x32xf32>
    %22 = vector.extract_strided_slice %5 {offsets = [2, 2, 0], sizes = [16, 16, 32], strides = [1, 1, 1]} : vector<18x18x32xf32> to vector<16x16x32xf32>
    %23 = vector.shape_cast %22 : vector<16x16x32xf32> to vector<256x32xf32>
    %24 = tpu.concatenate %7, %9, %11, %13, %15, %17, %19, %21, %23 in 1 : vector<256x32xf32>, vector<256x32xf32>, vector<256x32xf32>, vector<256x32xf32>, vector<256x32xf32>, vector<256x32xf32>, vector<256x32xf32>, vector<256x32xf32>, vector<256x32xf32> -> vector<256x288xf32>
    %c0_11 = arith.constant 0 : index
    %c0_12 = arith.constant 0 : index
    %25 = vector.load %arg2[%c0_11, %c0_12] : memref<288x32xf32, #tpu.memory_space<vmem>>, vector<288x32xf32>
    %cst_13 = arith.constant dense<0.000000e+00> : vector<256x32xf32>
    %26 = tpu.matmul %24, %25, %cst_13 {dimension_numbers = #tpu.dot_dimension_numbers<[1], [0], [0], [1], [0, 0, 1, 1], [], []>} : vector<256x288xf32>, vector<288x32xf32>, vector<256x32xf32> -> vector<256x32xf32>
    %c0_14 = arith.constant 0 : index
    %c0_15 = arith.constant 0 : index
    %27 = vector.load %arg3[%c0_14, %c0_15] : memref<1x32xf32, #tpu.memory_space<vmem>>, vector<1x32xf32>
    %28 = vector.broadcast %27 : vector<1x32xf32> to vector<256x32xf32>
    %29 = arith.addf %26, %28 : vector<256x32xf32>
    %cst_16 = arith.constant 0.000000e+00 : f32
    %30 = vector.broadcast %cst_16 : f32 to vector<256x32xf32>
    %31 = arith.cmpf ogt, %29, %30 : vector<256x32xf32>
    %cst_17 = arith.constant 2.000000e-01 : f32
    %32 = vector.broadcast %cst_17 : f32 to vector<256x32xf32>
    %33 = arith.mulf %32, %29 : vector<256x32xf32>
    %34 = arith.select %31, %29, %33 : vector<256x32xi1>, vector<256x32xf32>
    %35 = vector.shape_cast %34 : vector<256x32xf32> to vector<16x16x32xf32>
    %c1_18 = arith.constant 1 : index
    %c1_19 = arith.constant 1 : index
    %c0_20 = arith.constant 0 : index
    %36 = vector.load %arg11[%c1_18, %c1_19, %c0_20] : memref<18x18x32xf32, #tpu.memory_space<vmem>>, vector<16x16x32xf32>
    tpu.vector_store %arg11[%c1_18, %c1_19, %c0_20], %35 {strides = array<i32>} : memref<18x18x32xf32, #tpu.memory_space<vmem>>, vector<16x16x32xf32>,
    %c0_21 = arith.constant 0 : index
    %c0_22 = arith.constant 0 : index
    %c0_23 = arith.constant 0 : index
    %37 = vector.load %arg11[%c0_21, %c0_22, %c0_23] : memref<18x18x32xf32, #tpu.memory_space<vmem>>, vector<18x18x32xf32>
    %38 = vector.extract_strided_slice %37 {offsets = [0, 0, 0], sizes = [16, 16, 32], strides = [1, 1, 1]} : vector<18x18x32xf32> to vector<16x16x32xf32>
    %39 = vector.shape_cast %38 : vector<16x16x32xf32> to vector<256x32xf32>
    %40 = vector.extract_strided_slice %37 {offsets = [0, 1, 0], sizes = [16, 16, 32], strides = [1, 1, 1]} : vector<18x18x32xf32> to vector<16x16x32xf32>
    %41 = vector.shape_cast %40 : vector<16x16x32xf32> to vector<256x32xf32>
    %42 = vector.extract_strided_slice %37 {offsets = [0, 2, 0], sizes = [16, 16, 32], strides = [1, 1, 1]} : vector<18x18x32xf32> to vector<16x16x32xf32>
    %43 = vector.shape_cast %42 : vector<16x16x32xf32> to vector<256x32xf32>
    %44 = vector.extract_strided_slice %37 {offsets = [1, 0, 0], sizes = [16, 16, 32], strides = [1, 1, 1]} : vector<18x18x32xf32> to vector<16x16x32xf32>
    %45 = vector.shape_cast %44 : vector<16x16x32xf32> to vector<256x32xf32>
    %46 = vector.extract_strided_slice %37 {offsets = [1, 1, 0], sizes = [16, 16, 32], strides = [1, 1, 1]} : vector<18x18x32xf32> to vector<16x16x32xf32>
    %47 = vector.shape_cast %46 : vector<16x16x32xf32> to vector<256x32xf32>
    %48 = vector.extract_strided_slice %37 {offsets = [1, 2, 0], sizes = [16, 16, 32], strides = [1, 1, 1]} : vector<18x18x32xf32> to vector<16x16x32xf32>
    %49 = vector.shape_cast %48 : vector<16x16x32xf32> to vector<256x32xf32>
    %50 = vector.extract_strided_slice %37 {offsets = [2, 0, 0], sizes = [16, 16, 32], strides = [1, 1, 1]} : vector<18x18x32xf32> to vector<16x16x32xf32>
    %51 = vector.shape_cast %50 : vector<16x16x32xf32> to vector<256x32xf32>
    %52 = vector.extract_strided_slice %37 {offsets = [2, 1, 0], sizes = [16, 16, 32], strides = [1, 1, 1]} : vector<18x18x32xf32> to vector<16x16x32xf32>
    %53 = vector.shape_cast %52 : vector<16x16x32xf32> to vector<256x32xf32>
    %54 = vector.extract_strided_slice %37 {offsets = [2, 2, 0], sizes = [16, 16, 32], strides = [1, 1, 1]} : vector<18x18x32xf32> to vector<16x16x32xf32>
    %55 = vector.shape_cast %54 : vector<16x16x32xf32> to vector<256x32xf32>
    %56 = tpu.concatenate %39, %41, %43, %45, %47, %49, %51, %53, %55 in 1 : vector<256x32xf32>, vector<256x32xf32>, vector<256x32xf32>, vector<256x32xf32>, vector<256x32xf32>, vector<256x32xf32>, vector<256x32xf32>, vector<256x32xf32>, vector<256x32xf32> -> vector<256x288xf32>
    %c0_24 = arith.constant 0 : index
    %c0_25 = arith.constant 0 : index
    %57 = vector.load %arg4[%c0_24, %c0_25] : memref<288x32xf32, #tpu.memory_space<vmem>>, vector<288x32xf32>
    %cst_26 = arith.constant dense<0.000000e+00> : vector<256x32xf32>
    %58 = tpu.matmul %56, %57, %cst_26 {dimension_numbers = #tpu.dot_dimension_numbers<[1], [0], [0], [1], [0, 0, 1, 1], [], []>} : vector<256x288xf32>, vector<288x32xf32>, vector<256x32xf32> -> vector<256x32xf32>
    %c0_27 = arith.constant 0 : index
    %c0_28 = arith.constant 0 : index
    %59 = vector.load %arg5[%c0_27, %c0_28] : memref<1x32xf32, #tpu.memory_space<vmem>>, vector<1x32xf32>
    %60 = vector.broadcast %59 : vector<1x32xf32> to vector<256x32xf32>
    %61 = arith.addf %58, %60 : vector<256x32xf32>
    %cst_29 = arith.constant dense<0.000000e+00> : vector<32xf32>
    %62 = vector.multi_reduction <add>, %61, %cst_29 [0] : vector<256x32xf32> to vector<32xf32>
    %63 = vector.shape_cast %62 : vector<32xf32> to vector<1x32xf32>
    %cst_30 = arith.constant 2.560000e+02 : f32
    %64 = vector.broadcast %cst_30 : f32 to vector<1x32xf32>
    %65 = arith.divf %63, %64 : vector<1x32xf32>
    %c0_31 = arith.constant 0 : index
    %c0_32 = arith.constant 0 : index
    %66 = vector.load %arg6[%c0_31, %c0_32] : memref<32x4xf32, #tpu.memory_space<vmem>>, vector<32x4xf32>
    %cst_33 = arith.constant dense<0.000000e+00> : vector<1x4xf32>
    %67 = tpu.matmul %65, %66, %cst_33 {dimension_numbers = #tpu.dot_dimension_numbers<[1], [0], [0], [1], [0, 0, 1, 1], [], []>} : vector<1x32xf32>, vector<32x4xf32>, vector<1x4xf32> -> vector<1x4xf32>
    %c0_34 = arith.constant 0 : index
    %c0_35 = arith.constant 0 : index
    %68 = vector.load %arg7[%c0_34, %c0_35] : memref<1x4xf32, #tpu.memory_space<vmem>>, vector<1x4xf32>
    %69 = arith.addf %67, %68 : vector<1x4xf32>
    %cst_36 = arith.constant 0.000000e+00 : f32
    %70 = vector.broadcast %cst_36 : f32 to vector<1x4xf32>
    %71 = arith.maximumf %69, %70 : vector<1x4xf32>
    %c0_37 = arith.constant 0 : index
    %c0_38 = arith.constant 0 : index
    %72 = vector.load %arg8[%c0_37, %c0_38] : memref<4x32xf32, #tpu.memory_space<vmem>>, vector<4x32xf32>
    %cst_39 = arith.constant dense<0.000000e+00> : vector<1x32xf32>
    %73 = tpu.matmul %71, %72, %cst_39 {dimension_numbers = #tpu.dot_dimension_numbers<[1], [0], [0], [1], [0, 0, 1, 1], [], []>} : vector<1x4xf32>, vector<4x32xf32>, vector<1x32xf32> -> vector<1x32xf32>
    %c0_40 = arith.constant 0 : index
    %c0_41 = arith.constant 0 : index
    %74 = vector.load %arg9[%c0_40, %c0_41] : memref<1x32xf32, #tpu.memory_space<vmem>>, vector<1x32xf32>
    %75 = arith.addf %73, %74 : vector<1x32xf32>
    %76 = arith.negf %75 : vector<1x32xf32>
    %77 = math.exp %76 : vector<1x32xf32>
    %cst_42 = arith.constant 1.000000e+00 : f32
    %78 = vector.broadcast %cst_42 : f32 to vector<1x32xf32>
    %79 = arith.addf %78, %77 : vector<1x32xf32>
    %80 = arith.divf %78, %79 : vector<1x32xf32>
    %81 = vector.shape_cast %1 : vector<16x16x32xf32> to vector<256x32xf32>
    %82 = vector.broadcast %80 : vector<1x32xf32> to vector<256x32xf32>
    %83 = arith.mulf %61, %82 : vector<256x32xf32>
    %84 = arith.addf %81, %83 : vector<256x32xf32>
    %85 = vector.shape_cast %84 : vector<256x32xf32> to vector<16x16x32xf32>
    %c0_43 = arith.constant 0 : index
    %c0_44 = arith.constant 0 : index
    %c0_45 = arith.constant 0 : index
    %c0_46 = arith.constant 0 : index
    %86 = vector.load %arg10[%c0_43, %c0_44, %c0_45, %c0_46] : memref<1x16x16x32xf32, #tpu.memory_space<vmem>>, vector<1x16x16x32xf32>
    %87 = vector.shape_cast %86 : vector<1x16x16x32xf32> to vector<16x16x32xf32>
    %88 = vector.shape_cast %85 : vector<16x16x32xf32> to vector<1x16x16x32xf32>
    tpu.vector_store %arg10[%c0_43, %c0_44, %c0_45, %c0_46], %88 {strides = array<i32>} : memref<1x16x16x32xf32, #tpu.memory_space<vmem>>, vector<1x16x16x32xf32>,
    return
  }
  func.func @transform_0(%arg0: i32) -> (i32, i32, i32, i32) {
    %c0_i32 = arith.constant 0 : i32
    %c0_i32_0 = arith.constant 0 : i32
    %c0_i32_1 = arith.constant 0 : i32
    %c0_i32_2 = arith.constant 0 : i32
    return %arg0, %c0_i32, %c0_i32_0, %c0_i32_1 : i32, i32, i32, i32
  }
  func.func @transform_1(%arg0: i32) -> (i32, i32) {
    %c0_i32 = arith.constant 0 : i32
    %c0_i32_0 = arith.constant 0 : i32
    %c0_i32_1 = arith.constant 0 : i32
    return %c0_i32, %c0_i32_0 : i32, i32
  }
  func.func @transform_2(%arg0: i32) -> (i32, i32) {
    %c0_i32 = arith.constant 0 : i32
    %c0_i32_0 = arith.constant 0 : i32
    %c0_i32_1 = arith.constant 0 : i32
    return %c0_i32, %c0_i32_0 : i32, i32
  }
  func.func @transform_3(%arg0: i32) -> (i32, i32) {
    %c0_i32 = arith.constant 0 : i32
    %c0_i32_0 = arith.constant 0 : i32
    %c0_i32_1 = arith.constant 0 : i32
    return %c0_i32, %c0_i32_0 : i32, i32
  }
  func.func @transform_4(%arg0: i32) -> (i32, i32) {
    %c0_i32 = arith.constant 0 : i32
    %c0_i32_0 = arith.constant 0 : i32
    %c0_i32_1 = arith.constant 0 : i32
    return %c0_i32, %c0_i32_0 : i32, i32
  }
  func.func @transform_5(%arg0: i32) -> (i32, i32) {
    %c0_i32 = arith.constant 0 : i32
    %c0_i32_0 = arith.constant 0 : i32
    %c0_i32_1 = arith.constant 0 : i32
    return %c0_i32, %c0_i32_0 : i32, i32
  }
  func.func @transform_6(%arg0: i32) -> (i32, i32) {
    %c0_i32 = arith.constant 0 : i32
    %c0_i32_0 = arith.constant 0 : i32
    %c0_i32_1 = arith.constant 0 : i32
    return %c0_i32, %c0_i32_0 : i32, i32
  }
  func.func @transform_7(%arg0: i32) -> (i32, i32) {
    %c0_i32 = arith.constant 0 : i32
    %c0_i32_0 = arith.constant 0 : i32
    %c0_i32_1 = arith.constant 0 : i32
    return %c0_i32, %c0_i32_0 : i32, i32
  }
  func.func @transform_8(%arg0: i32) -> (i32, i32) {
    %c0_i32 = arith.constant 0 : i32
    %c0_i32_0 = arith.constant 0 : i32
    %c0_i32_1 = arith.constant 0 : i32
    return %c0_i32, %c0_i32_0 : i32, i32
  }
  func.func @transform_9(%arg0: i32) -> (i32, i32, i32, i32) {
    %c0_i32 = arith.constant 0 : i32
    %c0_i32_0 = arith.constant 0 : i32
    %c0_i32_1 = arith.constant 0 : i32
    %c0_i32_2 = arith.constant 0 : i32
    return %arg0, %c0_i32, %c0_i32_0, %c0_i32_1 : i32, i32, i32, i32
  }
}

</mosaic_0001>

<llo_original>
// kernel: light_residual_block.1
$region0: #{light_residual_block.1}
  #allocation0 [shape = 'u32[]', space=smem, size = 0x4, offset = 0x4, fixed_abs, tag = 'smem constant byte address 0x4 - core index']
  #allocation1 [shape = 'u32[144,128]{1,0:T(1,128)}', space=vmem, size = 0x12000, scoped, tag = 'internal scratch']
  #allocation2 [shape = 'f32[18,18,32]{2,1,0:T(8,128)}', space=vmem, size = 0x36000, scoped, tag = 'scratch operand']
  %s0 = inlined_call_operand.hbm [shape: f32[2,16,16,32], index: 0, kind: input, shape index: {}]
  %s1 = inlined_call_operand.hbm [shape: f32[288,32], index: 1, kind: input, shape index: {}]
  %s2 = inlined_call_operand.vmem [shape: f32[1,32], index: 2, kind: input, shape index: {}]
  %s3 = inlined_call_operand.hbm [shape: f32[288,32], index: 3, kind: input, shape index: {}]
  %s4 = inlined_call_operand.vmem [shape: f32[1,32], index: 4, kind: input, shape index: {}]
  %s5 = inlined_call_operand.vmem [shape: f32[32,4], index: 5, kind: input, shape index: {}]
  %s6 = inlined_call_operand.vmem [shape: f32[1,4], index: 6, kind: input, shape index: {}]
  %s7 = inlined_call_operand.vmem [shape: f32[4,32], index: 7, kind: input, shape index: {}]
  %s8 = inlined_call_operand.vmem [shape: f32[1,32], index: 8, kind: input, shape index: {}]
  %s9 = inlined_call_operand.hbm [shape: f32[2,16,16,32], index: 9, kind: output, shape index: {}]
  %s10 = sld [smem:[#allocation0]]
  $region81: #{light_residual_block.1} parent=0
    _
  %s12 = ssub.s32 1, %s10
  %s13 = scalar_select 0, %s12, %s10
  $region1: #{light_residual_block.1} parent=0
    #allocation3 [shape = 'u8[262144]{0}', space=vmem, size = 0x40000, scoped, tag = 'input window, operand 0']
    #allocation4 [shape = 's32[2]{0}', space=sflag, size = 0x8, scoped, tag = 'scoped memory for light_residual_block.1']
    #allocation5 [shape = 's32[2]{0}', space=sflag, size = 0x8, scoped, tag = 'scoped memory for light_residual_block.1']
    #allocation6 [shape = 'u8[147456]{0}', space=vmem, size = 0x24000, scoped, tag = 'input window, operand 1, single buffered']
    #allocation7 [shape = 's32[1]{0}', space=sflag, size = 0x4, scoped, tag = 'scoped memory for light_residual_block.1']
    #allocation8 [shape = 'u8[147456]{0}', space=vmem, size = 0x24000, scoped, tag = 'input window, operand 3, single buffered']
    #allocation9 [shape = 'u8[262144]{0}', space=vmem, size = 0x40000, scoped, tag = 'output window, operand 0']
    %14 = vsyncpa [#allocation4], 0
    %s15 = scalar_lea.sflag [#allocation4], 1
    %16 = vsyncpa %s15, 0
    %17 = vsyncpa [#allocation7], 0
    %18 = vsyncpa [#allocation5], 0
    %s19 = scalar_lea.sflag [#allocation5], 1
    %20 = vsyncpa %s19, 0
    loop: start=0, step=1, limit=4
    $region2: #{light_residual_block.1} parent=1 // loop_pre_header
      _
    $region3: #{light_residual_block.1} parent=1 // loop_header
      %s22 = sphi 0, %s26
      %p23 = scmp.ge.s32.totalorder %s22, 4
      %s32 = sphi 0, %s34
      %s35 = sphi 0, %s32
      %s36 = sphi 0, %s35
      %s52 = sphi 0, %s36
      %s56 = sphi 0, %s56
      %s58 = sphi 0, %s56
      %s59 = sphi 0, %s58
      %s73 = sphi 0, %s59
      %s77 = sphi 0, %s77
      %s79 = sphi 0, %s77
      %s80 = sphi 0, %s79
      %s94 = sphi 0, %s80
      %s98 = sphi 0, %s98
      %s100 = sphi 0, %s98
      %s101 = sphi 0, %s100
      %s115 = sphi 0, %s101
      %s119 = sphi 0, %s119
      %s121 = sphi 0, %s119
      %s122 = sphi 0, %s121
      %s136 = sphi 0, %s122
      %s140 = sphi 0, %s140
      %s142 = sphi 0, %s140
      %s143 = sphi 0, %s142
      %s157 = sphi 0, %s143
      %s161 = sphi 0, %s161
      %s163 = sphi 0, %s161
      %s164 = sphi 0, %s163
      %s178 = sphi 0, %s164
      %s182 = sphi 0, %s182
      %s184 = sphi 0, %s182
      %s185 = sphi 0, %s184
      %s199 = sphi 0, %s185
      %s203 = sphi 0, %s203
      %s205 = sphi 0, %s203
      %s206 = sphi 0, %s205
      %s220 = sphi 0, %s206
      %s226 = sphi 0, %s228
      %s229 = sphi 0, %s226
      %s230 = sphi 0, %s229
      %s246 = sphi 0, %s230
    $region4: #{light_residual_block.1} parent=1 // loop_header_branch
      %25 = sbr.rel (%p23) target = $region8
    $region5: #{light_residual_block.1} parent=1 // loop_body
      %s27 = ssub.s32 %s22, 1
      %s28 = ssub.s32 %s22, 2
      %s29 = sadd.s32 %s22, 1
      %s30 = ssub.s32 %s22, %s29
      %p31 = scmp.eq.s32.totalorder %s30, 0
      %s33 = sadd.s32 %s32, 1
      %s34 = scalar_select %p31, %s32, %s33
      %p37 = pneg %p31
      %p38 = scmp.eq.s32.totalorder %s22, 1
      %p39 = por %p37, %p38
      %p40 = scmp.ne.s32.totalorder %s32, %s35
      %p41 = scmp.eq.s32.totalorder %s22, 0
      %p42 = por %p40, %p41
      %p43 = scmp.ne.s32.totalorder %s32, %s35
      %p44 = scmp.eq.s32.totalorder %s27, 1
      %p45 = por %p43, %p44
      %p46 = scmp.ne.s32.totalorder %s35, %s36
      %p47 = scmp.eq.s32.totalorder %s27, 0
      %p48 = por %p46, %p47
      %p49 = scmp.ne.s32.totalorder %s35, %s36
      %p50 = scmp.eq.s32.totalorder %s28, 1
      %p51 = por %p49, %p50
      %p53 = scmp.ne.s32.totalorder %s36, %s52
      %p54 = scmp.eq.s32.totalorder %s28, 0
      %p55 = por %p53, %p54
      %s57 = sadd.s32 %s56, 1
      %p60 = scmp.eq.s32.totalorder %s22, 1
      %p61 = scmp.ne.s32.totalorder %s56, %s58
      %p62 = scmp.eq.s32.totalorder %s22, 0
      %p63 = por %p61, %p62
      %p64 = scmp.ne.s32.totalorder %s56, %s58
      %p65 = scmp.eq.s32.totalorder %s27, 1
      %p66 = por %p64, %p65
      %p67 = scmp.ne.s32.totalorder %s58, %s59
      %p68 = scmp.eq.s32.totalorder %s27, 0
      %p69 = por %p67, %p68
      %p70 = scmp.ne.s32.totalorder %s58, %s59
      %p71 = scmp.eq.s32.totalorder %s28, 1
      %p72 = por %p70, %p71
      %p74 = scmp.ne.s32.totalorder %s59, %s73
      %p75 = scmp.eq.s32.totalorder %s28, 0
      %p76 = por %p74, %p75
      %s78 = sadd.s32 %s77, 1
      %p81 = scmp.eq.s32.totalorder %s22, 1
      %p82 = scmp.ne.s32.totalorder %s77, %s79
      %p83 = scmp.eq.s32.totalorder %s22, 0
      %p84 = por %p82, %p83
      %p85 = scmp.ne.s32.totalorder %s77, %s79
      %p86 = scmp.eq.s32.totalorder %s27, 1
      %p87 = por %p85, %p86
      %p88 = scmp.ne.s32.totalorder %s79, %s80
      %p89 = scmp.eq.s32.totalorder %s27, 0
      %p90 = por %p88, %p89
      %p91 = scmp.ne.s32.totalorder %s79, %s80
      %p92 = scmp.eq.s32.totalorder %s28, 1
      %p93 = por %p91, %p92
      %p95 = scmp.ne.s32.totalorder %s80, %s94
      %p96 = scmp.eq.s32.totalorder %s28, 0
      %p97 = por %p95, %p96
      %s99 = sadd.s32 %s98, 1
      %p102 = scmp.eq.s32.totalorder %s22, 1
      %p103 = scmp.ne.s32.totalorder %s98, %s100
      %p104 = scmp.eq.s32.totalorder %s22, 0
      %p105 = por %p103, %p104
      %p106 = scmp.ne.s32.totalorder %s98, %s100
      %p107 = scmp.eq.s32.totalorder %s27, 1
      %p108 = por %p106, %p107
      %p109 = scmp.ne.s32.totalorder %s100, %s101
      %p110 = scmp.eq.s32.totalorder %s27, 0
      %p111 = por %p109, %p110
      %p112 = scmp.ne.s32.totalorder %s100, %s101
      %p113 = scmp.eq.s32.totalorder %s28, 1
      %p114 = por %p112, %p113
      %p116 = scmp.ne.s32.totalorder %s101, %s115
      %p117 = scmp.eq.s32.totalorder %s28, 0
      %p118 = por %p116, %p117
      %s120 = sadd.s32 %s119, 1
      %p123 = scmp.eq.s32.totalorder %s22, 1
      %p124 = scmp.ne.s32.totalorder %s119, %s121
      %p125 = scmp.eq.s32.totalorder %s22, 0
      %p126 = por %p124, %p125
      %p127 = scmp.ne.s32.totalorder %s119, %s121
      %p128 = scmp.eq.s32.totalorder %s27, 1
      %p129 = por %p127, %p128
      %p130 = scmp.ne.s32.totalorder %s121, %s122
      %p131 = scmp.eq.s32.totalorder %s27, 0
      %p132 = por %p130, %p131
      %p133 = scmp.ne.s32.totalorder %s121, %s122
      %p134 = scmp.eq.s32.totalorder %s28, 1
      %p135 = por %p133, %p134
      %p137 = scmp.ne.s32.totalorder %s122, %s136
      %p138 = scmp.eq.s32.totalorder %s28, 0
      %p139 = por %p137, %p138
      %s141 = sadd.s32 %s140, 1
      %p144 = scmp.eq.s32.totalorder %s22, 1
      %p145 = scmp.ne.s32.totalorder %s140, %s142
      %p146 = scmp.eq.s32.totalorder %s22, 0
      %p147 = por %p145, %p146
      %p148 = scmp.ne.s32.totalorder %s140, %s142
      %p149 = scmp.eq.s32.totalorder %s27, 1
      %p150 = por %p148, %p149
      %p151 = scmp.ne.s32.totalorder %s142, %s143
      %p152 = scmp.eq.s32.totalorder %s27, 0
      %p153 = por %p151, %p152
      %p154 = scmp.ne.s32.totalorder %s142, %s143
      %p155 = scmp.eq.s32.totalorder %s28, 1
      %p156 = por %p154, %p155
      %p158 = scmp.ne.s32.totalorder %s143, %s157
      %p159 = scmp.eq.s32.totalorder %s28, 0
      %p160 = por %p158, %p159
      %s162 = sadd.s32 %s161, 1
      %p165 = scmp.eq.s32.totalorder %s22, 1
      %p166 = scmp.ne.s32.totalorder %s161, %s163
      %p167 = scmp.eq.s32.totalorder %s22, 0
      %p168 = por %p166, %p167
      %p169 = scmp.ne.s32.totalorder %s161, %s163
      %p170 = scmp.eq.s32.totalorder %s27, 1
      %p171 = por %p169, %p170
      %p172 = scmp.ne.s32.totalorder %s163, %s164
      %p173 = scmp.eq.s32.totalorder %s27, 0
      %p174 = por %p172, %p173
      %p175 = scmp.ne.s32.totalorder %s163, %s164
      %p176 = scmp.eq.s32.totalorder %s28, 1
      %p177 = por %p175, %p176
      %p179 = scmp.ne.s32.totalorder %s164, %s178
      %p180 = scmp.eq.s32.totalorder %s28, 0
      %p181 = por %p179, %p180
      %s183 = sadd.s32 %s182, 1
      %p186 = scmp.eq.s32.totalorder %s22, 1
      %p187 = scmp.ne.s32.totalorder %s182, %s184
      %p188 = scmp.eq.s32.totalorder %s22, 0
      %p189 = por %p187, %p188
      %p190 = scmp.ne.s32.totalorder %s182, %s184
      %p191 = scmp.eq.s32.totalorder %s27, 1
      %p192 = por %p190, %p191
      %p193 = scmp.ne.s32.totalorder %s184, %s185
      %p194 = scmp.eq.s32.totalorder %s27, 0
      %p195 = por %p193, %p194
      %p196 = scmp.ne.s32.totalorder %s184, %s185
      %p197 = scmp.eq.s32.totalorder %s28, 1
      %p198 = por %p196, %p197
      %p200 = scmp.ne.s32.totalorder %s185, %s199
      %p201 = scmp.eq.s32.totalorder %s28, 0
      %p202 = por %p200, %p201
      %s204 = sadd.s32 %s203, 1
      %p207 = scmp.eq.s32.totalorder %s22, 1
      %p208 = scmp.ne.s32.totalorder %s203, %s205
      %p209 = scmp.eq.s32.totalorder %s22, 0
      %p210 = por %p208, %p209
      %p211 = scmp.ne.s32.totalorder %s203, %s205
      %p212 = scmp.eq.s32.totalorder %s27, 1
      %p213 = por %p211, %p212
      %p214 = scmp.ne.s32.totalorder %s205, %s206
      %p215 = scmp.eq.s32.totalorder %s27, 0
      %p216 = por %p214, %p215
      %p217 = scmp.ne.s32.totalorder %s205, %s206
      %p218 = scmp.eq.s32.totalorder %s28, 1
      %p219 = por %p217, %p218
      %p221 = scmp.ne.s32.totalorder %s206, %s220
      %p222 = scmp.eq.s32.totalorder %s28, 0
      %p223 = por %p221, %p222
      %s224 = ssub.s32 %s22, %s29
      %p225 = scmp.eq.s32.totalorder %s224, 0
      %s227 = sadd.s32 %s226, 1
      %s228 = scalar_select %p225, %s226, %s227
      %p231 = pneg %p225
      %p232 = scmp.eq.s32.totalorder %s22, 1
      %p233 = por %p231, %p232
      %p234 = scmp.ne.s32.totalorder %s226, %s229
      %p235 = scmp.eq.s32.totalorder %s22, 0
      %p236 = por %p234, %p235
      %p237 = scmp.ne.s32.totalorder %s226, %s229
      %p238 = scmp.eq.s32.totalorder %s27, 1
      %p239 = por %p237, %p238
      %p240 = scmp.ne.s32.totalorder %s229, %s230
      %p241 = scmp.eq.s32.totalorder %s27, 0
      %p242 = por %p240, %p241
      %p243 = scmp.ne.s32.totalorder %s229, %s230
      %p244 = scmp.eq.s32.totalorder %s28, 1
      %p245 = por %p243, %p244
      %p247 = scmp.ne.s32.totalorder %s230, %s246
      %p248 = scmp.eq.s32.totalorder %s28, 0
      %p249 = por %p247, %p248
      %p250 = scmp.le.s32.totalorder 1, %s22
      %p251 = scmp.lt.s32.totalorder %s22, 3
      %p252 = pnand %p250, %p251
      %p253 = pneg %p252
      // Predicated region
      $region9: #{light_residual_block.1} parent=5 // pred_check
        _
      $region10: #{light_residual_block.1} parent=5 // pred_check_branch
        %255 = sbr.rel (%p252) target = $region12
      $region11: #{light_residual_block.1} parent=5 // pred_region
        %s256 = ssub.s32 %s22, 1
        // Predicated region
        $region13: #{light_residual_block.1} parent=11 // pred_check
          %p257 = pneg %p69
        $region14: #{light_residual_block.1} parent=11 // pred_check_branch
          %259 = sbr.rel (%p257) target = $region16
        $region15: #{light_residual_block.1} parent=11 // pred_region
          %s261 = ssub.s32 4608, 4608
          %262 = vsyncadd [#allocation7], %s261
          %s263 = sshll.u32 [#allocation6], 4
          %s264 = int_to_ptr.vmem [resolvable:$true] %s263
          %269 = dma.hbm_to_vmem [thread:$0]  %s1, 4608, %s264, [#allocation7], 128, 128, 8
        $region16: #{light_residual_block.1} parent=11 // pred_fallthru
          _
        // Predicated region
        $region17: #{light_residual_block.1} parent=11 // pred_check
          %p270 = pneg %p90
        $region18: #{light_residual_block.1} parent=11 // pred_check_branch
          %272 = sbr.rel (%p270) target = $region20
        $region19: #{light_residual_block.1} parent=11 // pred_region
          _
        $region20: #{light_residual_block.1} parent=11 // pred_fallthru
          _
        // Predicated region
        $region21: #{light_residual_block.1} parent=11 // pred_check
          %p273 = pneg %p111
        $region22: #{light_residual_block.1} parent=11 // pred_check_branch
          %275 = sbr.rel (%p273) target = $region24
        $region23: #{light_residual_block.1} parent=11 // pred_region
          %s277 = ssub.s32 4608, 4608
          %278 = vsyncadd [#allocation7], %s277
          %s279 = sshll.u32 [#allocation8], 4
          %s280 = int_to_ptr.vmem [resolvable:$true] %s279
          %285 = dma.hbm_to_vmem [thread:$0]  %s3, 4608, %s280, [#allocation7], 128, 128, 8
        $region24: #{light_residual_block.1} parent=11 // pred_fallthru
          _
        // Predicated region
        $region25: #{light_residual_block.1} parent=11 // pred_check
          %p286 = pneg %p132
        $region26: #{light_residual_block.1} parent=11 // pred_check_branch
          %288 = sbr.rel (%p286) target = $region28
        $region27: #{light_residual_block.1} parent=11 // pred_region
          _
        $region28: #{light_residual_block.1} parent=11 // pred_fallthru
          _
        // Predicated region
        $region29: #{light_residual_block.1} parent=11 // pred_check
          %p289 = pneg %p153
        $region30: #{light_residual_block.1} parent=11 // pred_check_branch
          %291 = sbr.rel (%p289) target = $region32
        $region31: #{light_residual_block.1} parent=11 // pred_region
          _
        $region32: #{light_residual_block.1} parent=11 // pred_fallthru
          _
        // Predicated region
        $region33: #{light_residual_block.1} parent=11 // pred_check
          %p292 = pneg %p174
        $region34: #{light_residual_block.1} parent=11 // pred_check_branch
          %294 = sbr.rel (%p292) target = $region36
        $region35: #{light_residual_block.1} parent=11 // pred_region
          _
        $region36: #{light_residual_block.1} parent=11 // pred_fallthru
          _
        // Predicated region
        $region37: #{light_residual_block.1} parent=11 // pred_check
          %p295 = pneg %p195
        $region38: #{light_residual_block.1} parent=11 // pred_check_branch
          %297 = sbr.rel (%p295) target = $region40
        $region39: #{light_residual_block.1} parent=11 // pred_region
          _
        $region40: #{light_residual_block.1} parent=11 // pred_fallthru
          _
        // Predicated region
        $region41: #{light_residual_block.1} parent=11 // pred_check
          %p298 = pneg %p216
        $region42: #{light_residual_block.1} parent=11 // pred_check_branch
          %300 = sbr.rel (%p298) target = $region44
        $region43: #{light_residual_block.1} parent=11 // pred_region
          _
        $region44: #{light_residual_block.1} parent=11 // pred_fallthru
          _
      $region12: #{light_residual_block.1} parent=5 // pred_fallthru
        _
      %p301 = scmp.lt.s32.totalorder %s22, 2
      // Predicated region
      $region45: #{light_residual_block.1} parent=5 // pred_check
        %p302 = pneg %p301
      $region46: #{light_residual_block.1} parent=5 // pred_check_branch
        %304 = sbr.rel (%p302) target = $region48
      $region47: #{light_residual_block.1} parent=5 // pred_region
        // Predicated region
        $region49: #{light_residual_block.1} parent=47 // pred_check
          %p305 = pneg %p42
        $region50: #{light_residual_block.1} parent=47 // pred_check_branch
          %307 = sbr.rel (%p305) target = $region52
        $region51: #{light_residual_block.1} parent=47 // pred_region
          %s308 = sand.u32 %s32, 1
          %s309 = scalar_lea.sflag [#allocation4], %s308
          %s310 = sand.u32 %s32, 1
          %s311 = smul.addr %s310, 256
          %s312 = scalar_lea.vmem [#allocation3], %s311
          %s314 = ssub.s32 4096, 4096
          %315 = vsyncadd %s309, %s314
          %s316 = smul.addr %s22, 32
          %s317 = smul.addr %s316, 128
          %s318 = scalar_lea.hbm %s0, %s317
          %s319 = sshll.u32 %s312, 4
          %s320 = int_to_ptr.vmem [resolvable:$true] %s319
          %325 = dma.hbm_to_vmem [thread:$0]  %s318, 4096, %s320, %s309, 128, 128, 8
        $region52: #{light_residual_block.1} parent=47 // pred_fallthru
          _
      $region48: #{light_residual_block.1} parent=5 // pred_fallthru
        _
      %p326 = scmp.le.s32.totalorder 1, %s22
      %p327 = scmp.lt.s32.totalorder %s22, 3
      %p328 = pnand %p326, %p327
      %p329 = pneg %p328
      // Predicated region
      $region53: #{light_residual_block.1} parent=5 // pred_check
        _
      $region54: #{light_residual_block.1} parent=5 // pred_check_branch
        %331 = sbr.rel (%p328) target = $region56
      $region55: #{light_residual_block.1} parent=5 // pred_region
        %s332 = ssub.s32 %s22, 1
        %s333 = sand.u32 %s35, 1
        %s334 = scalar_lea.sflag [#allocation4], %s333
        %s335 = sand.u32 %s35, 1
        %s336 = smul.addr %s335, 256
        %s337 = scalar_lea.vmem [#allocation3], %s336
        // Predicated region
        $region57: #{light_residual_block.1} parent=55 // pred_check
          %p338 = pneg %p48
        $region58: #{light_residual_block.1} parent=55 // pred_check_branch
          %340 = sbr.rel (%p338) target = $region60
        $region59: #{light_residual_block.1} parent=55 // pred_region
          %341 = dma.done %s334, 4096
        $region60: #{light_residual_block.1} parent=55 // pred_fallthru
          _
        // Predicated region
        $region61: #{light_residual_block.1} parent=55 // pred_check
          %p342 = pneg %p69
        $region62: #{light_residual_block.1} parent=55 // pred_check_branch
          %344 = sbr.rel (%p342) target = $region64
        $region63: #{light_residual_block.1} parent=55 // pred_region
          %345 = dma.done [#allocation7], 4608
        $region64: #{light_residual_block.1} parent=55 // pred_fallthru
          _
        // Predicated region
        $region65: #{light_residual_block.1} parent=55 // pred_check
          %p346 = pneg %p111
        $region66: #{light_residual_block.1} parent=55 // pred_check_branch
          %348 = sbr.rel (%p346) target = $region68
        $region67: #{light_residual_block.1} parent=55 // pred_region
          %349 = dma.done [#allocation7], 4608
        $region68: #{light_residual_block.1} parent=55 // pred_fallthru
          _
        %s350 = sand.u32 %s35, 1
        %s351 = scalar_lea.sflag [#allocation4], %s350
        %s352 = sand.u32 %s35, 1
        %s353 = smul.addr %s352, 256
        %s354 = scalar_lea.vmem [#allocation3], %s353
        %p355 = pneg %p48
        %p356 = pneg %p45
        %p357 = pneg %p69
        %p358 = pneg %p66
        %p359 = pneg %p90
        %p360 = pneg %p87
        %p361 = pneg %p111
        %p362 = pneg %p108
        %p363 = pneg %p132
        %p364 = pneg %p129
        %p365 = pneg %p153
        %p366 = pneg %p150
        %p367 = pneg %p174
        %p368 = pneg %p171
        %p369 = pneg %p195
        %p370 = pneg %p192
        %p371 = pneg %p216
        %p372 = pneg %p213
        %p373 = pneg %p242
        %p374 = pneg %p239
        %s375 = sand.u32 %s229, 1
        %s376 = scalar_lea.sflag [#allocation5], %s375
        %s377 = sand.u32 %s229, 1
        %s378 = smul.addr %s377, 256
        %s379 = scalar_lea.vmem [#allocation9], %s378
        %v380 = vld [vmem:[%s337] sm:$0xff]
        %v381 = vld [vmem:[%s337 + $0x8] sm:$0xff]
        %v382 = vld [vmem:[%s337 + $0x10] sm:$0xff]
        %v383 = vld [vmem:[%s337 + $0x18] sm:$0xff]
        %v384 = vld [vmem:[%s337 + $0x20] sm:$0xff]
        %v385 = vld [vmem:[%s337 + $0x28] sm:$0xff]
        %v386 = vld [vmem:[%s337 + $0x30] sm:$0xff]
        %v387 = vld [vmem:[%s337 + $0x38] sm:$0xff]
        %v388 = vld [vmem:[%s337 + $0x40] sm:$0xff]
        %v389 = vld [vmem:[%s337 + $0x48] sm:$0xff]
        %v390 = vld [vmem:[%s337 + $0x50] sm:$0xff]
        %v391 = vld [vmem:[%s337 + $0x58] sm:$0xff]
        %v392 = vld [vmem:[%s337 + $0x60] sm:$0xff]
        %v393 = vld [vmem:[%s337 + $0x68] sm:$0xff]
        %v394 = vld [vmem:[%s337 + $0x70] sm:$0xff]
        %v395 = vld [vmem:[%s337 + $0x78] sm:$0xff]
        %v396 = vld [vmem:[%s337 + $0x80] sm:$0xff]
        %v397 = vld [vmem:[%s337 + $0x88] sm:$0xff]
        %v398 = vld [vmem:[%s337 + $0x90] sm:$0xff]
        %v399 = vld [vmem:[%s337 + $0x98] sm:$0xff]
        %v400 = vld [vmem:[%s337 + $0xa0] sm:$0xff]
        %v401 = vld [vmem:[%s337 + $0xa8] sm:$0xff]
        %v402 = vld [vmem:[%s337 + $0xb0] sm:$0xff]
        %v403 = vld [vmem:[%s337 + $0xb8] sm:$0xff]
        %v404 = vld [vmem:[%s337 + $0xc0] sm:$0xff]
        %v405 = vld [vmem:[%s337 + $0xc8] sm:$0xff]
        %v406 = vld [vmem:[%s337 + $0xd0] sm:$0xff]
        %v407 = vld [vmem:[%s337 + $0xd8] sm:$0xff]
        %v408 = vld [vmem:[%s337 + $0xe0] sm:$0xff]
        %v409 = vld [vmem:[%s337 + $0xe8] sm:$0xff]
        %v410 = vld [vmem:[%s337 + $0xf0] sm:$0xff]
        %v411 = vld [vmem:[%s337 + $0xf8] sm:$0xff]
        %vm412 = vcmask 261120
        %413 = vst.msk [vmem:[#allocation2] sm:$0xff] %vm412, 0.0
        %414 = vst.msk [vmem:[#allocation2 + $0x8] sm:$0xff] %vm412, 0.0
        %vm415 = vcmask 254976
        %416 = vst.msk [vmem:[#allocation2 + $0x10] sm:$0x3] %vm415, 0.0
        %417 = vst.msk [vmem:[#allocation2 + $0x18] sm:$0xff] %vm412, 0.0
        %418 = vst.msk [vmem:[#allocation2 + $0x20] sm:$0xff] %vm412, 0.0
        %419 = vst.msk [vmem:[#allocation2 + $0x28] sm:$0x3] %vm415, 0.0
        %420 = vst.msk [vmem:[#allocation2 + $0x30] sm:$0xff] %vm412, 0.0
        %421 = vst.msk [vmem:[#allocation2 + $0x38] sm:$0xff] %vm412, 0.0
        %422 = vst.msk [vmem:[#allocation2 + $0x40] sm:$0x3] %vm415, 0.0
        %423 = vst.msk [vmem:[#allocation2 + $0x48] sm:$0xff] %vm412, 0.0
        %424 = vst.msk [vmem:[#allocation2 + $0x50] sm:$0xff] %vm412, 0.0
        %425 = vst.msk [vmem:[#allocation2 + $0x58] sm:$0x3] %vm415, 0.0
        %426 = vst.msk [vmem:[#allocation2 + $0x60] sm:$0xff] %vm412, 0.0
        %427 = vst.msk [vmem:[#allocation2 + $0x68] sm:$0xff] %vm412, 0.0
        %428 = vst.msk [vmem:[#allocation2 + $0x70] sm:$0x3] %vm415, 0.0
        %429 = vst.msk [vmem:[#allocation2 + $0x78] sm:$0xff] %vm412, 0.0
        %430 = vst.msk [vmem:[#allocation2 + $0x80] sm:$0xff] %vm412, 0.0
        %431 = vst.msk [vmem:[#allocation2 + $0x88] sm:$0x3] %vm415, 0.0
        %432 = vst.msk [vmem:[#allocation2 + $0x90] sm:$0xff] %vm412, 0.0
        %433 = vst.msk [vmem:[#allocation2 + $0x98] sm:$0xff] %vm412, 0.0
        %434 = vst.msk [vmem:[#allocation2 + $0xa0] sm:$0x3] %vm415, 0.0
        %435 = vst.msk [vmem:[#allocation2 + $0xa8] sm:$0xff] %vm412, 0.0
        %436 = vst.msk [vmem:[#allocation2 + $0xb0] sm:$0xff] %vm412, 0.0
        %437 = vst.msk [vmem:[#allocation2 + $0xb8] sm:$0x3] %vm415, 0.0
        %438 = vst.msk [vmem:[#allocation2 + $0xc0] sm:$0xff] %vm412, 0.0
        %439 = vst.msk [vmem:[#allocation2 + $0xc8] sm:$0xff] %vm412, 0.0
        %440 = vst.msk [vmem:[#allocation2 + $0xd0] sm:$0x3] %vm415, 0.0
        %441 = vst.msk [vmem:[#allocation2 + $0xd8] sm:$0xff] %vm412, 0.0
        %442 = vst.msk [vmem:[#allocation2 + $0xe0] sm:$0xff] %vm412, 0.0
        %443 = vst.msk [vmem:[#allocation2 + $0xe8] sm:$0x3] %vm415, 0.0
        %444 = vst.msk [vmem:[#allocation2 + $0xf0] sm:$0xff] %vm412, 0.0
        %445 = vst.msk [vmem:[#allocation2 + $0xf8] sm:$0xff] %vm412, 0.0
        %446 = vst.msk [vmem:[#allocation2 + $0x100] sm:$0x3] %vm415, 0.0
        %447 = vst.msk [vmem:[#allocation2 + $0x108] sm:$0xff] %vm412, 0.0
        %448 = vst.msk [vmem:[#allocation2 + $0x110] sm:$0xff] %vm412, 0.0
        %449 = vst.msk [vmem:[#allocation2 + $0x118] sm:$0x3] %vm415, 0.0
        %450 = vst.msk [vmem:[#allocation2 + $0x120] sm:$0xff] %vm412, 0.0
        %451 = vst.msk [vmem:[#allocation2 + $0x128] sm:$0xff] %vm412, 0.0
        %452 = vst.msk [vmem:[#allocation2 + $0x130] sm:$0x3] %vm415, 0.0
        %453 = vst.msk [vmem:[#allocation2 + $0x138] sm:$0xff] %vm412, 0.0
        %454 = vst.msk [vmem:[#allocation2 + $0x140] sm:$0xff] %vm412, 0.0
        %455 = vst.msk [vmem:[#allocation2 + $0x148] sm:$0x3] %vm415, 0.0
        %456 = vst.msk [vmem:[#allocation2 + $0x150] sm:$0xff] %vm412, 0.0
        %457 = vst.msk [vmem:[#allocation2 + $0x158] sm:$0xff] %vm412, 0.0
        %458 = vst.msk [vmem:[#allocation2 + $0x160] sm:$0x3] %vm415, 0.0
        %459 = vst.msk [vmem:[#allocation2 + $0x168] sm:$0xff] %vm412, 0.0
        %460 = vst.msk [vmem:[#allocation2 + $0x170] sm:$0xff] %vm412, 0.0
        %461 = vst.msk [vmem:[#allocation2 + $0x178] sm:$0x3] %vm415, 0.0
        %462 = vst.msk [vmem:[#allocation2 + $0x180] sm:$0xff] %vm412, 0.0
        %463 = vst.msk [vmem:[#allocation2 + $0x188] sm:$0xff] %vm412, 0.0
        %464 = vst.msk [vmem:[#allocation2 + $0x190] sm:$0x3] %vm415, 0.0
        %465 = vst.msk [vmem:[#allocation2 + $0x198] sm:$0xff] %vm412, 0.0
        %466 = vst.msk [vmem:[#allocation2 + $0x1a0] sm:$0xff] %vm412, 0.0
        %467 = vst.msk [vmem:[#allocation2 + $0x1a8] sm:$0x3] %vm415, 0.0
        %s468 = scalar_lea.vmem [#allocation2], 24
        %469 = vst.msk [vmem:[%s468 + $0x1] sm:$0xff] %vm412, %v380
        %470 = vst.msk [vmem:[%s468 + $0x9] sm:$0xff] %vm412, %v381
        %471 = vst.msk [vmem:[%s468 + $0x19] sm:$0xff] %vm412, %v382
        %472 = vst.msk [vmem:[%s468 + $0x21] sm:$0xff] %vm412, %v383
        %473 = vst.msk [vmem:[%s468 + $0x31] sm:$0xff] %vm412, %v384
        %474 = vst.msk [vmem:[%s468 + $0x39] sm:$0xff] %vm412, %v385
        %475 = vst.msk [vmem:[%s468 + $0x49] sm:$0xff] %vm412, %v386
        %476 = vst.msk [vmem:[%s468 + $0x51] sm:$0xff] %vm412, %v387
        %477 = vst.msk [vmem:[%s468 + $0x61] sm:$0xff] %vm412, %v388
        %478 = vst.msk [vmem:[%s468 + $0x69] sm:$0xff] %vm412, %v389
        %479 = vst.msk [vmem:[%s468 + $0x79] sm:$0xff] %vm412, %v390
        %480 = vst.msk [vmem:[%s468 + $0x81] sm:$0xff] %vm412, %v391
        %481 = vst.msk [vmem:[%s468 + $0x91] sm:$0xff] %vm412, %v392
        %482 = vst.msk [vmem:[%s468 + $0x99] sm:$0xff] %vm412, %v393
        %483 = vst.msk [vmem:[%s468 + $0xa9] sm:$0xff] %vm412, %v394
        %484 = vst.msk [vmem:[%s468 + $0xb1] sm:$0xff] %vm412, %v395
        %485 = vst.msk [vmem:[%s468 + $0xc1] sm:$0xff] %vm412, %v396
        %486 = vst.msk [vmem:[%s468 + $0xc9] sm:$0xff] %vm412, %v397
        %487 = vst.msk [vmem:[%s468 + $0xd9] sm:$0xff] %vm412, %v398
        %488 = vst.msk [vmem:[%s468 + $0xe1] sm:$0xff] %vm412, %v399
        %489 = vst.msk [vmem:[%s468 + $0xf1] sm:$0xff] %vm412, %v400
        %490 = vst.msk [vmem:[%s468 + $0xf9] sm:$0xff] %vm412, %v401
        %491 = vst.msk [vmem:[%s468 + $0x109] sm:$0xff] %vm412, %v402
        %492 = vst.msk [vmem:[%s468 + $0x111] sm:$0xff] %vm412, %v403
        %493 = vst.msk [vmem:[%s468 + $0x121] sm:$0xff] %vm412, %v404
        %494 = vst.msk [vmem:[%s468 + $0x129] sm:$0xff] %vm412, %v405
        %495 = vst.msk [vmem:[%s468 + $0x139] sm:$0xff] %vm412, %v406
        %496 = vst.msk [vmem:[%s468 + $0x141] sm:$0xff] %vm412, %v407
        %497 = vst.msk [vmem:[%s468 + $0x151] sm:$0xff] %vm412, %v408
        %498 = vst.msk [vmem:[%s468 + $0x159] sm:$0xff] %vm412, %v409
        %499 = vst.msk [vmem:[%s468 + $0x169] sm:$0xff] %vm412, %v410
        %500 = vst.msk [vmem:[%s468 + $0x171] sm:$0xff] %vm412, %v411
        %v501 = vld [vmem:[#allocation2] sm:$0xff]
        %v502 = vld [vmem:[#allocation2 + $0x8] sm:$0xff]
        %v503 = vld [vmem:[#allocation2 + $0x10] sm:$0x3]
        %v504 = vld [vmem:[#allocation2 + $0x18] sm:$0xff]
        %v505 = vld [vmem:[#allocation2 + $0x20] sm:$0xff]
        %v506 = vld [vmem:[#allocation2 + $0x28] sm:$0x3]
        %v507 = vld [vmem:[#allocation2 + $0x30] sm:$0xff]
        %v508 = vld [vmem:[#allocation2 + $0x38] sm:$0xff]
        %v509 = vld [vmem:[#allocation2 + $0x40] sm:$0x3]
        %v510 = vld [vmem:[#allocation2 + $0x48] sm:$0xff]
        %v511 = vld [vmem:[#allocation2 + $0x50] sm:$0xff]
        %v512 = vld [vmem:[#allocation2 + $0x58] sm:$0x3]
        %v513 = vld [vmem:[#allocation2 + $0x60] sm:$0xff]
        %v514 = vld [vmem:[#allocation2 + $0x68] sm:$0xff]
        %v515 = vld [vmem:[#allocation2 + $0x70] sm:$0x3]
        %v516 = vld [vmem:[#allocation2 + $0x78] sm:$0xff]
        %v517 = vld [vmem:[#allocation2 + $0x80] sm:$0xff]
        %v518 = vld [vmem:[#allocation2 + $0x88] sm:$0x3]
        %v519 = vld [vmem:[#allocation2 + $0x90] sm:$0xff]
        %v520 = vld [vmem:[#allocation2 + $0x98] sm:$0xff]
        %v521 = vld [vmem:[#allocation2 + $0xa0] sm:$0x3]
        %v522 = vld [vmem:[#allocation2 + $0xa8] sm:$0xff]
        %v523 = vld [vmem:[#allocation2 + $0xb0] sm:$0xff]
        %v524 = vld [vmem:[#allocation2 + $0xb8] sm:$0x3]
        %v525 = vld [vmem:[#allocation2 + $0xc0] sm:$0xff]
        %v526 = vld [vmem:[#allocation2 + $0xc8] sm:$0xff]
        %v527 = vld [vmem:[#allocation2 + $0xd0] sm:$0x3]
        %v528 = vld [vmem:[#allocation2 + $0xd8] sm:$0xff]
        %v529 = vld [vmem:[#allocation2 + $0xe0] sm:$0xff]
        %v530 = vld [vmem:[#allocation2 + $0xe8] sm:$0x3]
        %v531 = vld [vmem:[#allocation2 + $0xf0] sm:$0xff]
        %v532 = vld [vmem:[#allocation2 + $0xf8] sm:$0xff]
        %v533 = vld [vmem:[#allocation2 + $0x100] sm:$0x3]
        %v534 = vld [vmem:[#allocation2 + $0x108] sm:$0xff]
        %v535 = vld [vmem:[#allocation2 + $0x110] sm:$0xff]
        %v536 = vld [vmem:[#allocation2 + $0x118] sm:$0x3]
        %v537 = vld [vmem:[#allocation2 + $0x120] sm:$0xff]
        %v538 = vld [vmem:[#allocation2 + $0x128] sm:$0xff]
        %v539 = vld [vmem:[#allocation2 + $0x130] sm:$0x3]
        %v540 = vld [vmem:[#allocation2 + $0x138] sm:$0xff]
        %v541 = vld [vmem:[#allocation2 + $0x140] sm:$0xff]
        %v542 = vld [vmem:[#allocation2 + $0x148] sm:$0x3]
        %v543 = vld [vmem:[#allocation2 + $0x150] sm:$0xff]
        %v544 = vld [vmem:[#allocation2 + $0x158] sm:$0xff]
        %v545 = vld [vmem:[#allocation2 + $0x160] sm:$0x3]
        %v546 = vld [vmem:[#allocation2 + $0x168] sm:$0xff]
        %v547 = vld [vmem:[#allocation2 + $0x170] sm:$0xff]
        %v548 = vld [vmem:[#allocation2 + $0x178] sm:$0x3]
        %v549 = vld [vmem:[#allocation2 + $0x180] sm:$0xff]
        %v550 = vld [vmem:[#allocation2 + $0x188] sm:$0xff]
        %v551 = vld [vmem:[#allocation2 + $0x190] sm:$0x3]
        %v552 = vld [vmem:[#allocation2 + $0x198] sm:$0xff]
        %v553 = vld [vmem:[#allocation2 + $0x1a0] sm:$0xff]
        %v554 = vld [vmem:[#allocation2 + $0x1a8] sm:$0x3]
        %vm603 = vcmask 1046528
        %v604 = vrot.slane %v501, 1
        %v605 = vrot.slane %v502, 1
        %v606 = vsel %vm603, %v604, %v605
        %v607 = vrot.slane %v503, 1
        %v608 = vsel %vm603, %v605, %v607
        %v609 = vrot.slane %v504, 1
        %v610 = vrot.slane %v505, 1
        %v611 = vsel %vm603, %v609, %v610
        %v612 = vrot.slane %v506, 1
        %v613 = vsel %vm603, %v610, %v612
        %v614 = vrot.slane %v507, 1
        %v615 = vrot.slane %v508, 1
        %v616 = vsel %vm603, %v614, %v615
        %v617 = vrot.slane %v509, 1
        %v618 = vsel %vm603, %v615, %v617
        %v619 = vrot.slane %v510, 1
        %v620 = vrot.slane %v511, 1
        %v621 = vsel %vm603, %v619, %v620
        %v622 = vrot.slane %v512, 1
        %v623 = vsel %vm603, %v620, %v622
        %v624 = vrot.slane %v513, 1
        %v625 = vrot.slane %v514, 1
        %v626 = vsel %vm603, %v624, %v625
        %v627 = vrot.slane %v515, 1
        %v628 = vsel %vm603, %v625, %v627
        %v629 = vrot.slane %v516, 1
        %v630 = vrot.slane %v517, 1
        %v631 = vsel %vm603, %v629, %v630
        %v632 = vrot.slane %v518, 1
        %v633 = vsel %vm603, %v630, %v632
        %v634 = vrot.slane %v519, 1
        %v635 = vrot.slane %v520, 1
        %v636 = vsel %vm603, %v634, %v635
        %v637 = vrot.slane %v521, 1
        %v638 = vsel %vm603, %v635, %v637
        %v639 = vrot.slane %v522, 1
        %v640 = vrot.slane %v523, 1
        %v641 = vsel %vm603, %v639, %v640
        %v642 = vrot.slane %v524, 1
        %v643 = vsel %vm603, %v640, %v642
        %v644 = vrot.slane %v525, 1
        %v645 = vrot.slane %v526, 1
        %v646 = vsel %vm603, %v644, %v645
        %v647 = vrot.slane %v527, 1
        %v648 = vsel %vm603, %v645, %v647
        %v649 = vrot.slane %v528, 1
        %v650 = vrot.slane %v529, 1
        %v651 = vsel %vm603, %v649, %v650
        %v652 = vrot.slane %v530, 1
        %v653 = vsel %vm603, %v650, %v652
        %v654 = vrot.slane %v531, 1
        %v655 = vrot.slane %v532, 1
        %v656 = vsel %vm603, %v654, %v655
        %v657 = vrot.slane %v533, 1
        %v658 = vsel %vm603, %v655, %v657
        %v659 = vrot.slane %v534, 1
        %v660 = vrot.slane %v535, 1
        %v661 = vsel %vm603, %v659, %v660
        %v662 = vrot.slane %v536, 1
        %v663 = vsel %vm603, %v660, %v662
        %v664 = vrot.slane %v537, 1
        %v665 = vrot.slane %v538, 1
        %v666 = vsel %vm603, %v664, %v665
        %v667 = vrot.slane %v539, 1
        %v668 = vsel %vm603, %v665, %v667
        %v669 = vrot.slane %v540, 1
        %v670 = vrot.slane %v541, 1
        %v671 = vsel %vm603, %v669, %v670
        %v672 = vrot.slane %v542, 1
        %v673 = vsel %vm603, %v670, %v672
        %v674 = vrot.slane %v543, 1
        %v675 = vrot.slane %v544, 1
        %v676 = vsel %vm603, %v674, %v675
        %v677 = vrot.slane %v545, 1
        %v678 = vsel %vm603, %v675, %v677
        %v679 = vrot.slane %v546, 1
        %v680 = vrot.slane %v547, 1
        %v681 = vsel %vm603, %v679, %v680
        %v682 = vrot.slane %v548, 1
        %v683 = vsel %vm603, %v680, %v682
        %vm684 = vcmask 1045504
        %v685 = vrot.slane %v501, 2
        %v686 = vrot.slane %v502, 2
        %v687 = vsel %vm684, %v685, %v686
        %v688 = vrot.slane %v503, 2
        %v689 = vsel %vm684, %v686, %v688
        %v690 = vrot.slane %v504, 2
        %v691 = vrot.slane %v505, 2
        %v692 = vsel %vm684, %v690, %v691
        %v693 = vrot.slane %v506, 2
        %v694 = vsel %vm684, %v691, %v693
        %v695 = vrot.slane %v507, 2
        %v696 = vrot.slane %v508, 2
        %v697 = vsel %vm684, %v695, %v696
        %v698 = vrot.slane %v509, 2
        %v699 = vsel %vm684, %v696, %v698
        %v700 = vrot.slane %v510, 2
        %v701 = vrot.slane %v511, 2
        %v702 = vsel %vm684, %v700, %v701
        %v703 = vrot.slane %v512, 2
        %v704 = vsel %vm684, %v701, %v703
        %v705 = vrot.slane %v513, 2
        %v706 = vrot.slane %v514, 2
        %v707 = vsel %vm684, %v705, %v706
        %v708 = vrot.slane %v515, 2
        %v709 = vsel %vm684, %v706, %v708
        %v710 = vrot.slane %v516, 2
        %v711 = vrot.slane %v517, 2
        %v712 = vsel %vm684, %v710, %v711
        %v713 = vrot.slane %v518, 2
        %v714 = vsel %vm684, %v711, %v713
        %v715 = vrot.slane %v519, 2
        %v716 = vrot.slane %v520, 2
        %v717 = vsel %vm684, %v715, %v716
        %v718 = vrot.slane %v521, 2
        %v719 = vsel %vm684, %v716, %v718
        %v720 = vrot.slane %v522, 2
        %v721 = vrot.slane %v523, 2
        %v722 = vsel %vm684, %v720, %v721
        %v723 = vrot.slane %v524, 2
        %v724 = vsel %vm684, %v721, %v723
        %v725 = vrot.slane %v525, 2
        %v726 = vrot.slane %v526, 2
        %v727 = vsel %vm684, %v725, %v726
        %v728 = vrot.slane %v527, 2
        %v729 = vsel %vm684, %v726, %v728
        %v730 = vrot.slane %v528, 2
        %v731 = vrot.slane %v529, 2
        %v732 = vsel %vm684, %v730, %v731
        %v733 = vrot.slane %v530, 2
        %v734 = vsel %vm684, %v731, %v733
        %v735 = vrot.slane %v531, 2
        %v736 = vrot.slane %v532, 2
        %v737 = vsel %vm684, %v735, %v736
        %v738 = vrot.slane %v533, 2
        %v739 = vsel %vm684, %v736, %v738
        %v740 = vrot.slane %v534, 2
        %v741 = vrot.slane %v535, 2
        %v742 = vsel %vm684, %v740, %v741
        %v743 = vrot.slane %v536, 2
        %v744 = vsel %vm684, %v741, %v743
        %v745 = vrot.slane %v537, 2
        %v746 = vrot.slane %v538, 2
        %v747 = vsel %vm684, %v745, %v746
        %v748 = vrot.slane %v539, 2
        %v749 = vsel %vm684, %v746, %v748
        %v750 = vrot.slane %v540, 2
        %v751 = vrot.slane %v541, 2
        %v752 = vsel %vm684, %v750, %v751
        %v753 = vrot.slane %v542, 2
        %v754 = vsel %vm684, %v751, %v753
        %v755 = vrot.slane %v543, 2
        %v756 = vrot.slane %v544, 2
        %v757 = vsel %vm684, %v755, %v756
        %v758 = vrot.slane %v545, 2
        %v759 = vsel %vm684, %v756, %v758
        %v760 = vrot.slane %v546, 2
        %v761 = vrot.slane %v547, 2
        %v762 = vsel %vm684, %v760, %v761
        %v763 = vrot.slane %v548, 2
        %v764 = vsel %vm684, %v761, %v763
        %v768 = vrot.slane %v549, 1
        %v769 = vrot.slane %v550, 1
        %v770 = vsel %vm603, %v768, %v769
        %v771 = vrot.slane %v551, 1
        %v772 = vsel %vm603, %v769, %v771
        %v805 = vrot.slane %v549, 2
        %v806 = vrot.slane %v550, 2
        %v807 = vsel %vm684, %v805, %v806
        %v808 = vrot.slane %v551, 2
        %v809 = vsel %vm684, %v806, %v808
        %v813 = vrot.slane %v552, 1
        %v814 = vrot.slane %v553, 1
        %v815 = vsel %vm603, %v813, %v814
        %v816 = vrot.slane %v554, 1
        %v817 = vsel %vm603, %v814, %v816
        %v818 = vrot.slane %v552, 2
        %v819 = vrot.slane %v553, 2
        %v820 = vsel %vm684, %v818, %v819
        %v821 = vrot.slane %v554, 2
        %v822 = vsel %vm684, %v819, %v821
        %823 = vrot.lane.b32.xlu0 %v606, 32
        %v824 = vpop.permute.xlu0 %823
        %825 = vrot.lane.b32.xlu0 %v608, 32
        %v826 = vpop.permute.xlu0 %825
        %827 = vrot.lane.b32.xlu0 %v611, 32
        %v828 = vpop.permute.xlu0 %827
        %829 = vrot.lane.b32.xlu0 %v613, 32
        %v830 = vpop.permute.xlu0 %829
        %831 = vrot.lane.b32.xlu0 %v616, 32
        %v832 = vpop.permute.xlu0 %831
        %833 = vrot.lane.b32.xlu0 %v618, 32
        %v834 = vpop.permute.xlu0 %833
        %835 = vrot.lane.b32.xlu0 %v621, 32
        %v836 = vpop.permute.xlu0 %835
        %837 = vrot.lane.b32.xlu0 %v623, 32
        %v838 = vpop.permute.xlu0 %837
        %839 = vrot.lane.b32.xlu0 %v626, 32
        %v840 = vpop.permute.xlu0 %839
        %841 = vrot.lane.b32.xlu0 %v628, 32
        %v842 = vpop.permute.xlu0 %841
        %843 = vrot.lane.b32.xlu0 %v631, 32
        %v844 = vpop.permute.xlu0 %843
        %845 = vrot.lane.b32.xlu0 %v633, 32
        %v846 = vpop.permute.xlu0 %845
        %847 = vrot.lane.b32.xlu0 %v636, 32
        %v848 = vpop.permute.xlu0 %847
        %849 = vrot.lane.b32.xlu0 %v638, 32
        %v850 = vpop.permute.xlu0 %849
        %851 = vrot.lane.b32.xlu0 %v641, 32
        %v852 = vpop.permute.xlu0 %851
        %853 = vrot.lane.b32.xlu0 %v643, 32
        %v854 = vpop.permute.xlu0 %853
        %855 = vrot.lane.b32.xlu0 %v646, 32
        %v856 = vpop.permute.xlu0 %855
        %857 = vrot.lane.b32.xlu0 %v648, 32
        %v858 = vpop.permute.xlu0 %857
        %859 = vrot.lane.b32.xlu0 %v651, 32
        %v860 = vpop.permute.xlu0 %859
        %861 = vrot.lane.b32.xlu0 %v653, 32
        %v862 = vpop.permute.xlu0 %861
        %863 = vrot.lane.b32.xlu0 %v656, 32
        %v864 = vpop.permute.xlu0 %863
        %865 = vrot.lane.b32.xlu0 %v658, 32
        %v866 = vpop.permute.xlu0 %865
        %867 = vrot.lane.b32.xlu0 %v661, 32
        %v868 = vpop.permute.xlu0 %867
        %869 = vrot.lane.b32.xlu0 %v663, 32
        %v870 = vpop.permute.xlu0 %869
        %871 = vrot.lane.b32.xlu0 %v666, 32
        %v872 = vpop.permute.xlu0 %871
        %873 = vrot.lane.b32.xlu0 %v668, 32
        %v874 = vpop.permute.xlu0 %873
        %875 = vrot.lane.b32.xlu0 %v671, 32
        %v876 = vpop.permute.xlu0 %875
        %877 = vrot.lane.b32.xlu0 %v673, 32
        %v878 = vpop.permute.xlu0 %877
        %879 = vrot.lane.b32.xlu0 %v676, 32
        %v880 = vpop.permute.xlu0 %879
        %881 = vrot.lane.b32.xlu0 %v678, 32
        %v882 = vpop.permute.xlu0 %881
        %883 = vrot.lane.b32.xlu0 %v681, 32
        %v884 = vpop.permute.xlu0 %883
        %885 = vrot.lane.b32.xlu0 %v683, 32
        %v886 = vpop.permute.xlu0 %885
        %919 = vrot.lane.b32.xlu0 %v687, 64
        %v920 = vpop.permute.xlu0 %919
        %921 = vrot.lane.b32.xlu0 %v689, 64
        %v922 = vpop.permute.xlu0 %921
        %923 = vrot.lane.b32.xlu0 %v692, 64
        %v924 = vpop.permute.xlu0 %923
        %925 = vrot.lane.b32.xlu0 %v694, 64
        %v926 = vpop.permute.xlu0 %925
        %927 = vrot.lane.b32.xlu0 %v697, 64
        %v928 = vpop.permute.xlu0 %927
        %929 = vrot.lane.b32.xlu0 %v699, 64
        %v930 = vpop.permute.xlu0 %929
        %931 = vrot.lane.b32.xlu0 %v702, 64
        %v932 = vpop.permute.xlu0 %931
        %933 = vrot.lane.b32.xlu0 %v704, 64
        %v934 = vpop.permute.xlu0 %933
        %935 = vrot.lane.b32.xlu0 %v707, 64
        %v936 = vpop.permute.xlu0 %935
        %937 = vrot.lane.b32.xlu0 %v709, 64
        %v938 = vpop.permute.xlu0 %937
        %939 = vrot.lane.b32.xlu0 %v712, 64
        %v940 = vpop.permute.xlu0 %939
        %941 = vrot.lane.b32.xlu0 %v714, 64
        %v942 = vpop.permute.xlu0 %941
        %943 = vrot.lane.b32.xlu0 %v717, 64
        %v944 = vpop.permute.xlu0 %943
        %945 = vrot.lane.b32.xlu0 %v719, 64
        %v946 = vpop.permute.xlu0 %945
        %947 = vrot.lane.b32.xlu0 %v722, 64
        %v948 = vpop.permute.xlu0 %947
        %949 = vrot.lane.b32.xlu0 %v724, 64
        %v950 = vpop.permute.xlu0 %949
        %951 = vrot.lane.b32.xlu0 %v727, 64
        %v952 = vpop.permute.xlu0 %951
        %953 = vrot.lane.b32.xlu0 %v729, 64
        %v954 = vpop.permute.xlu0 %953
        %955 = vrot.lane.b32.xlu0 %v732, 64
        %v956 = vpop.permute.xlu0 %955
        %957 = vrot.lane.b32.xlu0 %v734, 64
        %v958 = vpop.permute.xlu0 %957
        %959 = vrot.lane.b32.xlu0 %v737, 64
        %v960 = vpop.permute.xlu0 %959
        %961 = vrot.lane.b32.xlu0 %v739, 64
        %v962 = vpop.permute.xlu0 %961
        %963 = vrot.lane.b32.xlu0 %v742, 64
        %v964 = vpop.permute.xlu0 %963
        %965 = vrot.lane.b32.xlu0 %v744, 64
        %v966 = vpop.permute.xlu0 %965
        %967 = vrot.lane.b32.xlu0 %v747, 64
        %v968 = vpop.permute.xlu0 %967
        %969 = vrot.lane.b32.xlu0 %v749, 64
        %v970 = vpop.permute.xlu0 %969
        %971 = vrot.lane.b32.xlu0 %v752, 64
        %v972 = vpop.permute.xlu0 %971
        %973 = vrot.lane.b32.xlu0 %v754, 64
        %v974 = vpop.permute.xlu0 %973
        %975 = vrot.lane.b32.xlu0 %v757, 64
        %v976 = vpop.permute.xlu0 %975
        %977 = vrot.lane.b32.xlu0 %v759, 64
        %v978 = vpop.permute.xlu0 %977
        %979 = vrot.lane.b32.xlu0 %v762, 64
        %v980 = vpop.permute.xlu0 %979
        %981 = vrot.lane.b32.xlu0 %v764, 64
        %v982 = vpop.permute.xlu0 %981
        %1015 = vrot.lane.b32.xlu0 %v504, 96
        %v1016 = vpop.permute.xlu0 %1015
        %1017 = vrot.lane.b32.xlu0 %v505, 96
        %v1018 = vpop.permute.xlu0 %1017
        %1019 = vrot.lane.b32.xlu0 %v507, 96
        %v1020 = vpop.permute.xlu0 %1019
        %1021 = vrot.lane.b32.xlu0 %v508, 96
        %v1022 = vpop.permute.xlu0 %1021
        %1023 = vrot.lane.b32.xlu0 %v510, 96
        %v1024 = vpop.permute.xlu0 %1023
        %1025 = vrot.lane.b32.xlu0 %v511, 96
        %v1026 = vpop.permute.xlu0 %1025
        %1027 = vrot.lane.b32.xlu0 %v513, 96
        %v1028 = vpop.permute.xlu0 %1027
        %1029 = vrot.lane.b32.xlu0 %v514, 96
        %v1030 = vpop.permute.xlu0 %1029
        %1031 = vrot.lane.b32.xlu0 %v516, 96
        %v1032 = vpop.permute.xlu0 %1031
        %1033 = vrot.lane.b32.xlu0 %v517, 96
        %v1034 = vpop.permute.xlu0 %1033
        %1035 = vrot.lane.b32.xlu0 %v519, 96
        %v1036 = vpop.permute.xlu0 %1035
        %1037 = vrot.lane.b32.xlu0 %v520, 96
        %v1038 = vpop.permute.xlu0 %1037
        %1039 = vrot.lane.b32.xlu0 %v522, 96
        %v1040 = vpop.permute.xlu0 %1039
        %1041 = vrot.lane.b32.xlu0 %v523, 96
        %v1042 = vpop.permute.xlu0 %1041
        %1043 = vrot.lane.b32.xlu0 %v525, 96
        %v1044 = vpop.permute.xlu0 %1043
        %1045 = vrot.lane.b32.xlu0 %v526, 96
        %v1046 = vpop.permute.xlu0 %1045
        %1047 = vrot.lane.b32.xlu0 %v528, 96
        %v1048 = vpop.permute.xlu0 %1047
        %1049 = vrot.lane.b32.xlu0 %v529, 96
        %v1050 = vpop.permute.xlu0 %1049
        %1051 = vrot.lane.b32.xlu0 %v531, 96
        %v1052 = vpop.permute.xlu0 %1051
        %1053 = vrot.lane.b32.xlu0 %v532, 96
        %v1054 = vpop.permute.xlu0 %1053
        %1055 = vrot.lane.b32.xlu0 %v534, 96
        %v1056 = vpop.permute.xlu0 %1055
        %1057 = vrot.lane.b32.xlu0 %v535, 96
        %v1058 = vpop.permute.xlu0 %1057
        %1059 = vrot.lane.b32.xlu0 %v537, 96
        %v1060 = vpop.permute.xlu0 %1059
        %1061 = vrot.lane.b32.xlu0 %v538, 96
        %v1062 = vpop.permute.xlu0 %1061
        %1063 = vrot.lane.b32.xlu0 %v540, 96
        %v1064 = vpop.permute.xlu0 %1063
        %1065 = vrot.lane.b32.xlu0 %v541, 96
        %v1066 = vpop.permute.xlu0 %1065
        %1067 = vrot.lane.b32.xlu0 %v543, 96
        %v1068 = vpop.permute.xlu0 %1067
        %1069 = vrot.lane.b32.xlu0 %v544, 96
        %v1070 = vpop.permute.xlu0 %1069
        %1071 = vrot.lane.b32.xlu0 %v546, 96
        %v1072 = vpop.permute.xlu0 %1071
        %1073 = vrot.lane.b32.xlu0 %v547, 96
        %v1074 = vpop.permute.xlu0 %1073
        %1075 = vrot.lane.b32.xlu0 %v549, 96
        %v1076 = vpop.permute.xlu0 %1075
        %1077 = vrot.lane.b32.xlu0 %v550, 96
        %v1078 = vpop.permute.xlu0 %1077
        %1111 = vrot.lane.b32.xlu0 %v692, 32
        %v1112 = vpop.permute.xlu0 %1111
        %1113 = vrot.lane.b32.xlu0 %v694, 32
        %v1114 = vpop.permute.xlu0 %1113
        %1115 = vrot.lane.b32.xlu0 %v697, 32
        %v1116 = vpop.permute.xlu0 %1115
        %1117 = vrot.lane.b32.xlu0 %v699, 32
        %v1118 = vpop.permute.xlu0 %1117
        %1119 = vrot.lane.b32.xlu0 %v702, 32
        %v1120 = vpop.permute.xlu0 %1119
        %1121 = vrot.lane.b32.xlu0 %v704, 32
        %v1122 = vpop.permute.xlu0 %1121
        %1123 = vrot.lane.b32.xlu0 %v707, 32
        %v1124 = vpop.permute.xlu0 %1123
        %1125 = vrot.lane.b32.xlu0 %v709, 32
        %v1126 = vpop.permute.xlu0 %1125
        %1127 = vrot.lane.b32.xlu0 %v712, 32
        %v1128 = vpop.permute.xlu0 %1127
        %1129 = vrot.lane.b32.xlu0 %v714, 32
        %v1130 = vpop.permute.xlu0 %1129
        %1131 = vrot.lane.b32.xlu0 %v717, 32
        %v1132 = vpop.permute.xlu0 %1131
        %1133 = vrot.lane.b32.xlu0 %v719, 32
        %v1134 = vpop.permute.xlu0 %1133
        %1135 = vrot.lane.b32.xlu0 %v722, 32
        %v1136 = vpop.permute.xlu0 %1135
        %1137 = vrot.lane.b32.xlu0 %v724, 32
        %v1138 = vpop.permute.xlu0 %1137
        %1139 = vrot.lane.b32.xlu0 %v727, 32
        %v1140 = vpop.permute.xlu0 %1139
        %1141 = vrot.lane.b32.xlu0 %v729, 32
        %v1142 = vpop.permute.xlu0 %1141
        %1143 = vrot.lane.b32.xlu0 %v732, 32
        %v1144 = vpop.permute.xlu0 %1143
        %1145 = vrot.lane.b32.xlu0 %v734, 32
        %v1146 = vpop.permute.xlu0 %1145
        %1147 = vrot.lane.b32.xlu0 %v737, 32
        %v1148 = vpop.permute.xlu0 %1147
        %1149 = vrot.lane.b32.xlu0 %v739, 32
        %v1150 = vpop.permute.xlu0 %1149
        %1151 = vrot.lane.b32.xlu0 %v742, 32
        %v1152 = vpop.permute.xlu0 %1151
        %1153 = vrot.lane.b32.xlu0 %v744, 32
        %v1154 = vpop.permute.xlu0 %1153
        %1155 = vrot.lane.b32.xlu0 %v747, 32
        %v1156 = vpop.permute.xlu0 %1155
        %1157 = vrot.lane.b32.xlu0 %v749, 32
        %v1158 = vpop.permute.xlu0 %1157
        %1159 = vrot.lane.b32.xlu0 %v752, 32
        %v1160 = vpop.permute.xlu0 %1159
        %1161 = vrot.lane.b32.xlu0 %v754, 32
        %v1162 = vpop.permute.xlu0 %1161
        %1163 = vrot.lane.b32.xlu0 %v757, 32
        %v1164 = vpop.permute.xlu0 %1163
        %1165 = vrot.lane.b32.xlu0 %v759, 32
        %v1166 = vpop.permute.xlu0 %1165
        %1167 = vrot.lane.b32.xlu0 %v762, 32
        %v1168 = vpop.permute.xlu0 %1167
        %1169 = vrot.lane.b32.xlu0 %v764, 32
        %v1170 = vpop.permute.xlu0 %1169
        %1171 = vrot.lane.b32.xlu0 %v807, 32
        %v1172 = vpop.permute.xlu0 %1171
        %1173 = vrot.lane.b32.xlu0 %v809, 32
        %v1174 = vpop.permute.xlu0 %1173
        %1207 = vrot.lane.b32.xlu0 %v507, 64
        %v1208 = vpop.permute.xlu0 %1207
        %1209 = vrot.lane.b32.xlu0 %v508, 64
        %v1210 = vpop.permute.xlu0 %1209
        %1211 = vrot.lane.b32.xlu0 %v510, 64
        %v1212 = vpop.permute.xlu0 %1211
        %1213 = vrot.lane.b32.xlu0 %v511, 64
        %v1214 = vpop.permute.xlu0 %1213
        %1215 = vrot.lane.b32.xlu0 %v513, 64
        %v1216 = vpop.permute.xlu0 %1215
        %1217 = vrot.lane.b32.xlu0 %v514, 64
        %v1218 = vpop.permute.xlu0 %1217
        %1219 = vrot.lane.b32.xlu0 %v516, 64
        %v1220 = vpop.permute.xlu0 %1219
        %1221 = vrot.lane.b32.xlu0 %v517, 64
        %v1222 = vpop.permute.xlu0 %1221
        %1223 = vrot.lane.b32.xlu0 %v519, 64
        %v1224 = vpop.permute.xlu0 %1223
        %1225 = vrot.lane.b32.xlu0 %v520, 64
        %v1226 = vpop.permute.xlu0 %1225
        %1227 = vrot.lane.b32.xlu0 %v522, 64
        %v1228 = vpop.permute.xlu0 %1227
        %1229 = vrot.lane.b32.xlu0 %v523, 64
        %v1230 = vpop.permute.xlu0 %1229
        %1231 = vrot.lane.b32.xlu0 %v525, 64
        %v1232 = vpop.permute.xlu0 %1231
        %1233 = vrot.lane.b32.xlu0 %v526, 64
        %v1234 = vpop.permute.xlu0 %1233
        %1235 = vrot.lane.b32.xlu0 %v528, 64
        %v1236 = vpop.permute.xlu0 %1235
        %1237 = vrot.lane.b32.xlu0 %v529, 64
        %v1238 = vpop.permute.xlu0 %1237
        %1239 = vrot.lane.b32.xlu0 %v531, 64
        %v1240 = vpop.permute.xlu0 %1239
        %1241 = vrot.lane.b32.xlu0 %v532, 64
        %v1242 = vpop.permute.xlu0 %1241
        %1243 = vrot.lane.b32.xlu0 %v534, 64
        %v1244 = vpop.permute.xlu0 %1243
        %1245 = vrot.lane.b32.xlu0 %v535, 64
        %v1246 = vpop.permute.xlu0 %1245
        %1247 = vrot.lane.b32.xlu0 %v537, 64
        %v1248 = vpop.permute.xlu0 %1247
        %1249 = vrot.lane.b32.xlu0 %v538, 64
        %v1250 = vpop.permute.xlu0 %1249
        %1251 = vrot.lane.b32.xlu0 %v540, 64
        %v1252 = vpop.permute.xlu0 %1251
        %1253 = vrot.lane.b32.xlu0 %v541, 64
        %v1254 = vpop.permute.xlu0 %1253
        %1255 = vrot.lane.b32.xlu0 %v543, 64
        %v1256 = vpop.permute.xlu0 %1255
        %1257 = vrot.lane.b32.xlu0 %v544, 64
        %v1258 = vpop.permute.xlu0 %1257
        %1259 = vrot.lane.b32.xlu0 %v546, 64
        %v1260 = vpop.permute.xlu0 %1259
        %1261 = vrot.lane.b32.xlu0 %v547, 64
        %v1262 = vpop.permute.xlu0 %1261
        %1263 = vrot.lane.b32.xlu0 %v549, 64
        %v1264 = vpop.permute.xlu0 %1263
        %1265 = vrot.lane.b32.xlu0 %v550, 64
        %v1266 = vpop.permute.xlu0 %1265
        %1267 = vrot.lane.b32.xlu0 %v552, 64
        %v1268 = vpop.permute.xlu0 %1267
        %1269 = vrot.lane.b32.xlu0 %v553, 64
        %v1270 = vpop.permute.xlu0 %1269
        %1303 = vrot.lane.b32.xlu0 %v616, 96
        %v1304 = vpop.permute.xlu0 %1303
        %1305 = vrot.lane.b32.xlu0 %v618, 96
        %v1306 = vpop.permute.xlu0 %1305
        %1307 = vrot.lane.b32.xlu0 %v621, 96
        %v1308 = vpop.permute.xlu0 %1307
        %1309 = vrot.lane.b32.xlu0 %v623, 96
        %v1310 = vpop.permute.xlu0 %1309
        %1311 = vrot.lane.b32.xlu0 %v626, 96
        %v1312 = vpop.permute.xlu0 %1311
        %1313 = vrot.lane.b32.xlu0 %v628, 96
        %v1314 = vpop.permute.xlu0 %1313
        %1315 = vrot.lane.b32.xlu0 %v631, 96
        %v1316 = vpop.permute.xlu0 %1315
        %1317 = vrot.lane.b32.xlu0 %v633, 96
        %v1318 = vpop.permute.xlu0 %1317
        %1319 = vrot.lane.b32.xlu0 %v636, 96
        %v1320 = vpop.permute.xlu0 %1319
        %1321 = vrot.lane.b32.xlu0 %v638, 96
        %v1322 = vpop.permute.xlu0 %1321
        %1323 = vrot.lane.b32.xlu0 %v641, 96
        %v1324 = vpop.permute.xlu0 %1323
        %1325 = vrot.lane.b32.xlu0 %v643, 96
        %v1326 = vpop.permute.xlu0 %1325
        %1327 = vrot.lane.b32.xlu0 %v646, 96
        %v1328 = vpop.permute.xlu0 %1327
        %1329 = vrot.lane.b32.xlu0 %v648, 96
        %v1330 = vpop.permute.xlu0 %1329
        %1331 = vrot.lane.b32.xlu0 %v651, 96
        %v1332 = vpop.permute.xlu0 %1331
        %1333 = vrot.lane.b32.xlu0 %v653, 96
        %v1334 = vpop.permute.xlu0 %1333
        %1335 = vrot.lane.b32.xlu0 %v656, 96
        %v1336 = vpop.permute.xlu0 %1335
        %1337 = vrot.lane.b32.xlu0 %v658, 96
        %v1338 = vpop.permute.xlu0 %1337
        %1339 = vrot.lane.b32.xlu0 %v661, 96
        %v1340 = vpop.permute.xlu0 %1339
        %1341 = vrot.lane.b32.xlu0 %v663, 96
        %v1342 = vpop.permute.xlu0 %1341
        %1343 = vrot.lane.b32.xlu0 %v666, 96
        %v1344 = vpop.permute.xlu0 %1343
        %1345 = vrot.lane.b32.xlu0 %v668, 96
        %v1346 = vpop.permute.xlu0 %1345
        %1347 = vrot.lane.b32.xlu0 %v671, 96
        %v1348 = vpop.permute.xlu0 %1347
        %1349 = vrot.lane.b32.xlu0 %v673, 96
        %v1350 = vpop.permute.xlu0 %1349
        %1351 = vrot.lane.b32.xlu0 %v676, 96
        %v1352 = vpop.permute.xlu0 %1351
        %1353 = vrot.lane.b32.xlu0 %v678, 96
        %v1354 = vpop.permute.xlu0 %1353
        %1355 = vrot.lane.b32.xlu0 %v681, 96
        %v1356 = vpop.permute.xlu0 %1355
        %1357 = vrot.lane.b32.xlu0 %v683, 96
        %v1358 = vpop.permute.xlu0 %1357
        %1359 = vrot.lane.b32.xlu0 %v770, 96
        %v1360 = vpop.permute.xlu0 %1359
        %1361 = vrot.lane.b32.xlu0 %v772, 96
        %v1362 = vpop.permute.xlu0 %1361
        %1363 = vrot.lane.b32.xlu0 %v815, 96
        %v1364 = vpop.permute.xlu0 %1363
        %1365 = vrot.lane.b32.xlu0 %v817, 96
        %v1366 = vpop.permute.xlu0 %1365
        %v1399 = vsel %vm412, %v501, %v824
        %v1400 = vsel %vm412, %v502, %v826
        %v1401 = vsel %vm412, %v504, %v828
        %v1402 = vsel %vm412, %v505, %v830
        %v1403 = vsel %vm412, %v507, %v832
        %v1404 = vsel %vm412, %v508, %v834
        %v1405 = vsel %vm412, %v510, %v836
        %v1406 = vsel %vm412, %v511, %v838
        %v1407 = vsel %vm412, %v513, %v840
        %v1408 = vsel %vm412, %v514, %v842
        %v1409 = vsel %vm412, %v516, %v844
        %v1410 = vsel %vm412, %v517, %v846
        %v1411 = vsel %vm412, %v519, %v848
        %v1412 = vsel %vm412, %v520, %v850
        %v1413 = vsel %vm412, %v522, %v852
        %v1414 = vsel %vm412, %v523, %v854
        %v1415 = vsel %vm412, %v525, %v856
        %v1416 = vsel %vm412, %v526, %v858
        %v1417 = vsel %vm412, %v528, %v860
        %v1418 = vsel %vm412, %v529, %v862
        %v1419 = vsel %vm412, %v531, %v864
        %v1420 = vsel %vm412, %v532, %v866
        %v1421 = vsel %vm412, %v534, %v868
        %v1422 = vsel %vm412, %v535, %v870
        %v1423 = vsel %vm412, %v537, %v872
        %v1424 = vsel %vm412, %v538, %v874
        %v1425 = vsel %vm412, %v540, %v876
        %v1426 = vsel %vm412, %v541, %v878
        %v1427 = vsel %vm412, %v543, %v880
        %v1428 = vsel %vm412, %v544, %v882
        %v1429 = vsel %vm412, %v546, %v884
        %v1430 = vsel %vm412, %v547, %v886
        %vm1431 = vcmask 523264
        %v1432 = vsel %vm1431, %v1399, %v920
        %v1433 = vsel %vm1431, %v1400, %v922
        %v1434 = vsel %vm1431, %v1401, %v924
        %v1435 = vsel %vm1431, %v1402, %v926
        %v1436 = vsel %vm1431, %v1403, %v928
        %v1437 = vsel %vm1431, %v1404, %v930
        %v1438 = vsel %vm1431, %v1405, %v932
        %v1439 = vsel %vm1431, %v1406, %v934
        %v1440 = vsel %vm1431, %v1407, %v936
        %v1441 = vsel %vm1431, %v1408, %v938
        %v1442 = vsel %vm1431, %v1409, %v940
        %v1443 = vsel %vm1431, %v1410, %v942
        %v1444 = vsel %vm1431, %v1411, %v944
        %v1445 = vsel %vm1431, %v1412, %v946
        %v1446 = vsel %vm1431, %v1413, %v948
        %v1447 = vsel %vm1431, %v1414, %v950
        %v1448 = vsel %vm1431, %v1415, %v952
        %v1449 = vsel %vm1431, %v1416, %v954
        %v1450 = vsel %vm1431, %v1417, %v956
        %v1451 = vsel %vm1431, %v1418, %v958
        %v1452 = vsel %vm1431, %v1419, %v960
        %v1453 = vsel %vm1431, %v1420, %v962
        %v1454 = vsel %vm1431, %v1421, %v964
        %v1455 = vsel %vm1431, %v1422, %v966
        %v1456 = vsel %vm1431, %v1423, %v968
        %v1457 = vsel %vm1431, %v1424, %v970
        %v1458 = vsel %vm1431, %v1425, %v972
        %v1459 = vsel %vm1431, %v1426, %v974
        %v1460 = vsel %vm1431, %v1427, %v976
        %v1461 = vsel %vm1431, %v1428, %v978
        %v1462 = vsel %vm1431, %v1429, %v980
        %v1463 = vsel %vm1431, %v1430, %v982
        %vm1464 = vcmask 785408
        %v1465 = vsel %vm1464, %v1432, %v1016
        %v1466 = vsel %vm1464, %v1433, %v1018
        %v1467 = vsel %vm1464, %v1434, %v1020
        %v1468 = vsel %vm1464, %v1435, %v1022
        %v1469 = vsel %vm1464, %v1436, %v1024
        %v1470 = vsel %vm1464, %v1437, %v1026
        %v1471 = vsel %vm1464, %v1438, %v1028
        %v1472 = vsel %vm1464, %v1439, %v1030
        %v1473 = vsel %vm1464, %v1440, %v1032
        %v1474 = vsel %vm1464, %v1441, %v1034
        %v1475 = vsel %vm1464, %v1442, %v1036
        %v1476 = vsel %vm1464, %v1443, %v1038
        %v1477 = vsel %vm1464, %v1444, %v1040
        %v1478 = vsel %vm1464, %v1445, %v1042
        %v1479 = vsel %vm1464, %v1446, %v1044
        %v1480 = vsel %vm1464, %v1447, %v1046
        %v1481 = vsel %vm1464, %v1448, %v1048
        %v1482 = vsel %vm1464, %v1449, %v1050
        %v1483 = vsel %vm1464, %v1450, %v1052
        %v1484 = vsel %vm1464, %v1451, %v1054
        %v1485 = vsel %vm1464, %v1452, %v1056
        %v1486 = vsel %vm1464, %v1453, %v1058
        %v1487 = vsel %vm1464, %v1454, %v1060
        %v1488 = vsel %vm1464, %v1455, %v1062
        %v1489 = vsel %vm1464, %v1456, %v1064
        %v1490 = vsel %vm1464, %v1457, %v1066
        %v1491 = vsel %vm1464, %v1458, %v1068
        %v1492 = vsel %vm1464, %v1459, %v1070
        %v1493 = vsel %vm1464, %v1460, %v1072
        %v1494 = vsel %vm1464, %v1461, %v1074
        %v1495 = vsel %vm1464, %v1462, %v1076
        %v1496 = vsel %vm1464, %v1463, %v1078
        %v1497 = vsel %vm412, %v611, %v1112
        %v1498 = vsel %vm412, %v613, %v1114
        %v1499 = vsel %vm412, %v616, %v1116
        %v1500 = vsel %vm412, %v618, %v1118
        %v1501 = vsel %vm412, %v621, %v1120
        %v1502 = vsel %vm412, %v623, %v1122
        %v1503 = vsel %vm412, %v626, %v1124
        %v1504 = vsel %vm412, %v628, %v1126
        %v1505 = vsel %vm412, %v631, %v1128
        %v1506 = vsel %vm412, %v633, %v1130
        %v1507 = vsel %vm412, %v636, %v1132
        %v1508 = vsel %vm412, %v638, %v1134
        %v1509 = vsel %vm412, %v641, %v1136
        %v1510 = vsel %vm412, %v643, %v1138
        %v1511 = vsel %vm412, %v646, %v1140
        %v1512 = vsel %vm412, %v648, %v1142
        %v1513 = vsel %vm412, %v651, %v1144
        %v1514 = vsel %vm412, %v653, %v1146
        %v1515 = vsel %vm412, %v656, %v1148
        %v1516 = vsel %vm412, %v658, %v1150
        %v1517 = vsel %vm412, %v661, %v1152
        %v1518 = vsel %vm412, %v663, %v1154
        %v1519 = vsel %vm412, %v666, %v1156
        %v1520 = vsel %vm412, %v668, %v1158
        %v1521 = vsel %vm412, %v671, %v1160
        %v1522 = vsel %vm412, %v673, %v1162
        %v1523 = vsel %vm412, %v676, %v1164
        %v1524 = vsel %vm412, %v678, %v1166
        %v1525 = vsel %vm412, %v681, %v1168
        %v1526 = vsel %vm412, %v683, %v1170
        %v1527 = vsel %vm412, %v770, %v1172
        %v1528 = vsel %vm412, %v772, %v1174
        %v1529 = vsel %vm1431, %v1497, %v1208
        %v1530 = vsel %vm1431, %v1498, %v1210
        %v1531 = vsel %vm1431, %v1499, %v1212
        %v1532 = vsel %vm1431, %v1500, %v1214
        %v1533 = vsel %vm1431, %v1501, %v1216
        %v1534 = vsel %vm1431, %v1502, %v1218
        %v1535 = vsel %vm1431, %v1503, %v1220
        %v1536 = vsel %vm1431, %v1504, %v1222
        %v1537 = vsel %vm1431, %v1505, %v1224
        %v1538 = vsel %vm1431, %v1506, %v1226
        %v1539 = vsel %vm1431, %v1507, %v1228
        %v1540 = vsel %vm1431, %v1508, %v1230
        %v1541 = vsel %vm1431, %v1509, %v1232
        %v1542 = vsel %vm1431, %v1510, %v1234
        %v1543 = vsel %vm1431, %v1511, %v1236
        %v1544 = vsel %vm1431, %v1512, %v1238
        %v1545 = vsel %vm1431, %v1513, %v1240
        %v1546 = vsel %vm1431, %v1514, %v1242
        %v1547 = vsel %vm1431, %v1515, %v1244
        %v1548 = vsel %vm1431, %v1516, %v1246
        %v1549 = vsel %vm1431, %v1517, %v1248
        %v1550 = vsel %vm1431, %v1518, %v1250
        %v1551 = vsel %vm1431, %v1519, %v1252
        %v1552 = vsel %vm1431, %v1520, %v1254
        %v1553 = vsel %vm1431, %v1521, %v1256
        %v1554 = vsel %vm1431, %v1522, %v1258
        %v1555 = vsel %vm1431, %v1523, %v1260
        %v1556 = vsel %vm1431, %v1524, %v1262
        %v1557 = vsel %vm1431, %v1525, %v1264
        %v1558 = vsel %vm1431, %v1526, %v1266
        %v1559 = vsel %vm1431, %v1527, %v1268
        %v1560 = vsel %vm1431, %v1528, %v1270
        %v1561 = vsel %vm1464, %v1529, %v1304
        %v1562 = vsel %vm1464, %v1530, %v1306
        %v1563 = vsel %vm1464, %v1531, %v1308
        %v1564 = vsel %vm1464, %v1532, %v1310
        %v1565 = vsel %vm1464, %v1533, %v1312
        %v1566 = vsel %vm1464, %v1534, %v1314
        %v1567 = vsel %vm1464, %v1535, %v1316
        %v1568 = vsel %vm1464, %v1536, %v1318
        %v1569 = vsel %vm1464, %v1537, %v1320
        %v1570 = vsel %vm1464, %v1538, %v1322
        %v1571 = vsel %vm1464, %v1539, %v1324
        %v1572 = vsel %vm1464, %v1540, %v1326
        %v1573 = vsel %vm1464, %v1541, %v1328
        %v1574 = vsel %vm1464, %v1542, %v1330
        %v1575 = vsel %vm1464, %v1543, %v1332
        %v1576 = vsel %vm1464, %v1544, %v1334
        %v1577 = vsel %vm1464, %v1545, %v1336
        %v1578 = vsel %vm1464, %v1546, %v1338
        %v1579 = vsel %vm1464, %v1547, %v1340
        %v1580 = vsel %vm1464, %v1548, %v1342
        %v1581 = vsel %vm1464, %v1549, %v1344
        %v1582 = vsel %vm1464, %v1550, %v1346
        %v1583 = vsel %vm1464, %v1551, %v1348
        %v1584 = vsel %vm1464, %v1552, %v1350
        %v1585 = vsel %vm1464, %v1553, %v1352
        %v1586 = vsel %vm1464, %v1554, %v1354
        %v1587 = vsel %vm1464, %v1555, %v1356
        %v1588 = vsel %vm1464, %v1556, %v1358
        %v1589 = vsel %vm1464, %v1557, %v1360
        %v1590 = vsel %vm1464, %v1558, %v1362
        %v1591 = vsel %vm1464, %v1559, %v1364
        %v1592 = vsel %vm1464, %v1560, %v1366
        %v1593 = vld [vmem:[#allocation6] sm:$0xff]
        %v1594 = vld [vmem:[#allocation6 + $0x8] sm:$0xff]
        %v1595 = vld [vmem:[#allocation6 + $0x10] sm:$0xff]
        %v1596 = vld [vmem:[#allocation6 + $0x18] sm:$0xff]
        %v1597 = vld [vmem:[#allocation6 + $0x20] sm:$0xff]
        %v1598 = vld [vmem:[#allocation6 + $0x28] sm:$0xff]
        %v1599 = vld [vmem:[#allocation6 + $0x30] sm:$0xff]
        %v1600 = vld [vmem:[#allocation6 + $0x38] sm:$0xff]
        %v1601 = vld [vmem:[#allocation6 + $0x40] sm:$0xff]
        %v1602 = vld [vmem:[#allocation6 + $0x48] sm:$0xff]
        %v1603 = vld [vmem:[#allocation6 + $0x50] sm:$0xff]
        %v1604 = vld [vmem:[#allocation6 + $0x58] sm:$0xff]
        %v1605 = vld [vmem:[#allocation6 + $0x60] sm:$0xff]
        %v1606 = vld [vmem:[#allocation6 + $0x68] sm:$0xff]
        %v1607 = vld [vmem:[#allocation6 + $0x70] sm:$0xff]
        %v1608 = vld [vmem:[#allocation6 + $0x78] sm:$0xff]
        %v1609 = vld [vmem:[#allocation6 + $0x80] sm:$0xff]
        %v1610 = vld [vmem:[#allocation6 + $0x88] sm:$0xff]
        %v1611 = vld [vmem:[#allocation6 + $0x90] sm:$0xff]
        %v1612 = vld [vmem:[#allocation6 + $0x98] sm:$0xff]
        %v1613 = vld [vmem:[#allocation6 + $0xa0] sm:$0xff]
        %v1614 = vld [vmem:[#allocation6 + $0xa8] sm:$0xff]
        %v1615 = vld [vmem:[#allocation6 + $0xb0] sm:$0xff]
        %v1616 = vld [vmem:[#allocation6 + $0xb8] sm:$0xff]
        %v1617 = vld [vmem:[#allocation6 + $0xc0] sm:$0xff]
        %v1618 = vld [vmem:[#allocation6 + $0xc8] sm:$0xff]
        %v1619 = vld [vmem:[#allocation6 + $0xd0] sm:$0xff]
        %v1620 = vld [vmem:[#allocation6 + $0xd8] sm:$0xff]
        %v1621 = vld [vmem:[#allocation6 + $0xe0] sm:$0xff]
        %v1622 = vld [vmem:[#allocation6 + $0xe8] sm:$0xff]
        %v1623 = vld [vmem:[#allocation6 + $0xf0] sm:$0xff]
        %v1624 = vld [vmem:[#allocation6 + $0xf8] sm:$0xff]
        %v1625 = vld [vmem:[#allocation6 + $0x100] sm:$0xff]
        %v1626 = vld [vmem:[#allocation6 + $0x108] sm:$0xff]
        %v1627 = vld [vmem:[#allocation6 + $0x110] sm:$0xff]
        %v1628 = vld [vmem:[#allocation6 + $0x118] sm:$0xff]
        %v1629 = vld [vmem:[%s2] sm:$0x1]
        %v1631 = vlaneseq
        %v1632 = vshrl.u32 %v1631, 7
        %v1633 = vsub.s32 0, %v1632
        %v1634 = vrot.slane %v1629, %v1633
        %v1636 = vsel %vm412, %v697, 0
        %v1638 = vsel %vm412, %v699, 0
        %v1640 = vsel %vm412, %v702, 0
        %v1642 = vsel %vm412, %v704, 0
        %v1644 = vsel %vm412, %v707, 0
        %v1646 = vsel %vm412, %v709, 0
        %v1648 = vsel %vm412, %v712, 0
        %v1650 = vsel %vm412, %v714, 0
        %v1652 = vsel %vm412, %v717, 0
        %v1654 = vsel %vm412, %v719, 0
        %v1656 = vsel %vm412, %v722, 0
        %v1658 = vsel %vm412, %v724, 0
        %v1660 = vsel %vm412, %v727, 0
        %v1662 = vsel %vm412, %v729, 0
        %v1664 = vsel %vm412, %v732, 0
        %v1666 = vsel %vm412, %v734, 0
        %v1668 = vsel %vm412, %v737, 0
        %v1670 = vsel %vm412, %v739, 0
        %v1672 = vsel %vm412, %v742, 0
        %v1674 = vsel %vm412, %v744, 0
        %v1676 = vsel %vm412, %v747, 0
        %v1678 = vsel %vm412, %v749, 0
        %v1680 = vsel %vm412, %v752, 0
        %v1682 = vsel %vm412, %v754, 0
        %v1684 = vsel %vm412, %v757, 0
        %v1686 = vsel %vm412, %v759, 0
        %v1688 = vsel %vm412, %v762, 0
        %v1690 = vsel %vm412, %v764, 0
        %v1692 = vsel %vm412, %v807, 0
        %v1694 = vsel %vm412, %v809, 0
        %v1696 = vsel %vm412, %v820, 0
        %v1698 = vsel %vm412, %v822, 0
        %1700 = vmatprep.subr.mxu0 0.0
        %1701 = vmatpush1.msra.mxu0 %v1593
        %1702 = vmatprep.subr.mxu0 0.0
        %1703 = vmatpush1.msra.mxu0 %v1594
        %1704 = vmatprep.subr.mxu0 0.0
        %1705 = vmatpush1.msra.mxu0 %v1595
        %1706 = vmatprep.subr.mxu0 0.0
        %1707 = vmatpush1.msra.mxu0 %v1596
        %1708 = vmatprep.subr.mxu0 0.0
        %1709 = vmatpush1.msra.mxu0 %v1597
        %1710 = vmatprep.subr.mxu0 0.0
        %1711 = vmatpush1.msra.mxu0 %v1598
        %1712 = vmatprep.subr.mxu0 0.0
        %1713 = vmatpush1.msra.mxu0 %v1599
        %1714 = vmatprep.subr.mxu0 0.0
        %1715 = vmatpush1.msra.mxu0 %v1600
        %1716 = vmatprep.subr.mxu0 0.0
        %1717 = vmatpush1.msra.mxu0 %v1601
        %1718 = vmatprep.subr.mxu0 0.0
        %1719 = vmatpush1.msra.mxu0 %v1602
        %1720 = vmatprep.subr.mxu0 0.0
        %1721 = vmatpush1.msra.mxu0 %v1603
        %1722 = vmatprep.subr.mxu0 0.0
        %1723 = vmatpush1.msra.mxu0 %v1604
        %1724 = vmatprep.subr.mxu0 0.0
        %1725 = vmatpush1.msra.mxu0 %v1605
        %1726 = vmatprep.subr.mxu0 0.0
        %1727 = vmatpush1.msra.mxu0 %v1606
        %1728 = vmatprep.subr.mxu0 0.0
        %1729 = vmatpush1.msra.mxu0 %v1607
        %1730 = vmatprep.subr.mxu0 0.0
        %1731 = vmatpush1.msra.mxu0 %v1608
        %1732 = vmatprep.subr.mxu0 0.0
        %1733 = vmatpush1.msra.mxu0 %v1609
        %1734 = vmatprep.subr.mxu0 0.0
        %1735 = vmatpush1.msra.mxu0 %v1610
        %1736 = vmatprep.subr.mxu0 0.0
        %1737 = vmatpush1.msra.mxu0 %v1611
        %1738 = vmatprep.subr.mxu0 0.0
        %1739 = vmatpush1.msra.mxu0 %v1612
        %1740 = vmatprep.subr.mxu0 0.0
        %1741 = vmatpush1.msra.mxu0 %v1613
        %1742 = vmatprep.subr.mxu0 0.0
        %1743 = vmatpush1.msra.mxu0 %v1614
        %1744 = vmatprep.subr.mxu0 0.0
        %1745 = vmatpush1.msra.mxu0 %v1615
        %1746 = vmatprep.subr.mxu0 0.0
        %1747 = vmatpush1.msra.mxu0 %v1616
        %1748 = vmatprep.subr.mxu0 0.0
        %1749 = vmatpush1.msra.mxu0 %v1617
        %1750 = vmatprep.subr.mxu0 0.0
        %1751 = vmatpush1.msra.mxu0 %v1618
        %1752 = vmatprep.subr.mxu0 0.0
        %1753 = vmatpush1.msra.mxu0 %v1619
        %1754 = vmatprep.subr.mxu0 0.0
        %1755 = vmatpush1.msra.mxu0 %v1620
        %1756 = vmatprep.subr.mxu0 0.0
        %1757 = vmatpush1.msra.mxu0 %v1621
        %1758 = vmatprep.subr.mxu0 0.0
        %1759 = vmatpush1.msra.mxu0 %v1622
        %1760 = vmatprep.subr.mxu0 0.0
        %1761 = vmatpush1.msra.mxu0 %v1623
        %1762 = vmatprep.subr.mxu0 0.0
        %1763 = vmatpush1.msra.mxu0 %v1624
        %1764 = vmatprep.mubr.f32.mxu0 %v1561
        %1765 = vmatmul.mubr.f32.gmra.mrb[0].mxu0 %v1465
        %v1766 = vpop.f32.mrb[0].mxu0
        %v1767 = vadd.f32 %v1634, %v1766
        %v1768 = vpop.f32.mrb[0].mxu0
        %1769 = vmatprep.mubr.f32.mxu0 %v1562
        %1770 = vmatmul.mubr.f32.gmra.mrb[0].mxu0 %v1466
        %v1771 = vpop.f32.mrb[0].mxu0
        %v1772 = vadd.f32 %v1634, %v1771
        %v1773 = vpop.f32.mrb[0].mxu0
        %1774 = vmatprep.mubr.f32.mxu0 %v1563
        %1775 = vmatmul.mubr.f32.gmra.mrb[0].mxu0 %v1467
        %v1776 = vpop.f32.mrb[0].mxu0
        %v1777 = vadd.f32 %v1634, %v1776
        %v1778 = vpop.f32.mrb[0].mxu0
        %1779 = vmatprep.mubr.f32.mxu0 %v1564
        %1780 = vmatmul.mubr.f32.gmra.mrb[0].mxu0 %v1468
        %v1781 = vpop.f32.mrb[0].mxu0
        %v1782 = vadd.f32 %v1634, %v1781
        %v1783 = vpop.f32.mrb[0].mxu0
        %1784 = vmatprep.mubr.f32.mxu0 %v1565
        %1785 = vmatmul.mubr.f32.gmra.mrb[0].mxu0 %v1469
        %v1786 = vpop.f32.mrb[0].mxu0
        %v1787 = vadd.f32 %v1634, %v1786
        %v1788 = vpop.f32.mrb[0].mxu0
        %1789 = vmatprep.mubr.f32.mxu0 %v1566
        %1790 = vmatmul.mubr.f32.gmra.mrb[0].mxu0 %v1470
        %v1791 = vpop.f32.mrb[0].mxu0
        %v1792 = vadd.f32 %v1634, %v1791
        %v1793 = vpop.f32.mrb[0].mxu0
        %1794 = vmatprep.mubr.f32.mxu0 %v1567
        %1795 = vmatmul.mubr.f32.gmra.mrb[0].mxu0 %v1471
        %v1796 = vpop.f32.mrb[0].mxu0
        %v1797 = vadd.f32 %v1634, %v1796
        %v1798 = vpop.f32.mrb[0].mxu0
        %1799 = vmatprep.mubr.f32.mxu0 %v1568
        %1800 = vmatmul.mubr.f32.gmra.mrb[0].mxu0 %v1472
        %v1801 = vpop.f32.mrb[0].mxu0
        %v1802 = vadd.f32 %v1634, %v1801
        %v1803 = vpop.f32.mrb[0].mxu0
        %1804 = vmatprep.mubr.f32.mxu0 %v1569
        %1805 = vmatmul.mubr.f32.gmra.mrb[0].mxu0 %v1473
        %v1806 = vpop.f32.mrb[0].mxu0
        %v1807 = vadd.f32 %v1634, %v1806
        %v1808 = vpop.f32.mrb[0].mxu0
        %1809 = vmatprep.mubr.f32.mxu0 %v1570
        %1810 = vmatmul.mubr.f32.gmra.mrb[0].mxu0 %v1474
        %v1811 = vpop.f32.mrb[0].mxu0
        %v1812 = vadd.f32 %v1634, %v1811
        %v1813 = vpop.f32.mrb[0].mxu0
        %1814 = vmatprep.mubr.f32.mxu0 %v1571
        %1815 = vmatmul.mubr.f32.gmra.mrb[0].mxu0 %v1475
        %v1816 = vpop.f32.mrb[0].mxu0
        %v1817 = vadd.f32 %v1634, %v1816
        %v1818 = vpop.f32.mrb[0].mxu0
        %1819 = vmatprep.mubr.f32.mxu0 %v1572
        %1820 = vmatmul.mubr.f32.gmra.mrb[0].mxu0 %v1476
        %v1821 = vpop.f32.mrb[0].mxu0
        %v1822 = vadd.f32 %v1634, %v1821
        %v1823 = vpop.f32.mrb[0].mxu0
        %1824 = vmatprep.mubr.f32.mxu0 %v1573
        %1825 = vmatmul.mubr.f32.gmra.mrb[0].mxu0 %v1477
        %v1826 = vpop.f32.mrb[0].mxu0
        %v1827 = vadd.f32 %v1634, %v1826
        %v1828 = vpop.f32.mrb[0].mxu0
        %1829 = vmatprep.mubr.f32.mxu0 %v1574
        %1830 = vmatmul.mubr.f32.gmra.mrb[0].mxu0 %v1478
        %v1831 = vpop.f32.mrb[0].mxu0
        %v1832 = vadd.f32 %v1634, %v1831
        %v1833 = vpop.f32.mrb[0].mxu0
        %1834 = vmatprep.mubr.f32.mxu0 %v1575
        %1835 = vmatmul.mubr.f32.gmra.mrb[0].mxu0 %v1479
        %v1836 = vpop.f32.mrb[0].mxu0
        %v1837 = vadd.f32 %v1634, %v1836
        %v1838 = vpop.f32.mrb[0].mxu0
        %1839 = vmatprep.mubr.f32.mxu0 %v1576
        %1840 = vmatmul.mubr.f32.gmra.mrb[0].mxu0 %v1480
        %v1841 = vpop.f32.mrb[0].mxu0
        %v1842 = vadd.f32 %v1634, %v1841
        %v1843 = vpop.f32.mrb[0].mxu0
        %1844 = vmatprep.mubr.f32.mxu0 %v1577
        %1845 = vmatmul.mubr.f32.gmra.mrb[0].mxu0 %v1481
        %v1846 = vpop.f32.mrb[0].mxu0
        %v1847 = vadd.f32 %v1634, %v1846
        %v1848 = vpop.f32.mrb[0].mxu0
        %1849 = vmatprep.mubr.f32.mxu0 %v1578
        %1850 = vmatmul.mubr.f32.gmra.mrb[0].mxu0 %v1482
        %v1851 = vpop.f32.mrb[0].mxu0
        %v1852 = vadd.f32 %v1634, %v1851
        %v1853 = vpop.f32.mrb[0].mxu0
        %1854 = vmatprep.mubr.f32.mxu0 %v1579
        %1855 = vmatmul.mubr.f32.gmra.mrb[0].mxu0 %v1483
        %v1856 = vpop.f32.mrb[0].mxu0
        %v1857 = vadd.f32 %v1634, %v1856
        %v1858 = vpop.f32.mrb[0].mxu0
        %1859 = vmatprep.mubr.f32.mxu0 %v1580
        %1860 = vmatmul.mubr.f32.gmra.mrb[0].mxu0 %v1484
        %v1861 = vpop.f32.mrb[0].mxu0
        %v1862 = vadd.f32 %v1634, %v1861
        %v1863 = vpop.f32.mrb[0].mxu0
        %1864 = vmatprep.mubr.f32.mxu0 %v1581
        %1865 = vmatmul.mubr.f32.gmra.mrb[0].mxu0 %v1485
        %v1866 = vpop.f32.mrb[0].mxu0
        %v1867 = vadd.f32 %v1634, %v1866
        %v1868 = vpop.f32.mrb[0].mxu0
        %1869 = vmatprep.mubr.f32.mxu0 %v1582
        %1870 = vmatmul.mubr.f32.gmra.mrb[0].mxu0 %v1486
        %v1871 = vpop.f32.mrb[0].mxu0
        %v1872 = vadd.f32 %v1634, %v1871
        %v1873 = vpop.f32.mrb[0].mxu0
        %1874 = vmatprep.mubr.f32.mxu0 %v1583
        %1875 = vmatmul.mubr.f32.gmra.mrb[0].mxu0 %v1487
        %v1876 = vpop.f32.mrb[0].mxu0
        %v1877 = vadd.f32 %v1634, %v1876
        %v1878 = vpop.f32.mrb[0].mxu0
        %1879 = vmatprep.mubr.f32.mxu0 %v1584
        %1880 = vmatmul.mubr.f32.gmra.mrb[0].mxu0 %v1488
        %v1881 = vpop.f32.mrb[0].mxu0
        %v1882 = vadd.f32 %v1634, %v1881
        %v1883 = vpop.f32.mrb[0].mxu0
        %1884 = vmatprep.mubr.f32.mxu0 %v1585
        %1885 = vmatmul.mubr.f32.gmra.mrb[0].mxu0 %v1489
        %v1886 = vpop.f32.mrb[0].mxu0
        %v1887 = vadd.f32 %v1634, %v1886
        %v1888 = vpop.f32.mrb[0].mxu0
        %1889 = vmatprep.mubr.f32.mxu0 %v1586
        %1890 = vmatmul.mubr.f32.gmra.mrb[0].mxu0 %v1490
        %v1891 = vpop.f32.mrb[0].mxu0
        %v1892 = vadd.f32 %v1634, %v1891
        %v1893 = vpop.f32.mrb[0].mxu0
        %1894 = vmatprep.mubr.f32.mxu0 %v1587
        %1895 = vmatmul.mubr.f32.gmra.mrb[0].mxu0 %v1491
        %v1896 = vpop.f32.mrb[0].mxu0
        %v1897 = vadd.f32 %v1634, %v1896
        %v1898 = vpop.f32.mrb[0].mxu0
        %1899 = vmatprep.mubr.f32.mxu0 %v1588
        %1900 = vmatmul.mubr.f32.gmra.mrb[0].mxu0 %v1492
        %v1901 = vpop.f32.mrb[0].mxu0
        %v1902 = vadd.f32 %v1634, %v1901
        %v1903 = vpop.f32.mrb[0].mxu0
        %1904 = vmatprep.mubr.f32.mxu0 %v1589
        %1905 = vmatmul.mubr.f32.gmra.mrb[0].mxu0 %v1493
        %v1906 = vpop.f32.mrb[0].mxu0
        %v1907 = vadd.f32 %v1634, %v1906
        %v1908 = vpop.f32.mrb[0].mxu0
        %1909 = vmatprep.mubr.f32.mxu0 %v1590
        %1910 = vmatmul.mubr.f32.gmra.mrb[0].mxu0 %v1494
        %v1911 = vpop.f32.mrb[0].mxu0
        %v1912 = vadd.f32 %v1634, %v1911
        %v1913 = vpop.f32.mrb[0].mxu0
        %1914 = vmatprep.mubr.f32.mxu0 %v1591
        %1915 = vmatmul.mubr.f32.gmra.mrb[0].mxu0 %v1495
        %v1916 = vpop.f32.mrb[0].mxu0
        %v1917 = vadd.f32 %v1634, %v1916
        %v1918 = vpop.f32.mrb[0].mxu0
        %1919 = vmatprep.mubr.f32.mxu0 %v1592
        %1920 = vmatmul.mubr.f32.gmra.mrb[0].mxu0 %v1496
        %v1921 = vpop.f32.mrb[0].mxu0
        %v1922 = vadd.f32 %v1634, %v1921
        %v1923 = vpop.f32.mrb[0].mxu0
        %1924 = vdwg.mxu0
        %1925 = vmatprep.subr.mxu0 0.0
        %1926 = vmatpush1.msra.mxu0 %v1625
        %1927 = vmatprep.subr.mxu0 0.0
        %1928 = vmatpush1.msra.mxu0 %v1626
        %1929 = vmatprep.subr.mxu0 0.0
        %1930 = vmatpush1.msra.mxu0 %v1627
        %1931 = vmatprep.subr.mxu0 0.0
        %1932 = vmatpush1.msra.mxu0 %v1628
        %1933 = vmatprep.subr.mxu0 0.0
        %1934 = vmatpush1.msra.mxu0 0.0
        %1935 = vmatprep.subr.mxu0 0.0
        %1936 = vmatpush1.msra.mxu0 0.0
        %1937 = vmatprep.subr.mxu0 0.0
        %1938 = vmatpush1.msra.mxu0 0.0
        %1939 = vmatprep.subr.mxu0 0.0
        %1940 = vmatpush1.msra.mxu0 0.0
        %1941 = vmatprep.subr.mxu0 0.0
        %1942 = vmatpush1.msra.mxu0 0.0
        %1943 = vmatprep.subr.mxu0 0.0
        %1944 = vmatpush1.msra.mxu0 0.0
        %1945 = vmatprep.subr.mxu0 0.0
        %1946 = vmatpush1.msra.mxu0 0.0
        %1947 = vmatprep.subr.mxu0 0.0
        %1948 = vmatpush1.msra.mxu0 0.0
        %1949 = vmatprep.subr.mxu0 0.0
        %1950 = vmatpush1.msra.mxu0 0.0
        %1951 = vmatprep.subr.mxu0 0.0
        %1952 = vmatpush1.msra.mxu0 0.0
        %1953 = vmatprep.subr.mxu0 0.0
        %1954 = vmatpush1.msra.mxu0 0.0
        %1955 = vmatprep.subr.mxu0 0.0
        %1956 = vmatpush1.msra.mxu0 0.0
        %1957 = vmatprep.subr.mxu0 0.0
        %1958 = vmatpush1.msra.mxu0 0.0
        %1959 = vmatprep.subr.mxu0 0.0
        %1960 = vmatpush1.msra.mxu0 0.0
        %1961 = vmatprep.subr.mxu0 0.0
        %1962 = vmatpush1.msra.mxu0 0.0
        %1963 = vmatprep.subr.mxu0 0.0
        %1964 = vmatpush1.msra.mxu0 0.0
        %1965 = vmatprep.subr.mxu0 0.0
        %1966 = vmatpush1.msra.mxu0 0.0
        %1967 = vmatprep.subr.mxu0 0.0
        %1968 = vmatpush1.msra.mxu0 0.0
        %1969 = vmatprep.subr.mxu0 0.0
        %1970 = vmatpush1.msra.mxu0 0.0
        %1971 = vmatprep.subr.mxu0 0.0
        %1972 = vmatpush1.msra.mxu0 0.0
        %1973 = vmatprep.subr.mxu0 0.0
        %1974 = vmatpush1.msra.mxu0 0.0
        %1975 = vmatprep.subr.mxu0 0.0
        %1976 = vmatpush1.msra.mxu0 0.0
        %1977 = vmatprep.subr.mxu0 0.0
        %1978 = vmatpush1.msra.mxu0 0.0
        %1979 = vmatprep.subr.mxu0 0.0
        %1980 = vmatpush1.msra.mxu0 0.0
        %1981 = vmatprep.subr.mxu0 0.0
        %1982 = vmatpush1.msra.mxu0 0.0
        %1983 = vmatprep.subr.mxu0 0.0
        %1984 = vmatpush1.msra.mxu0 0.0
        %1985 = vmatprep.subr.mxu0 0.0
        %1986 = vmatpush1.msra.mxu0 0.0
        %1987 = vmatprep.subr.mxu0 0.0
        %1988 = vmatpush1.msra.mxu0 0.0
        %1989 = vmatprep.mubr.f32.mxu0 0.0
        %1990 = vmatmul.mubr.f32.gmra.mrb[0].mxu0 %v1636
        %v1991 = vpop.f32.mrb[0].mxu0
        %v1992 = vadd.f32 %v1767, %v1991
        %v1993 = vpop.f32.mrb[0].mxu0
        %1994 = vmatprep.mubr.f32.mxu0 0.0
        %1995 = vmatmul.mubr.f32.gmra.mrb[0].mxu0 %v1638
        %v1996 = vpop.f32.mrb[0].mxu0
        %v1997 = vadd.f32 %v1772, %v1996
        %v1998 = vpop.f32.mrb[0].mxu0
        %1999 = vmatprep.mubr.f32.mxu0 0.0
        %2000 = vmatmul.mubr.f32.gmra.mrb[0].mxu0 %v1640
        %v2001 = vpop.f32.mrb[0].mxu0
        %v2002 = vadd.f32 %v1777, %v2001
        %v2003 = vpop.f32.mrb[0].mxu0
        %2004 = vmatprep.mubr.f32.mxu0 0.0
        %2005 = vmatmul.mubr.f32.gmra.mrb[0].mxu0 %v1642
        %v2006 = vpop.f32.mrb[0].mxu0
        %v2007 = vadd.f32 %v1782, %v2006
        %v2008 = vpop.f32.mrb[0].mxu0
        %2009 = vmatprep.mubr.f32.mxu0 0.0
        %2010 = vmatmul.mubr.f32.gmra.mrb[0].mxu0 %v1644
        %v2011 = vpop.f32.mrb[0].mxu0
        %v2012 = vadd.f32 %v1787, %v2011
        %v2013 = vpop.f32.mrb[0].mxu0
        %2014 = vmatprep.mubr.f32.mxu0 0.0
        %2015 = vmatmul.mubr.f32.gmra.mrb[0].mxu0 %v1646
        %v2016 = vpop.f32.mrb[0].mxu0
        %v2017 = vadd.f32 %v1792, %v2016
        %v2018 = vpop.f32.mrb[0].mxu0
        %2019 = vmatprep.mubr.f32.mxu0 0.0
        %2020 = vmatmul.mubr.f32.gmra.mrb[0].mxu0 %v1648
        %v2021 = vpop.f32.mrb[0].mxu0
        %v2022 = vadd.f32 %v1797, %v2021
        %v2023 = vpop.f32.mrb[0].mxu0
        %2024 = vmatprep.mubr.f32.mxu0 0.0
        %2025 = vmatmul.mubr.f32.gmra.mrb[0].mxu0 %v1650
        %v2026 = vpop.f32.mrb[0].mxu0
        %v2027 = vadd.f32 %v1802, %v2026
        %v2028 = vpop.f32.mrb[0].mxu0
        %2029 = vmatprep.mubr.f32.mxu0 0.0
        %2030 = vmatmul.mubr.f32.gmra.mrb[0].mxu0 %v1652
        %v2031 = vpop.f32.mrb[0].mxu0
        %v2032 = vadd.f32 %v1807, %v2031
        %v2033 = vpop.f32.mrb[0].mxu0
        %2034 = vmatprep.mubr.f32.mxu0 0.0
        %2035 = vmatmul.mubr.f32.gmra.mrb[0].mxu0 %v1654
        %v2036 = vpop.f32.mrb[0].mxu0
        %v2037 = vadd.f32 %v1812, %v2036
        %v2038 = vpop.f32.mrb[0].mxu0
        %2039 = vmatprep.mubr.f32.mxu0 0.0
        %2040 = vmatmul.mubr.f32.gmra.mrb[0].mxu0 %v1656
        %v2041 = vpop.f32.mrb[0].mxu0
        %v2042 = vadd.f32 %v1817, %v2041
        %v2043 = vpop.f32.mrb[0].mxu0
        %2044 = vmatprep.mubr.f32.mxu0 0.0
        %2045 = vmatmul.mubr.f32.gmra.mrb[0].mxu0 %v1658
        %v2046 = vpop.f32.mrb[0].mxu0
        %v2047 = vadd.f32 %v1822, %v2046
        %v2048 = vpop.f32.mrb[0].mxu0
        %2049 = vmatprep.mubr.f32.mxu0 0.0
        %2050 = vmatmul.mubr.f32.gmra.mrb[0].mxu0 %v1660
        %v2051 = vpop.f32.mrb[0].mxu0
        %v2052 = vadd.f32 %v1827, %v2051
        %v2053 = vpop.f32.mrb[0].mxu0
        %2054 = vmatprep.mubr.f32.mxu0 0.0
        %2055 = vmatmul.mubr.f32.gmra.mrb[0].mxu0 %v1662
        %v2056 = vpop.f32.mrb[0].mxu0
        %v2057 = vadd.f32 %v1832, %v2056
        %v2058 = vpop.f32.mrb[0].mxu0
        %2059 = vmatprep.mubr.f32.mxu0 0.0
        %2060 = vmatmul.mubr.f32.gmra.mrb[0].mxu0 %v1664
        %v2061 = vpop.f32.mrb[0].mxu0
        %v2062 = vadd.f32 %v1837, %v2061
        %v2063 = vpop.f32.mrb[0].mxu0
        %2064 = vmatprep.mubr.f32.mxu0 0.0
        %2065 = vmatmul.mubr.f32.gmra.mrb[0].mxu0 %v1666
        %v2066 = vpop.f32.mrb[0].mxu0
        %v2067 = vadd.f32 %v1842, %v2066
        %v2068 = vpop.f32.mrb[0].mxu0
        %2069 = vmatprep.mubr.f32.mxu0 0.0
        %2070 = vmatmul.mubr.f32.gmra.mrb[0].mxu0 %v1668
        %v2071 = vpop.f32.mrb[0].mxu0
        %v2072 = vadd.f32 %v1847, %v2071
        %v2073 = vpop.f32.mrb[0].mxu0
        %2074 = vmatprep.mubr.f32.mxu0 0.0
        %2075 = vmatmul.mubr.f32.gmra.mrb[0].mxu0 %v1670
        %v2076 = vpop.f32.mrb[0].mxu0
        %v2077 = vadd.f32 %v1852, %v2076
        %v2078 = vpop.f32.mrb[0].mxu0
        %2079 = vmatprep.mubr.f32.mxu0 0.0
        %2080 = vmatmul.mubr.f32.gmra.mrb[0].mxu0 %v1672
        %v2081 = vpop.f32.mrb[0].mxu0
        %v2082 = vadd.f32 %v1857, %v2081
        %v2083 = vpop.f32.mrb[0].mxu0
        %2084 = vmatprep.mubr.f32.mxu0 0.0
        %2085 = vmatmul.mubr.f32.gmra.mrb[0].mxu0 %v1674
        %v2086 = vpop.f32.mrb[0].mxu0
        %v2087 = vadd.f32 %v1862, %v2086
        %v2088 = vpop.f32.mrb[0].mxu0
        %2089 = vmatprep.mubr.f32.mxu0 0.0
        %2090 = vmatmul.mubr.f32.gmra.mrb[0].mxu0 %v1676
        %v2091 = vpop.f32.mrb[0].mxu0
        %v2092 = vadd.f32 %v1867, %v2091
        %v2093 = vpop.f32.mrb[0].mxu0
        %2094 = vmatprep.mubr.f32.mxu0 0.0
        %2095 = vmatmul.mubr.f32.gmra.mrb[0].mxu0 %v1678
        %v2096 = vpop.f32.mrb[0].mxu0
        %v2097 = vadd.f32 %v1872, %v2096
        %v2098 = vpop.f32.mrb[0].mxu0
        %2099 = vmatprep.mubr.f32.mxu0 0.0
        %2100 = vmatmul.mubr.f32.gmra.mrb[0].mxu0 %v1680
        %v2101 = vpop.f32.mrb[0].mxu0
        %v2102 = vadd.f32 %v1877, %v2101
        %v2103 = vpop.f32.mrb[0].mxu0
        %2104 = vmatprep.mubr.f32.mxu0 0.0
        %2105 = vmatmul.mubr.f32.gmra.mrb[0].mxu0 %v1682
        %v2106 = vpop.f32.mrb[0].mxu0
        %v2107 = vadd.f32 %v1882, %v2106
        %v2108 = vpop.f32.mrb[0].mxu0
        %2109 = vmatprep.mubr.f32.mxu0 0.0
        %2110 = vmatmul.mubr.f32.gmra.mrb[0].mxu0 %v1684
        %v2111 = vpop.f32.mrb[0].mxu0
        %v2112 = vadd.f32 %v1887, %v2111
        %v2113 = vpop.f32.mrb[0].mxu0
        %2114 = vmatprep.mubr.f32.mxu0 0.0
        %2115 = vmatmul.mubr.f32.gmra.mrb[0].mxu0 %v1686
        %v2116 = vpop.f32.mrb[0].mxu0
        %v2117 = vadd.f32 %v1892, %v2116
        %v2118 = vpop.f32.mrb[0].mxu0
        %2119 = vmatprep.mubr.f32.mxu0 0.0
        %2120 = vmatmul.mubr.f32.gmra.mrb[0].mxu0 %v1688
        %v2121 = vpop.f32.mrb[0].mxu0
        %v2122 = vadd.f32 %v1897, %v2121
        %v2123 = vpop.f32.mrb[0].mxu0
        %2124 = vmatprep.mubr.f32.mxu0 0.0
        %2125 = vmatmul.mubr.f32.gmra.mrb[0].mxu0 %v1690
        %v2126 = vpop.f32.mrb[0].mxu0
        %v2127 = vadd.f32 %v1902, %v2126
        %v2128 = vpop.f32.mrb[0].mxu0
        %2129 = vmatprep.mubr.f32.mxu0 0.0
        %2130 = vmatmul.mubr.f32.gmra.mrb[0].mxu0 %v1692
        %v2131 = vpop.f32.mrb[0].mxu0
        %v2132 = vadd.f32 %v1907, %v2131
        %v2133 = vpop.f32.mrb[0].mxu0
        %2134 = vmatprep.mubr.f32.mxu0 0.0
        %2135 = vmatmul.mubr.f32.gmra.mrb[0].mxu0 %v1694
        %v2136 = vpop.f32.mrb[0].mxu0
        %v2137 = vadd.f32 %v1912, %v2136
        %v2138 = vpop.f32.mrb[0].mxu0
        %2139 = vmatprep.mubr.f32.mxu0 0.0
        %2140 = vmatmul.mubr.f32.gmra.mrb[0].mxu0 %v1696
        %v2141 = vpop.f32.mrb[0].mxu0
        %v2142 = vadd.f32 %v1917, %v2141
        %v2143 = vpop.f32.mrb[0].mxu0
        %2144 = vmatprep.mubr.f32.mxu0 0.0
        %2145 = vmatmul.mubr.f32.gmra.mrb[0].mxu0 %v1698
        %v2146 = vpop.f32.mrb[0].mxu0
        %v2147 = vadd.f32 %v1922, %v2146
        %v2148 = vpop.f32.mrb[0].mxu0
        %2149 = vdwg.mxu0
        %vm2150 = vcmp.gt.f32.partialorder %v1992, 0.0
        %vm2151 = vcmp.gt.f32.partialorder %v1997, 0.0
        %vm2152 = vcmp.gt.f32.partialorder %v2002, 0.0
        %vm2153 = vcmp.gt.f32.partialorder %v2007, 0.0
        %vm2154 = vcmp.gt.f32.partialorder %v2012, 0.0
        %vm2155 = vcmp.gt.f32.partialorder %v2017, 0.0
        %vm2156 = vcmp.gt.f32.partialorder %v2022, 0.0
        %vm2157 = vcmp.gt.f32.partialorder %v2027, 0.0
        %vm2158 = vcmp.gt.f32.partialorder %v2032, 0.0
        %vm2159 = vcmp.gt.f32.partialorder %v2037, 0.0
        %vm2160 = vcmp.gt.f32.partialorder %v2042, 0.0
        %vm2161 = vcmp.gt.f32.partialorder %v2047, 0.0
        %vm2162 = vcmp.gt.f32.partialorder %v2052, 0.0
        %vm2163 = vcmp.gt.f32.partialorder %v2057, 0.0
        %vm2164 = vcmp.gt.f32.partialorder %v2062, 0.0
        %vm2165 = vcmp.gt.f32.partialorder %v2067, 0.0
        %vm2166 = vcmp.gt.f32.partialorder %v2072, 0.0
        %vm2167 = vcmp.gt.f32.partialorder %v2077, 0.0
        %vm2168 = vcmp.gt.f32.partialorder %v2082, 0.0
        %vm2169 = vcmp.gt.f32.partialorder %v2087, 0.0
        %vm2170 = vcmp.gt.f32.partialorder %v2092, 0.0
        %vm2171 = vcmp.gt.f32.partialorder %v2097, 0.0
        %vm2172 = vcmp.gt.f32.partialorder %v2102, 0.0
        %vm2173 = vcmp.gt.f32.partialorder %v2107, 0.0
        %vm2174 = vcmp.gt.f32.partialorder %v2112, 0.0
        %vm2175 = vcmp.gt.f32.partialorder %v2117, 0.0
        %vm2176 = vcmp.gt.f32.partialorder %v2122, 0.0
        %vm2177 = vcmp.gt.f32.partialorder %v2127, 0.0
        %vm2178 = vcmp.gt.f32.partialorder %v2132, 0.0
        %vm2179 = vcmp.gt.f32.partialorder %v2137, 0.0
        %vm2180 = vcmp.gt.f32.partialorder %v2142, 0.0
        %vm2181 = vcmp.gt.f32.partialorder %v2147, 0.0
        %v2182 = vmul.f32 %v1992, 0.2
        %v2183 = vmul.f32 %v1997, 0.2
        %v2184 = vmul.f32 %v2002, 0.2
        %v2185 = vmul.f32 %v2007, 0.2
        %v2186 = vmul.f32 %v2012, 0.2
        %v2187 = vmul.f32 %v2017, 0.2
        %v2188 = vmul.f32 %v2022, 0.2
        %v2189 = vmul.f32 %v2027, 0.2
        %v2190 = vmul.f32 %v2032, 0.2
        %v2191 = vmul.f32 %v2037, 0.2
        %v2192 = vmul.f32 %v2042, 0.2
        %v2193 = vmul.f32 %v2047, 0.2
        %v2194 = vmul.f32 %v2052, 0.2
        %v2195 = vmul.f32 %v2057, 0.2
        %v2196 = vmul.f32 %v2062, 0.2
        %v2197 = vmul.f32 %v2067, 0.2
        %v2198 = vmul.f32 %v2072, 0.2
        %v2199 = vmul.f32 %v2077, 0.2
        %v2200 = vmul.f32 %v2082, 0.2
        %v2201 = vmul.f32 %v2087, 0.2
        %v2202 = vmul.f32 %v2092, 0.2
        %v2203 = vmul.f32 %v2097, 0.2
        %v2204 = vmul.f32 %v2102, 0.2
        %v2205 = vmul.f32 %v2107, 0.2
        %v2206 = vmul.f32 %v2112, 0.2
        %v2207 = vmul.f32 %v2117, 0.2
        %v2208 = vmul.f32 %v2122, 0.2
        %v2209 = vmul.f32 %v2127, 0.2
        %v2210 = vmul.f32 %v2132, 0.2
        %v2211 = vmul.f32 %v2137, 0.2
        %v2212 = vmul.f32 %v2142, 0.2
        %v2213 = vmul.f32 %v2147, 0.2
        %v2214 = vsel %vm2150, %v1992, %v2182
        %v2215 = vsel %vm2151, %v1997, %v2183
        %v2216 = vsel %vm2152, %v2002, %v2184
        %v2217 = vsel %vm2153, %v2007, %v2185
        %v2218 = vsel %vm2154, %v2012, %v2186
        %v2219 = vsel %vm2155, %v2017, %v2187
        %v2220 = vsel %vm2156, %v2022, %v2188
        %v2221 = vsel %vm2157, %v2027, %v2189
        %v2222 = vsel %vm2158, %v2032, %v2190
        %v2223 = vsel %vm2159, %v2037, %v2191
        %v2224 = vsel %vm2160, %v2042, %v2192
        %v2225 = vsel %vm2161, %v2047, %v2193
        %v2226 = vsel %vm2162, %v2052, %v2194
        %v2227 = vsel %vm2163, %v2057, %v2195
        %v2228 = vsel %vm2164, %v2062, %v2196
        %v2229 = vsel %vm2165, %v2067, %v2197
        %v2230 = vsel %vm2166, %v2072, %v2198
        %v2231 = vsel %vm2167, %v2077, %v2199
        %v2232 = vsel %vm2168, %v2082, %v2200
        %v2233 = vsel %vm2169, %v2087, %v2201
        %v2234 = vsel %vm2170, %v2092, %v2202
        %v2235 = vsel %vm2171, %v2097, %v2203
        %v2236 = vsel %vm2172, %v2102, %v2204
        %v2237 = vsel %vm2173, %v2107, %v2205
        %v2238 = vsel %vm2174, %v2112, %v2206
        %v2239 = vsel %vm2175, %v2117, %v2207
        %v2240 = vsel %vm2176, %v2122, %v2208
        %v2241 = vsel %vm2177, %v2127, %v2209
        %v2242 = vsel %vm2178, %v2132, %v2210
        %v2243 = vsel %vm2179, %v2137, %v2211
        %v2244 = vsel %vm2180, %v2142, %v2212
        %v2245 = vsel %vm2181, %v2147, %v2213
        %2246 = vst.msk [vmem:[%s468 + $0x1] sm:$0xff] %vm412, %v2214
        %2247 = vst.msk [vmem:[%s468 + $0x9] sm:$0xff] %vm412, %v2215
        %2248 = vst.msk [vmem:[%s468 + $0x19] sm:$0xff] %vm412, %v2216
        %2249 = vst.msk [vmem:[%s468 + $0x21] sm:$0xff] %vm412, %v2217
        %2250 = vst.msk [vmem:[%s468 + $0x31] sm:$0xff] %vm412, %v2218
        %2251 = vst.msk [vmem:[%s468 + $0x39] sm:$0xff] %vm412, %v2219
        %2252 = vst.msk [vmem:[%s468 + $0x49] sm:$0xff] %vm412, %v2220
        %2253 = vst.msk [vmem:[%s468 + $0x51] sm:$0xff] %vm412, %v2221
        %2254 = vst.msk [vmem:[%s468 + $0x61] sm:$0xff] %vm412, %v2222
        %2255 = vst.msk [vmem:[%s468 + $0x69] sm:$0xff] %vm412, %v2223
        %2256 = vst.msk [vmem:[%s468 + $0x79] sm:$0xff] %vm412, %v2224
        %2257 = vst.msk [vmem:[%s468 + $0x81] sm:$0xff] %vm412, %v2225
        %2258 = vst.msk [vmem:[%s468 + $0x91] sm:$0xff] %vm412, %v2226
        %2259 = vst.msk [vmem:[%s468 + $0x99] sm:$0xff] %vm412, %v2227
        %2260 = vst.msk [vmem:[%s468 + $0xa9] sm:$0xff] %vm412, %v2228
        %2261 = vst.msk [vmem:[%s468 + $0xb1] sm:$0xff] %vm412, %v2229
        %2262 = vst.msk [vmem:[%s468 + $0xc1] sm:$0xff] %vm412, %v2230
        %2263 = vst.msk [vmem:[%s468 + $0xc9] sm:$0xff] %vm412, %v2231
        %2264 = vst.msk [vmem:[%s468 + $0xd9] sm:$0xff] %vm412, %v2232
        %2265 = vst.msk [vmem:[%s468 + $0xe1] sm:$0xff] %vm412, %v2233
        %2266 = vst.msk [vmem:[%s468 + $0xf1] sm:$0xff] %vm412, %v2234
        %2267 = vst.msk [vmem:[%s468 + $0xf9] sm:$0xff] %vm412, %v2235
        %2268 = vst.msk [vmem:[%s468 + $0x109] sm:$0xff] %vm412, %v2236
        %2269 = vst.msk [vmem:[%s468 + $0x111] sm:$0xff] %vm412, %v2237
        %2270 = vst.msk [vmem:[%s468 + $0x121] sm:$0xff] %vm412, %v2238
        %2271 = vst.msk [vmem:[%s468 + $0x129] sm:$0xff] %vm412, %v2239
        %2272 = vst.msk [vmem:[%s468 + $0x139] sm:$0xff] %vm412, %v2240
        %2273 = vst.msk [vmem:[%s468 + $0x141] sm:$0xff] %vm412, %v2241
        %2274 = vst.msk [vmem:[%s468 + $0x151] sm:$0xff] %vm412, %v2242
        %2275 = vst.msk [vmem:[%s468 + $0x159] sm:$0xff] %vm412, %v2243
        %2276 = vst.msk [vmem:[%s468 + $0x169] sm:$0xff] %vm412, %v2244
        %2277 = vst.msk [vmem:[%s468 + $0x171] sm:$0xff] %vm412, %v2245
        %v2278 = vld [vmem:[#allocation2] sm:$0xff]
        %v2279 = vld [vmem:[#allocation2 + $0x8] sm:$0xff]
        %v2280 = vld [vmem:[#allocation2 + $0x10] sm:$0x3]
        %v2281 = vld [vmem:[#allocation2 + $0x18] sm:$0xff]
        %v2282 = vld [vmem:[#allocation2 + $0x20] sm:$0xff]
        %v2283 = vld [vmem:[#allocation2 + $0x28] sm:$0x3]
        %v2284 = vld [vmem:[#allocation2 + $0x30] sm:$0xff]
        %v2285 = vld [vmem:[#allocation2 + $0x38] sm:$0xff]
        %v2286 = vld [vmem:[#allocation2 + $0x40] sm:$0x3]
        %v2287 = vld [vmem:[#allocation2 + $0x48] sm:$0xff]
        %v2288 = vld [vmem:[#allocation2 + $0x50] sm:$0xff]
        %v2289 = vld [vmem:[#allocation2 + $0x58] sm:$0x3]
        %v2290 = vld [vmem:[#allocation2 + $0x60] sm:$0xff]
        %v2291 = vld [vmem:[#allocation2 + $0x68] sm:$0xff]
        %v2292 = vld [vmem:[#allocation2 + $0x70] sm:$0x3]
        %v2293 = vld [vmem:[#allocation2 + $0x78] sm:$0xff]
        %v2294 = vld [vmem:[#allocation2 + $0x80] sm:$0xff]
        %v2295 = vld [vmem:[#allocation2 + $0x88] sm:$0x3]
        %v2296 = vld [vmem:[#allocation2 + $0x90] sm:$0xff]
        %v2297 = vld [vmem:[#allocation2 + $0x98] sm:$0xff]
        %v2298 = vld [vmem:[#allocation2 + $0xa0] sm:$0x3]
        %v2299 = vld [vmem:[#allocation2 + $0xa8] sm:$0xff]
        %v2300 = vld [vmem:[#allocation2 + $0xb0] sm:$0xff]
        %v2301 = vld [vmem:[#allocation2 + $0xb8] sm:$0x3]
        %v2302 = vld [vmem:[#allocation2 + $0xc0] sm:$0xff]
        %v2303 = vld [vmem:[#allocation2 + $0xc8] sm:$0xff]
        %v2304 = vld [vmem:[#allocation2 + $0xd0] sm:$0x3]
        %v2305 = vld [vmem:[#allocation2 + $0xd8] sm:$0xff]
        %v2306 = vld [vmem:[#allocation2 + $0xe0] sm:$0xff]
        %v2307 = vld [vmem:[#allocation2 + $0xe8] sm:$0x3]
        %v2308 = vld [vmem:[#allocation2 + $0xf0] sm:$0xff]
        %v2309 = vld [vmem:[#allocation2 + $0xf8] sm:$0xff]
        %v2310 = vld [vmem:[#allocation2 + $0x100] sm:$0x3]
        %v2311 = vld [vmem:[#allocation2 + $0x108] sm:$0xff]
        %v2312 = vld [vmem:[#allocation2 + $0x110] sm:$0xff]
        %v2313 = vld [vmem:[#allocation2 + $0x118] sm:$0x3]
        %v2314 = vld [vmem:[#allocation2 + $0x120] sm:$0xff]
        %v2315 = vld [vmem:[#allocation2 + $0x128] sm:$0xff]
        %v2316 = vld [vmem:[#allocation2 + $0x130] sm:$0x3]
        %v2317 = vld [vmem:[#allocation2 + $0x138] sm:$0xff]
        %v2318 = vld [vmem:[#allocation2 + $0x140] sm:$0xff]
        %v2319 = vld [vmem:[#allocation2 + $0x148] sm:$0x3]
        %v2320 = vld [vmem:[#allocation2 + $0x150] sm:$0xff]
        %v2321 = vld [vmem:[#allocation2 + $0x158] sm:$0xff]
        %v2322 = vld [vmem:[#allocation2 + $0x160] sm:$0x3]
        %v2323 = vld [vmem:[#allocation2 + $0x168] sm:$0xff]
        %v2324 = vld [vmem:[#allocation2 + $0x170] sm:$0xff]
        %v2325 = vld [vmem:[#allocation2 + $0x178] sm:$0x3]
        %v2326 = vld [vmem:[#allocation2 + $0x180] sm:$0xff]
        %v2327 = vld [vmem:[#allocation2 + $0x188] sm:$0xff]
        %v2328 = vld [vmem:[#allocation2 + $0x190] sm:$0x3]
        %v2329 = vld [vmem:[#allocation2 + $0x198] sm:$0xff]
        %v2330 = vld [vmem:[#allocation2 + $0x1a0] sm:$0xff]
        %v2331 = vld [vmem:[#allocation2 + $0x1a8] sm:$0x3]
        %v2380 = vrot.slane %v2278, 1
        %v2381 = vrot.slane %v2279, 1
        %v2382 = vsel %vm603, %v2380, %v2381
        %v2383 = vrot.slane %v2280, 1
        %v2384 = vsel %vm603, %v2381, %v2383
        %v2385 = vrot.slane %v2281, 1
        %v2386 = vrot.slane %v2282, 1
        %v2387 = vsel %vm603, %v2385, %v2386
        %v2388 = vrot.slane %v2283, 1
        %v2389 = vsel %vm603, %v2386, %v2388
        %v2390 = vrot.slane %v2284, 1
        %v2391 = vrot.slane %v2285, 1
        %v2392 = vsel %vm603, %v2390, %v2391
        %v2393 = vrot.slane %v2286, 1
        %v2394 = vsel %vm603, %v2391, %v2393
        %v2395 = vrot.slane %v2287, 1
        %v2396 = vrot.slane %v2288, 1
        %v2397 = vsel %vm603, %v2395, %v2396
        %v2398 = vrot.slane %v2289, 1
        %v2399 = vsel %vm603, %v2396, %v2398
        %v2400 = vrot.slane %v2290, 1
        %v2401 = vrot.slane %v2291, 1
        %v2402 = vsel %vm603, %v2400, %v2401
        %v2403 = vrot.slane %v2292, 1
        %v2404 = vsel %vm603, %v2401, %v2403
        %v2405 = vrot.slane %v2293, 1
        %v2406 = vrot.slane %v2294, 1
        %v2407 = vsel %vm603, %v2405, %v2406
        %v2408 = vrot.slane %v2295, 1
        %v2409 = vsel %vm603, %v2406, %v2408
        %v2410 = vrot.slane %v2296, 1
        %v2411 = vrot.slane %v2297, 1
        %v2412 = vsel %vm603, %v2410, %v2411
        %v2413 = vrot.slane %v2298, 1
        %v2414 = vsel %vm603, %v2411, %v2413
        %v2415 = vrot.slane %v2299, 1
        %v2416 = vrot.slane %v2300, 1
        %v2417 = vsel %vm603, %v2415, %v2416
        %v2418 = vrot.slane %v2301, 1
        %v2419 = vsel %vm603, %v2416, %v2418
        %v2420 = vrot.slane %v2302, 1
        %v2421 = vrot.slane %v2303, 1
        %v2422 = vsel %vm603, %v2420, %v2421
        %v2423 = vrot.slane %v2304, 1
        %v2424 = vsel %vm603, %v2421, %v2423
        %v2425 = vrot.slane %v2305, 1
        %v2426 = vrot.slane %v2306, 1
        %v2427 = vsel %vm603, %v2425, %v2426
        %v2428 = vrot.slane %v2307, 1
        %v2429 = vsel %vm603, %v2426, %v2428
        %v2430 = vrot.slane %v2308, 1
        %v2431 = vrot.slane %v2309, 1
        %v2432 = vsel %vm603, %v2430, %v2431
        %v2433 = vrot.slane %v2310, 1
        %v2434 = vsel %vm603, %v2431, %v2433
        %v2435 = vrot.slane %v2311, 1
        %v2436 = vrot.slane %v2312, 1
        %v2437 = vsel %vm603, %v2435, %v2436
        %v2438 = vrot.slane %v2313, 1
        %v2439 = vsel %vm603, %v2436, %v2438
        %v2440 = vrot.slane %v2314, 1
        %v2441 = vrot.slane %v2315, 1
        %v2442 = vsel %vm603, %v2440, %v2441
        %v2443 = vrot.slane %v2316, 1
        %v2444 = vsel %vm603, %v2441, %v2443
        %v2445 = vrot.slane %v2317, 1
        %v2446 = vrot.slane %v2318, 1
        %v2447 = vsel %vm603, %v2445, %v2446
        %v2448 = vrot.slane %v2319, 1
        %v2449 = vsel %vm603, %v2446, %v2448
        %v2450 = vrot.slane %v2320, 1
        %v2451 = vrot.slane %v2321, 1
        %v2452 = vsel %vm603, %v2450, %v2451
        %v2453 = vrot.slane %v2322, 1
        %v2454 = vsel %vm603, %v2451, %v2453
        %v2455 = vrot.slane %v2323, 1
        %v2456 = vrot.slane %v2324, 1
        %v2457 = vsel %vm603, %v2455, %v2456
        %v2458 = vrot.slane %v2325, 1
        %v2459 = vsel %vm603, %v2456, %v2458
        %v2460 = vrot.slane %v2278, 2
        %v2461 = vrot.slane %v2279, 2
        %v2462 = vsel %vm684, %v2460, %v2461
        %v2463 = vrot.slane %v2280, 2
        %v2464 = vsel %vm684, %v2461, %v2463
        %v2465 = vrot.slane %v2281, 2
        %v2466 = vrot.slane %v2282, 2
        %v2467 = vsel %vm684, %v2465, %v2466
        %v2468 = vrot.slane %v2283, 2
        %v2469 = vsel %vm684, %v2466, %v2468
        %v2470 = vrot.slane %v2284, 2
        %v2471 = vrot.slane %v2285, 2
        %v2472 = vsel %vm684, %v2470, %v2471
        %v2473 = vrot.slane %v2286, 2
        %v2474 = vsel %vm684, %v2471, %v2473
        %v2475 = vrot.slane %v2287, 2
        %v2476 = vrot.slane %v2288, 2
        %v2477 = vsel %vm684, %v2475, %v2476
        %v2478 = vrot.slane %v2289, 2
        %v2479 = vsel %vm684, %v2476, %v2478
        %v2480 = vrot.slane %v2290, 2
        %v2481 = vrot.slane %v2291, 2
        %v2482 = vsel %vm684, %v2480, %v2481
        %v2483 = vrot.slane %v2292, 2
        %v2484 = vsel %vm684, %v2481, %v2483
        %v2485 = vrot.slane %v2293, 2
        %v2486 = vrot.slane %v2294, 2
        %v2487 = vsel %vm684, %v2485, %v2486
        %v2488 = vrot.slane %v2295, 2
        %v2489 = vsel %vm684, %v2486, %v2488
        %v2490 = vrot.slane %v2296, 2
        %v2491 = vrot.slane %v2297, 2
        %v2492 = vsel %vm684, %v2490, %v2491
        %v2493 = vrot.slane %v2298, 2
        %v2494 = vsel %vm684, %v2491, %v2493
        %v2495 = vrot.slane %v2299, 2
        %v2496 = vrot.slane %v2300, 2
        %v2497 = vsel %vm684, %v2495, %v2496
        %v2498 = vrot.slane %v2301, 2
        %v2499 = vsel %vm684, %v2496, %v2498
        %v2500 = vrot.slane %v2302, 2
        %v2501 = vrot.slane %v2303, 2
        %v2502 = vsel %vm684, %v2500, %v2501
        %v2503 = vrot.slane %v2304, 2
        %v2504 = vsel %vm684, %v2501, %v2503
        %v2505 = vrot.slane %v2305, 2
        %v2506 = vrot.slane %v2306, 2
        %v2507 = vsel %vm684, %v2505, %v2506
        %v2508 = vrot.slane %v2307, 2
        %v2509 = vsel %vm684, %v2506, %v2508
        %v2510 = vrot.slane %v2308, 2
        %v2511 = vrot.slane %v2309, 2
        %v2512 = vsel %vm684, %v2510, %v2511
        %v2513 = vrot.slane %v2310, 2
        %v2514 = vsel %vm684, %v2511, %v2513
        %v2515 = vrot.slane %v2311, 2
        %v2516 = vrot.slane %v2312, 2
        %v2517 = vsel %vm684, %v2515, %v2516
        %v2518 = vrot.slane %v2313, 2
        %v2519 = vsel %vm684, %v2516, %v2518
        %v2520 = vrot.slane %v2314, 2
        %v2521 = vrot.slane %v2315, 2
        %v2522 = vsel %vm684, %v2520, %v2521
        %v2523 = vrot.slane %v2316, 2
        %v2524 = vsel %vm684, %v2521, %v2523
        %v2525 = vrot.slane %v2317, 2
        %v2526 = vrot.slane %v2318, 2
        %v2527 = vsel %vm684, %v2525, %v2526
        %v2528 = vrot.slane %v2319, 2
        %v2529 = vsel %vm684, %v2526, %v2528
        %v2530 = vrot.slane %v2320, 2
        %v2531 = vrot.slane %v2321, 2
        %v2532 = vsel %vm684, %v2530, %v2531
        %v2533 = vrot.slane %v2322, 2
        %v2534 = vsel %vm684, %v2531, %v2533
        %v2535 = vrot.slane %v2323, 2
        %v2536 = vrot.slane %v2324, 2
        %v2537 = vsel %vm684, %v2535, %v2536
        %v2538 = vrot.slane %v2325, 2
        %v2539 = vsel %vm684, %v2536, %v2538
        %v2543 = vrot.slane %v2326, 1
        %v2544 = vrot.slane %v2327, 1
        %v2545 = vsel %vm603, %v2543, %v2544
        %v2546 = vrot.slane %v2328, 1
        %v2547 = vsel %vm603, %v2544, %v2546
        %v2580 = vrot.slane %v2326, 2
        %v2581 = vrot.slane %v2327, 2
        %v2582 = vsel %vm684, %v2580, %v2581
        %v2583 = vrot.slane %v2328, 2
        %v2584 = vsel %vm684, %v2581, %v2583
        %v2588 = vrot.slane %v2329, 1
        %v2589 = vrot.slane %v2330, 1
        %v2590 = vsel %vm603, %v2588, %v2589
        %v2591 = vrot.slane %v2331, 1
        %v2592 = vsel %vm603, %v2589, %v2591
        %v2593 = vrot.slane %v2329, 2
        %v2594 = vrot.slane %v2330, 2
        %v2595 = vsel %vm684, %v2593, %v2594
        %v2596 = vrot.slane %v2331, 2
        %v2597 = vsel %vm684, %v2594, %v2596
        %2598 = vrot.lane.b32.xlu0 %v2382, 32
        %v2599 = vpop.permute.xlu0 %2598
        %2600 = vrot.lane.b32.xlu0 %v2384, 32
        %v2601 = vpop.permute.xlu0 %2600
        %2602 = vrot.lane.b32.xlu0 %v2387, 32
        %v2603 = vpop.permute.xlu0 %2602
        %2604 = vrot.lane.b32.xlu0 %v2389, 32
        %v2605 = vpop.permute.xlu0 %2604
        %2606 = vrot.lane.b32.xlu0 %v2392, 32
        %v2607 = vpop.permute.xlu0 %2606
        %2608 = vrot.lane.b32.xlu0 %v2394, 32
        %v2609 = vpop.permute.xlu0 %2608
        %2610 = vrot.lane.b32.xlu0 %v2397, 32
        %v2611 = vpop.permute.xlu0 %2610
        %2612 = vrot.lane.b32.xlu0 %v2399, 32
        %v2613 = vpop.permute.xlu0 %2612
        %2614 = vrot.lane.b32.xlu0 %v2402, 32
        %v2615 = vpop.permute.xlu0 %2614
        %2616 = vrot.lane.b32.xlu0 %v2404, 32
        %v2617 = vpop.permute.xlu0 %2616
        %2618 = vrot.lane.b32.xlu0 %v2407, 32
        %v2619 = vpop.permute.xlu0 %2618
        %2620 = vrot.lane.b32.xlu0 %v2409, 32
        %v2621 = vpop.permute.xlu0 %2620
        %2622 = vrot.lane.b32.xlu0 %v2412, 32
        %v2623 = vpop.permute.xlu0 %2622
        %2624 = vrot.lane.b32.xlu0 %v2414, 32
        %v2625 = vpop.permute.xlu0 %2624
        %2626 = vrot.lane.b32.xlu0 %v2417, 32
        %v2627 = vpop.permute.xlu0 %2626
        %2628 = vrot.lane.b32.xlu0 %v2419, 32
        %v2629 = vpop.permute.xlu0 %2628
        %2630 = vrot.lane.b32.xlu0 %v2422, 32
        %v2631 = vpop.permute.xlu0 %2630
        %2632 = vrot.lane.b32.xlu0 %v2424, 32
        %v2633 = vpop.permute.xlu0 %2632
        %2634 = vrot.lane.b32.xlu0 %v2427, 32
        %v2635 = vpop.permute.xlu0 %2634
        %2636 = vrot.lane.b32.xlu0 %v2429, 32
        %v2637 = vpop.permute.xlu0 %2636
        %2638 = vrot.lane.b32.xlu0 %v2432, 32
        %v2639 = vpop.permute.xlu0 %2638
        %2640 = vrot.lane.b32.xlu0 %v2434, 32
        %v2641 = vpop.permute.xlu0 %2640
        %2642 = vrot.lane.b32.xlu0 %v2437, 32
        %v2643 = vpop.permute.xlu0 %2642
        %2644 = vrot.lane.b32.xlu0 %v2439, 32
        %v2645 = vpop.permute.xlu0 %2644
        %2646 = vrot.lane.b32.xlu0 %v2442, 32
        %v2647 = vpop.permute.xlu0 %2646
        %2648 = vrot.lane.b32.xlu0 %v2444, 32
        %v2649 = vpop.permute.xlu0 %2648
        %2650 = vrot.lane.b32.xlu0 %v2447, 32
        %v2651 = vpop.permute.xlu0 %2650
        %2652 = vrot.lane.b32.xlu0 %v2449, 32
        %v2653 = vpop.permute.xlu0 %2652
        %2654 = vrot.lane.b32.xlu0 %v2452, 32
        %v2655 = vpop.permute.xlu0 %2654
        %2656 = vrot.lane.b32.xlu0 %v2454, 32
        %v2657 = vpop.permute.xlu0 %2656
        %2658 = vrot.lane.b32.xlu0 %v2457, 32
        %v2659 = vpop.permute.xlu0 %2658
        %2660 = vrot.lane.b32.xlu0 %v2459, 32
        %v2661 = vpop.permute.xlu0 %2660
        %2694 = vrot.lane.b32.xlu0 %v2462, 64
        %v2695 = vpop.permute.xlu0 %2694
        %2696 = vrot.lane.b32.xlu0 %v2464, 64
        %v2697 = vpop.permute.xlu0 %2696
        %2698 = vrot.lane.b32.xlu0 %v2467, 64
        %v2699 = vpop.permute.xlu0 %2698
        %2700 = vrot.lane.b32.xlu0 %v2469, 64
        %v2701 = vpop.permute.xlu0 %2700
        %2702 = vrot.lane.b32.xlu0 %v2472, 64
        %v2703 = vpop.permute.xlu0 %2702
        %2704 = vrot.lane.b32.xlu0 %v2474, 64
        %v2705 = vpop.permute.xlu0 %2704
        %2706 = vrot.lane.b32.xlu0 %v2477, 64
        %v2707 = vpop.permute.xlu0 %2706
        %2708 = vrot.lane.b32.xlu0 %v2479, 64
        %v2709 = vpop.permute.xlu0 %2708
        %2710 = vrot.lane.b32.xlu0 %v2482, 64
        %v2711 = vpop.permute.xlu0 %2710
        %2712 = vrot.lane.b32.xlu0 %v2484, 64
        %v2713 = vpop.permute.xlu0 %2712
        %2714 = vrot.lane.b32.xlu0 %v2487, 64
        %v2715 = vpop.permute.xlu0 %2714
        %2716 = vrot.lane.b32.xlu0 %v2489, 64
        %v2717 = vpop.permute.xlu0 %2716
        %2718 = vrot.lane.b32.xlu0 %v2492, 64
        %v2719 = vpop.permute.xlu0 %2718
        %2720 = vrot.lane.b32.xlu0 %v2494, 64
        %v2721 = vpop.permute.xlu0 %2720
        %2722 = vrot.lane.b32.xlu0 %v2497, 64
        %v2723 = vpop.permute.xlu0 %2722
        %2724 = vrot.lane.b32.xlu0 %v2499, 64
        %v2725 = vpop.permute.xlu0 %2724
        %2726 = vrot.lane.b32.xlu0 %v2502, 64
        %v2727 = vpop.permute.xlu0 %2726
        %2728 = vrot.lane.b32.xlu0 %v2504, 64
        %v2729 = vpop.permute.xlu0 %2728
        %2730 = vrot.lane.b32.xlu0 %v2507, 64
        %v2731 = vpop.permute.xlu0 %2730
        %2732 = vrot.lane.b32.xlu0 %v2509, 64
        %v2733 = vpop.permute.xlu0 %2732
        %2734 = vrot.lane.b32.xlu0 %v2512, 64
        %v2735 = vpop.permute.xlu0 %2734
        %2736 = vrot.lane.b32.xlu0 %v2514, 64
        %v2737 = vpop.permute.xlu0 %2736
        %2738 = vrot.lane.b32.xlu0 %v2517, 64
        %v2739 = vpop.permute.xlu0 %2738
        %2740 = vrot.lane.b32.xlu0 %v2519, 64
        %v2741 = vpop.permute.xlu0 %2740
        %2742 = vrot.lane.b32.xlu0 %v2522, 64
        %v2743 = vpop.permute.xlu0 %2742
        %2744 = vrot.lane.b32.xlu0 %v2524, 64
        %v2745 = vpop.permute.xlu0 %2744
        %2746 = vrot.lane.b32.xlu0 %v2527, 64
        %v2747 = vpop.permute.xlu0 %2746
        %2748 = vrot.lane.b32.xlu0 %v2529, 64
        %v2749 = vpop.permute.xlu0 %2748
        %2750 = vrot.lane.b32.xlu0 %v2532, 64
        %v2751 = vpop.permute.xlu0 %2750
        %2752 = vrot.lane.b32.xlu0 %v2534, 64
        %v2753 = vpop.permute.xlu0 %2752
        %2754 = vrot.lane.b32.xlu0 %v2537, 64
        %v2755 = vpop.permute.xlu0 %2754
        %2756 = vrot.lane.b32.xlu0 %v2539, 64
        %v2757 = vpop.permute.xlu0 %2756
        %2790 = vrot.lane.b32.xlu0 %v2281, 96
        %v2791 = vpop.permute.xlu0 %2790
        %2792 = vrot.lane.b32.xlu0 %v2282, 96
        %v2793 = vpop.permute.xlu0 %2792
        %2794 = vrot.lane.b32.xlu0 %v2284, 96
        %v2795 = vpop.permute.xlu0 %2794
        %2796 = vrot.lane.b32.xlu0 %v2285, 96
        %v2797 = vpop.permute.xlu0 %2796
        %2798 = vrot.lane.b32.xlu0 %v2287, 96
        %v2799 = vpop.permute.xlu0 %2798
        %2800 = vrot.lane.b32.xlu0 %v2288, 96
        %v2801 = vpop.permute.xlu0 %2800
        %2802 = vrot.lane.b32.xlu0 %v2290, 96
        %v2803 = vpop.permute.xlu0 %2802
        %2804 = vrot.lane.b32.xlu0 %v2291, 96
        %v2805 = vpop.permute.xlu0 %2804
        %2806 = vrot.lane.b32.xlu0 %v2293, 96
        %v2807 = vpop.permute.xlu0 %2806
        %2808 = vrot.lane.b32.xlu0 %v2294, 96
        %v2809 = vpop.permute.xlu0 %2808
        %2810 = vrot.lane.b32.xlu0 %v2296, 96
        %v2811 = vpop.permute.xlu0 %2810
        %2812 = vrot.lane.b32.xlu0 %v2297, 96
        %v2813 = vpop.permute.xlu0 %2812
        %2814 = vrot.lane.b32.xlu0 %v2299, 96
        %v2815 = vpop.permute.xlu0 %2814
        %2816 = vrot.lane.b32.xlu0 %v2300, 96
        %v2817 = vpop.permute.xlu0 %2816
        %2818 = vrot.lane.b32.xlu0 %v2302, 96
        %v2819 = vpop.permute.xlu0 %2818
        %2820 = vrot.lane.b32.xlu0 %v2303, 96
        %v2821 = vpop.permute.xlu0 %2820
        %2822 = vrot.lane.b32.xlu0 %v2305, 96
        %v2823 = vpop.permute.xlu0 %2822
        %2824 = vrot.lane.b32.xlu0 %v2306, 96
        %v2825 = vpop.permute.xlu0 %2824
        %2826 = vrot.lane.b32.xlu0 %v2308, 96
        %v2827 = vpop.permute.xlu0 %2826
        %2828 = vrot.lane.b32.xlu0 %v2309, 96
        %v2829 = vpop.permute.xlu0 %2828
        %2830 = vrot.lane.b32.xlu0 %v2311, 96
        %v2831 = vpop.permute.xlu0 %2830
        %2832 = vrot.lane.b32.xlu0 %v2312, 96
        %v2833 = vpop.permute.xlu0 %2832
        %2834 = vrot.lane.b32.xlu0 %v2314, 96
        %v2835 = vpop.permute.xlu0 %2834
        %2836 = vrot.lane.b32.xlu0 %v2315, 96
        %v2837 = vpop.permute.xlu0 %2836
        %2838 = vrot.lane.b32.xlu0 %v2317, 96
        %v2839 = vpop.permute.xlu0 %2838
        %2840 = vrot.lane.b32.xlu0 %v2318, 96
        %v2841 = vpop.permute.xlu0 %2840
        %2842 = vrot.lane.b32.xlu0 %v2320, 96
        %v2843 = vpop.permute.xlu0 %2842
        %2844 = vrot.lane.b32.xlu0 %v2321, 96
        %v2845 = vpop.permute.xlu0 %2844
        %2846 = vrot.lane.b32.xlu0 %v2323, 96
        %v2847 = vpop.permute.xlu0 %2846
        %2848 = vrot.lane.b32.xlu0 %v2324, 96
        %v2849 = vpop.permute.xlu0 %2848
        %2850 = vrot.lane.b32.xlu0 %v2326, 96
        %v2851 = vpop.permute.xlu0 %2850
        %2852 = vrot.lane.b32.xlu0 %v2327, 96
        %v2853 = vpop.permute.xlu0 %2852
        %2886 = vrot.lane.b32.xlu0 %v2467, 32
        %v2887 = vpop.permute.xlu0 %2886
        %2888 = vrot.lane.b32.xlu0 %v2469, 32
        %v2889 = vpop.permute.xlu0 %2888
        %2890 = vrot.lane.b32.xlu0 %v2472, 32
        %v2891 = vpop.permute.xlu0 %2890
        %2892 = vrot.lane.b32.xlu0 %v2474, 32
        %v2893 = vpop.permute.xlu0 %2892
        %2894 = vrot.lane.b32.xlu0 %v2477, 32
        %v2895 = vpop.permute.xlu0 %2894
        %2896 = vrot.lane.b32.xlu0 %v2479, 32
        %v2897 = vpop.permute.xlu0 %2896
        %2898 = vrot.lane.b32.xlu0 %v2482, 32
        %v2899 = vpop.permute.xlu0 %2898
        %2900 = vrot.lane.b32.xlu0 %v2484, 32
        %v2901 = vpop.permute.xlu0 %2900
        %2902 = vrot.lane.b32.xlu0 %v2487, 32
        %v2903 = vpop.permute.xlu0 %2902
        %2904 = vrot.lane.b32.xlu0 %v2489, 32
        %v2905 = vpop.permute.xlu0 %2904
        %2906 = vrot.lane.b32.xlu0 %v2492, 32
        %v2907 = vpop.permute.xlu0 %2906
        %2908 = vrot.lane.b32.xlu0 %v2494, 32
        %v2909 = vpop.permute.xlu0 %2908
        %2910 = vrot.lane.b32.xlu0 %v2497, 32
        %v2911 = vpop.permute.xlu0 %2910
        %2912 = vrot.lane.b32.xlu0 %v2499, 32
        %v2913 = vpop.permute.xlu0 %2912
        %2914 = vrot.lane.b32.xlu0 %v2502, 32
        %v2915 = vpop.permute.xlu0 %2914
        %2916 = vrot.lane.b32.xlu0 %v2504, 32
        %v2917 = vpop.permute.xlu0 %2916
        %2918 = vrot.lane.b32.xlu0 %v2507, 32
        %v2919 = vpop.permute.xlu0 %2918
        %2920 = vrot.lane.b32.xlu0 %v2509, 32
        %v2921 = vpop.permute.xlu0 %2920
        %2922 = vrot.lane.b32.xlu0 %v2512, 32
        %v2923 = vpop.permute.xlu0 %2922
        %2924 = vrot.lane.b32.xlu0 %v2514, 32
        %v2925 = vpop.permute.xlu0 %2924
        %2926 = vrot.lane.b32.xlu0 %v2517, 32
        %v2927 = vpop.permute.xlu0 %2926
        %2928 = vrot.lane.b32.xlu0 %v2519, 32
        %v2929 = vpop.permute.xlu0 %2928
        %2930 = vrot.lane.b32.xlu0 %v2522, 32
        %v2931 = vpop.permute.xlu0 %2930
        %2932 = vrot.lane.b32.xlu0 %v2524, 32
        %v2933 = vpop.permute.xlu0 %2932
        %2934 = vrot.lane.b32.xlu0 %v2527, 32
        %v2935 = vpop.permute.xlu0 %2934
        %2936 = vrot.lane.b32.xlu0 %v2529, 32
        %v2937 = vpop.permute.xlu0 %2936
        %2938 = vrot.lane.b32.xlu0 %v2532, 32
        %v2939 = vpop.permute.xlu0 %2938
        %2940 = vrot.lane.b32.xlu0 %v2534, 32
        %v2941 = vpop.permute.xlu0 %2940
        %2942 = vrot.lane.b32.xlu0 %v2537, 32
        %v2943 = vpop.permute.xlu0 %2942
        %2944 = vrot.lane.b32.xlu0 %v2539, 32
        %v2945 = vpop.permute.xlu0 %2944
        %2946 = vrot.lane.b32.xlu0 %v2582, 32
        %v2947 = vpop.permute.xlu0 %2946
        %2948 = vrot.lane.b32.xlu0 %v2584, 32
        %v2949 = vpop.permute.xlu0 %2948
        %2982 = vrot.lane.b32.xlu0 %v2284, 64
        %v2983 = vpop.permute.xlu0 %2982
        %2984 = vrot.lane.b32.xlu0 %v2285, 64
        %v2985 = vpop.permute.xlu0 %2984
        %2986 = vrot.lane.b32.xlu0 %v2287, 64
        %v2987 = vpop.permute.xlu0 %2986
        %2988 = vrot.lane.b32.xlu0 %v2288, 64
        %v2989 = vpop.permute.xlu0 %2988
        %2990 = vrot.lane.b32.xlu0 %v2290, 64
        %v2991 = vpop.permute.xlu0 %2990
        %2992 = vrot.lane.b32.xlu0 %v2291, 64
        %v2993 = vpop.permute.xlu0 %2992
        %2994 = vrot.lane.b32.xlu0 %v2293, 64
        %v2995 = vpop.permute.xlu0 %2994
        %2996 = vrot.lane.b32.xlu0 %v2294, 64
        %v2997 = vpop.permute.xlu0 %2996
        %2998 = vrot.lane.b32.xlu0 %v2296, 64
        %v2999 = vpop.permute.xlu0 %2998
        %3000 = vrot.lane.b32.xlu0 %v2297, 64
        %v3001 = vpop.permute.xlu0 %3000
        %3002 = vrot.lane.b32.xlu0 %v2299, 64
        %v3003 = vpop.permute.xlu0 %3002
        %3004 = vrot.lane.b32.xlu0 %v2300, 64
        %v3005 = vpop.permute.xlu0 %3004
        %3006 = vrot.lane.b32.xlu0 %v2302, 64
        %v3007 = vpop.permute.xlu0 %3006
        %3008 = vrot.lane.b32.xlu0 %v2303, 64
        %v3009 = vpop.permute.xlu0 %3008
        %3010 = vrot.lane.b32.xlu0 %v2305, 64
        %v3011 = vpop.permute.xlu0 %3010
        %3012 = vrot.lane.b32.xlu0 %v2306, 64
        %v3013 = vpop.permute.xlu0 %3012
        %3014 = vrot.lane.b32.xlu0 %v2308, 64
        %v3015 = vpop.permute.xlu0 %3014
        %3016 = vrot.lane.b32.xlu0 %v2309, 64
        %v3017 = vpop.permute.xlu0 %3016
        %3018 = vrot.lane.b32.xlu0 %v2311, 64
        %v3019 = vpop.permute.xlu0 %3018
        %3020 = vrot.lane.b32.xlu0 %v2312, 64
        %v3021 = vpop.permute.xlu0 %3020
        %3022 = vrot.lane.b32.xlu0 %v2314, 64
        %v3023 = vpop.permute.xlu0 %3022
        %3024 = vrot.lane.b32.xlu0 %v2315, 64
        %v3025 = vpop.permute.xlu0 %3024
        %3026 = vrot.lane.b32.xlu0 %v2317, 64
        %v3027 = vpop.permute.xlu0 %3026
        %3028 = vrot.lane.b32.xlu0 %v2318, 64
        %v3029 = vpop.permute.xlu0 %3028
        %3030 = vrot.lane.b32.xlu0 %v2320, 64
        %v3031 = vpop.permute.xlu0 %3030
        %3032 = vrot.lane.b32.xlu0 %v2321, 64
        %v3033 = vpop.permute.xlu0 %3032
        %3034 = vrot.lane.b32.xlu0 %v2323, 64
        %v3035 = vpop.permute.xlu0 %3034
        %3036 = vrot.lane.b32.xlu0 %v2324, 64
        %v3037 = vpop.permute.xlu0 %3036
        %3038 = vrot.lane.b32.xlu0 %v2326, 64
        %v3039 = vpop.permute.xlu0 %3038
        %3040 = vrot.lane.b32.xlu0 %v2327, 64
        %v3041 = vpop.permute.xlu0 %3040
        %3042 = vrot.lane.b32.xlu0 %v2329, 64
        %v3043 = vpop.permute.xlu0 %3042
        %3044 = vrot.lane.b32.xlu0 %v2330, 64
        %v3045 = vpop.permute.xlu0 %3044
        %3078 = vrot.lane.b32.xlu0 %v2392, 96
        %v3079 = vpop.permute.xlu0 %3078
        %3080 = vrot.lane.b32.xlu0 %v2394, 96
        %v3081 = vpop.permute.xlu0 %3080
        %3082 = vrot.lane.b32.xlu0 %v2397, 96
        %v3083 = vpop.permute.xlu0 %3082
        %3084 = vrot.lane.b32.xlu0 %v2399, 96
        %v3085 = vpop.permute.xlu0 %3084
        %3086 = vrot.lane.b32.xlu0 %v2402, 96
        %v3087 = vpop.permute.xlu0 %3086
        %3088 = vrot.lane.b32.xlu0 %v2404, 96
        %v3089 = vpop.permute.xlu0 %3088
        %3090 = vrot.lane.b32.xlu0 %v2407, 96
        %v3091 = vpop.permute.xlu0 %3090
        %3092 = vrot.lane.b32.xlu0 %v2409, 96
        %v3093 = vpop.permute.xlu0 %3092
        %3094 = vrot.lane.b32.xlu0 %v2412, 96
        %v3095 = vpop.permute.xlu0 %3094
        %3096 = vrot.lane.b32.xlu0 %v2414, 96
        %v3097 = vpop.permute.xlu0 %3096
        %3098 = vrot.lane.b32.xlu0 %v2417, 96
        %v3099 = vpop.permute.xlu0 %3098
        %3100 = vrot.lane.b32.xlu0 %v2419, 96
        %v3101 = vpop.permute.xlu0 %3100
        %3102 = vrot.lane.b32.xlu0 %v2422, 96
        %v3103 = vpop.permute.xlu0 %3102
        %3104 = vrot.lane.b32.xlu0 %v2424, 96
        %v3105 = vpop.permute.xlu0 %3104
        %3106 = vrot.lane.b32.xlu0 %v2427, 96
        %v3107 = vpop.permute.xlu0 %3106
        %3108 = vrot.lane.b32.xlu0 %v2429, 96
        %v3109 = vpop.permute.xlu0 %3108
        %3110 = vrot.lane.b32.xlu0 %v2432, 96
        %v3111 = vpop.permute.xlu0 %3110
        %3112 = vrot.lane.b32.xlu0 %v2434, 96
        %v3113 = vpop.permute.xlu0 %3112
        %3114 = vrot.lane.b32.xlu0 %v2437, 96
        %v3115 = vpop.permute.xlu0 %3114
        %3116 = vrot.lane.b32.xlu0 %v2439, 96
        %v3117 = vpop.permute.xlu0 %3116
        %3118 = vrot.lane.b32.xlu0 %v2442, 96
        %v3119 = vpop.permute.xlu0 %3118
        %3120 = vrot.lane.b32.xlu0 %v2444, 96
        %v3121 = vpop.permute.xlu0 %3120
        %3122 = vrot.lane.b32.xlu0 %v2447, 96
        %v3123 = vpop.permute.xlu0 %3122
        %3124 = vrot.lane.b32.xlu0 %v2449, 96
        %v3125 = vpop.permute.xlu0 %3124
        %3126 = vrot.lane.b32.xlu0 %v2452, 96
        %v3127 = vpop.permute.xlu0 %3126
        %3128 = vrot.lane.b32.xlu0 %v2454, 96
        %v3129 = vpop.permute.xlu0 %3128
        %3130 = vrot.lane.b32.xlu0 %v2457, 96
        %v3131 = vpop.permute.xlu0 %3130
        %3132 = vrot.lane.b32.xlu0 %v2459, 96
        %v3133 = vpop.permute.xlu0 %3132
        %3134 = vrot.lane.b32.xlu0 %v2545, 96
        %v3135 = vpop.permute.xlu0 %3134
        %3136 = vrot.lane.b32.xlu0 %v2547, 96
        %v3137 = vpop.permute.xlu0 %3136
        %3138 = vrot.lane.b32.xlu0 %v2590, 96
        %v3139 = vpop.permute.xlu0 %3138
        %3140 = vrot.lane.b32.xlu0 %v2592, 96
        %v3141 = vpop.permute.xlu0 %3140
        %v3174 = vsel %vm412, %v2278, %v2599
        %v3175 = vsel %vm412, %v2279, %v2601
        %v3176 = vsel %vm412, %v2281, %v2603
        %v3177 = vsel %vm412, %v2282, %v2605
        %v3178 = vsel %vm412, %v2284, %v2607
        %v3179 = vsel %vm412, %v2285, %v2609
        %v3180 = vsel %vm412, %v2287, %v2611
        %v3181 = vsel %vm412, %v2288, %v2613
        %v3182 = vsel %vm412, %v2290, %v2615
        %v3183 = vsel %vm412, %v2291, %v2617
        %v3184 = vsel %vm412, %v2293, %v2619
        %v3185 = vsel %vm412, %v2294, %v2621
        %v3186 = vsel %vm412, %v2296, %v2623
        %v3187 = vsel %vm412, %v2297, %v2625
        %v3188 = vsel %vm412, %v2299, %v2627
        %v3189 = vsel %vm412, %v2300, %v2629
        %v3190 = vsel %vm412, %v2302, %v2631
        %v3191 = vsel %vm412, %v2303, %v2633
        %v3192 = vsel %vm412, %v2305, %v2635
        %v3193 = vsel %vm412, %v2306, %v2637
        %v3194 = vsel %vm412, %v2308, %v2639
        %v3195 = vsel %vm412, %v2309, %v2641
        %v3196 = vsel %vm412, %v2311, %v2643
        %v3197 = vsel %vm412, %v2312, %v2645
        %v3198 = vsel %vm412, %v2314, %v2647
        %v3199 = vsel %vm412, %v2315, %v2649
        %v3200 = vsel %vm412, %v2317, %v2651
        %v3201 = vsel %vm412, %v2318, %v2653
        %v3202 = vsel %vm412, %v2320, %v2655
        %v3203 = vsel %vm412, %v2321, %v2657
        %v3204 = vsel %vm412, %v2323, %v2659
        %v3205 = vsel %vm412, %v2324, %v2661
        %v3206 = vsel %vm1431, %v3174, %v2695
        %v3207 = vsel %vm1431, %v3175, %v2697
        %v3208 = vsel %vm1431, %v3176, %v2699
        %v3209 = vsel %vm1431, %v3177, %v2701
        %v3210 = vsel %vm1431, %v3178, %v2703
        %v3211 = vsel %vm1431, %v3179, %v2705
        %v3212 = vsel %vm1431, %v3180, %v2707
        %v3213 = vsel %vm1431, %v3181, %v2709
        %v3214 = vsel %vm1431, %v3182, %v2711
        %v3215 = vsel %vm1431, %v3183, %v2713
        %v3216 = vsel %vm1431, %v3184, %v2715
        %v3217 = vsel %vm1431, %v3185, %v2717
        %v3218 = vsel %vm1431, %v3186, %v2719
        %v3219 = vsel %vm1431, %v3187, %v2721
        %v3220 = vsel %vm1431, %v3188, %v2723
        %v3221 = vsel %vm1431, %v3189, %v2725
        %v3222 = vsel %vm1431, %v3190, %v2727
        %v3223 = vsel %vm1431, %v3191, %v2729
        %v3224 = vsel %vm1431, %v3192, %v2731
        %v3225 = vsel %vm1431, %v3193, %v2733
        %v3226 = vsel %vm1431, %v3194, %v2735
        %v3227 = vsel %vm1431, %v3195, %v2737
        %v3228 = vsel %vm1431, %v3196, %v2739
        %v3229 = vsel %vm1431, %v3197, %v2741
        %v3230 = vsel %vm1431, %v3198, %v2743
        %v3231 = vsel %vm1431, %v3199, %v2745
        %v3232 = vsel %vm1431, %v3200, %v2747
        %v3233 = vsel %vm1431, %v3201, %v2749
        %v3234 = vsel %vm1431, %v3202, %v2751
        %v3235 = vsel %vm1431, %v3203, %v2753
        %v3236 = vsel %vm1431, %v3204, %v2755
        %v3237 = vsel %vm1431, %v3205, %v2757
        %v3238 = vsel %vm1464, %v3206, %v2791
        %v3239 = vsel %vm1464, %v3207, %v2793
        %v3240 = vsel %vm1464, %v3208, %v2795
        %v3241 = vsel %vm1464, %v3209, %v2797
        %v3242 = vsel %vm1464, %v3210, %v2799
        %v3243 = vsel %vm1464, %v3211, %v2801
        %v3244 = vsel %vm1464, %v3212, %v2803
        %v3245 = vsel %vm1464, %v3213, %v2805
        %v3246 = vsel %vm1464, %v3214, %v2807
        %v3247 = vsel %vm1464, %v3215, %v2809
        %v3248 = vsel %vm1464, %v3216, %v2811
        %v3249 = vsel %vm1464, %v3217, %v2813
        %v3250 = vsel %vm1464, %v3218, %v2815
        %v3251 = vsel %vm1464, %v3219, %v2817
        %v3252 = vsel %vm1464, %v3220, %v2819
        %v3253 = vsel %vm1464, %v3221, %v2821
        %v3254 = vsel %vm1464, %v3222, %v2823
        %v3255 = vsel %vm1464, %v3223, %v2825
        %v3256 = vsel %vm1464, %v3224, %v2827
        %v3257 = vsel %vm1464, %v3225, %v2829
        %v3258 = vsel %vm1464, %v3226, %v2831
        %v3259 = vsel %vm1464, %v3227, %v2833
        %v3260 = vsel %vm1464, %v3228, %v2835
        %v3261 = vsel %vm1464, %v3229, %v2837
        %v3262 = vsel %vm1464, %v3230, %v2839
        %v3263 = vsel %vm1464, %v3231, %v2841
        %v3264 = vsel %vm1464, %v3232, %v2843
        %v3265 = vsel %vm1464, %v3233, %v2845
        %v3266 = vsel %vm1464, %v3234, %v2847
        %v3267 = vsel %vm1464, %v3235, %v2849
        %v3268 = vsel %vm1464, %v3236, %v2851
        %v3269 = vsel %vm1464, %v3237, %v2853
        %v3270 = vsel %vm412, %v2387, %v2887
        %v3271 = vsel %vm412, %v2389, %v2889
        %v3272 = vsel %vm412, %v2392, %v2891
        %v3273 = vsel %vm412, %v2394, %v2893
        %v3274 = vsel %vm412, %v2397, %v2895
        %v3275 = vsel %vm412, %v2399, %v2897
        %v3276 = vsel %vm412, %v2402, %v2899
        %v3277 = vsel %vm412, %v2404, %v2901
        %v3278 = vsel %vm412, %v2407, %v2903
        %v3279 = vsel %vm412, %v2409, %v2905
        %v3280 = vsel %vm412, %v2412, %v2907
        %v3281 = vsel %vm412, %v2414, %v2909
        %v3282 = vsel %vm412, %v2417, %v2911
        %v3283 = vsel %vm412, %v2419, %v2913
        %v3284 = vsel %vm412, %v2422, %v2915
        %v3285 = vsel %vm412, %v2424, %v2917
        %v3286 = vsel %vm412, %v2427, %v2919
        %v3287 = vsel %vm412, %v2429, %v2921
        %v3288 = vsel %vm412, %v2432, %v2923
        %v3289 = vsel %vm412, %v2434, %v2925
        %v3290 = vsel %vm412, %v2437, %v2927
        %v3291 = vsel %vm412, %v2439, %v2929
        %v3292 = vsel %vm412, %v2442, %v2931
        %v3293 = vsel %vm412, %v2444, %v2933
        %v3294 = vsel %vm412, %v2447, %v2935
        %v3295 = vsel %vm412, %v2449, %v2937
        %v3296 = vsel %vm412, %v2452, %v2939
        %v3297 = vsel %vm412, %v2454, %v2941
        %v3298 = vsel %vm412, %v2457, %v2943
        %v3299 = vsel %vm412, %v2459, %v2945
        %v3300 = vsel %vm412, %v2545, %v2947
        %v3301 = vsel %vm412, %v2547, %v2949
        %v3302 = vsel %vm1431, %v3270, %v2983
        %v3303 = vsel %vm1431, %v3271, %v2985
        %v3304 = vsel %vm1431, %v3272, %v2987
        %v3305 = vsel %vm1431, %v3273, %v2989
        %v3306 = vsel %vm1431, %v3274, %v2991
        %v3307 = vsel %vm1431, %v3275, %v2993
        %v3308 = vsel %vm1431, %v3276, %v2995
        %v3309 = vsel %vm1431, %v3277, %v2997
        %v3310 = vsel %vm1431, %v3278, %v2999
        %v3311 = vsel %vm1431, %v3279, %v3001
        %v3312 = vsel %vm1431, %v3280, %v3003
        %v3313 = vsel %vm1431, %v3281, %v3005
        %v3314 = vsel %vm1431, %v3282, %v3007
        %v3315 = vsel %vm1431, %v3283, %v3009
        %v3316 = vsel %vm1431, %v3284, %v3011
        %v3317 = vsel %vm1431, %v3285, %v3013
        %v3318 = vsel %vm1431, %v3286, %v3015
        %v3319 = vsel %vm1431, %v3287, %v3017
        %v3320 = vsel %vm1431, %v3288, %v3019
        %v3321 = vsel %vm1431, %v3289, %v3021
        %v3322 = vsel %vm1431, %v3290, %v3023
        %v3323 = vsel %vm1431, %v3291, %v3025
        %v3324 = vsel %vm1431, %v3292, %v3027
        %v3325 = vsel %vm1431, %v3293, %v3029
        %v3326 = vsel %vm1431, %v3294, %v3031
        %v3327 = vsel %vm1431, %v3295, %v3033
        %v3328 = vsel %vm1431, %v3296, %v3035
        %v3329 = vsel %vm1431, %v3297, %v3037
        %v3330 = vsel %vm1431, %v3298, %v3039
        %v3331 = vsel %vm1431, %v3299, %v3041
        %v3332 = vsel %vm1431, %v3300, %v3043
        %v3333 = vsel %vm1431, %v3301, %v3045
        %v3334 = vsel %vm1464, %v3302, %v3079
        %v3335 = vsel %vm1464, %v3303, %v3081
        %v3336 = vsel %vm1464, %v3304, %v3083
        %v3337 = vsel %vm1464, %v3305, %v3085
        %v3338 = vsel %vm1464, %v3306, %v3087
        %v3339 = vsel %vm1464, %v3307, %v3089
        %v3340 = vsel %vm1464, %v3308, %v3091
        %v3341 = vsel %vm1464, %v3309, %v3093
        %v3342 = vsel %vm1464, %v3310, %v3095
        %v3343 = vsel %vm1464, %v3311, %v3097
        %v3344 = vsel %vm1464, %v3312, %v3099
        %v3345 = vsel %vm1464, %v3313, %v3101
        %v3346 = vsel %vm1464, %v3314, %v3103
        %v3347 = vsel %vm1464, %v3315, %v3105
        %v3348 = vsel %vm1464, %v3316, %v3107
        %v3349 = vsel %vm1464, %v3317, %v3109
        %v3350 = vsel %vm1464, %v3318, %v3111
        %v3351 = vsel %vm1464, %v3319, %v3113
        %v3352 = vsel %vm1464, %v3320, %v3115
        %v3353 = vsel %vm1464, %v3321, %v3117
        %v3354 = vsel %vm1464, %v3322, %v3119
        %v3355 = vsel %vm1464, %v3323, %v3121
        %v3356 = vsel %vm1464, %v3324, %v3123
        %v3357 = vsel %vm1464, %v3325, %v3125
        %v3358 = vsel %vm1464, %v3326, %v3127
        %v3359 = vsel %vm1464, %v3327, %v3129
        %v3360 = vsel %vm1464, %v3328, %v3131
        %v3361 = vsel %vm1464, %v3329, %v3133
        %v3362 = vsel %vm1464, %v3330, %v3135
        %v3363 = vsel %vm1464, %v3331, %v3137
        %v3364 = vsel %vm1464, %v3332, %v3139
        %v3365 = vsel %vm1464, %v3333, %v3141
        %v3366 = vld [vmem:[#allocation8] sm:$0xff]
        %v3367 = vld [vmem:[#allocation8 + $0x8] sm:$0xff]
        %v3368 = vld [vmem:[#allocation8 + $0x10] sm:$0xff]
        %v3369 = vld [vmem:[#allocation8 + $0x18] sm:$0xff]
        %v3370 = vld [vmem:[#allocation8 + $0x20] sm:$0xff]
        %v3371 = vld [vmem:[#allocation8 + $0x28] sm:$0xff]
        %v3372 = vld [vmem:[#allocation8 + $0x30] sm:$0xff]
        %v3373 = vld [vmem:[#allocation8 + $0x38] sm:$0xff]
        %v3374 = vld [vmem:[#allocation8 + $0x40] sm:$0xff]
        %v3375 = vld [vmem:[#allocation8 + $0x48] sm:$0xff]
        %v3376 = vld [vmem:[#allocation8 + $0x50] sm:$0xff]
        %v3377 = vld [vmem:[#allocation8 + $0x58] sm:$0xff]
        %v3378 = vld [vmem:[#allocation8 + $0x60] sm:$0xff]
        %v3379 = vld [vmem:[#allocation8 + $0x68] sm:$0xff]
        %v3380 = vld [vmem:[#allocation8 + $0x70] sm:$0xff]
        %v3381 = vld [vmem:[#allocation8 + $0x78] sm:$0xff]
        %v3382 = vld [vmem:[#allocation8 + $0x80] sm:$0xff]
        %v3383 = vld [vmem:[#allocation8 + $0x88] sm:$0xff]
        %v3384 = vld [vmem:[#allocation8 + $0x90] sm:$0xff]
        %v3385 = vld [vmem:[#allocation8 + $0x98] sm:$0xff]
        %v3386 = vld [vmem:[#allocation8 + $0xa0] sm:$0xff]
        %v3387 = vld [vmem:[#allocation8 + $0xa8] sm:$0xff]
        %v3388 = vld [vmem:[#allocation8 + $0xb0] sm:$0xff]
        %v3389 = vld [vmem:[#allocation8 + $0xb8] sm:$0xff]
        %v3390 = vld [vmem:[#allocation8 + $0xc0] sm:$0xff]
        %v3391 = vld [vmem:[#allocation8 + $0xc8] sm:$0xff]
        %v3392 = vld [vmem:[#allocation8 + $0xd0] sm:$0xff]
        %v3393 = vld [vmem:[#allocation8 + $0xd8] sm:$0xff]
        %v3394 = vld [vmem:[#allocation8 + $0xe0] sm:$0xff]
        %v3395 = vld [vmem:[#allocation8 + $0xe8] sm:$0xff]
        %v3396 = vld [vmem:[#allocation8 + $0xf0] sm:$0xff]
        %v3397 = vld [vmem:[#allocation8 + $0xf8] sm:$0xff]
        %v3398 = vld [vmem:[#allocation8 + $0x100] sm:$0xff]
        %v3399 = vld [vmem:[#allocation8 + $0x108] sm:$0xff]
        %v3400 = vld [vmem:[#allocation8 + $0x110] sm:$0xff]
        %v3401 = vld [vmem:[#allocation8 + $0x118] sm:$0xff]
        %v3402 = vld [vmem:[%s4] sm:$0x1]
        %v3404 = vlaneseq
        %v3405 = vshrl.u32 %v3404, 7
        %v3406 = vsub.s32 0, %v3405
        %v3407 = vrot.slane %v3402, %v3406
        %v3409 = vsel %vm412, %v2472, 0
        %v3411 = vsel %vm412, %v2474, 0
        %v3413 = vsel %vm412, %v2477, 0
        %v3415 = vsel %vm412, %v2479, 0
        %v3417 = vsel %vm412, %v2482, 0
        %v3419 = vsel %vm412, %v2484, 0
        %v3421 = vsel %vm412, %v2487, 0
        %v3423 = vsel %vm412, %v2489, 0
        %v3425 = vsel %vm412, %v2492, 0
        %v3427 = vsel %vm412, %v2494, 0
        %v3429 = vsel %vm412, %v2497, 0
        %v3431 = vsel %vm412, %v2499, 0
        %v3433 = vsel %vm412, %v2502, 0
        %v3435 = vsel %vm412, %v2504, 0
        %v3437 = vsel %vm412, %v2507, 0
        %v3439 = vsel %vm412, %v2509, 0
        %v3441 = vsel %vm412, %v2512, 0
        %v3443 = vsel %vm412, %v2514, 0
        %v3445 = vsel %vm412, %v2517, 0
        %v3447 = vsel %vm412, %v2519, 0
        %v3449 = vsel %vm412, %v2522, 0
        %v3451 = vsel %vm412, %v2524, 0
        %v3453 = vsel %vm412, %v2527, 0
        %v3455 = vsel %vm412, %v2529, 0
        %v3457 = vsel %vm412, %v2532, 0
        %v3459 = vsel %vm412, %v2534, 0
        %v3461 = vsel %vm412, %v2537, 0
        %v3463 = vsel %vm412, %v2539, 0
        %v3465 = vsel %vm412, %v2582, 0
        %v3467 = vsel %vm412, %v2584, 0
        %v3469 = vsel %vm412, %v2595, 0
        %v3471 = vsel %vm412, %v2597, 0
        %3473 = vmatprep.subr.mxu0 0.0
        %3474 = vmatpush1.msra.mxu0 %v3366
        %3475 = vmatprep.subr.mxu0 0.0
        %3476 = vmatpush1.msra.mxu0 %v3367
        %3477 = vmatprep.subr.mxu0 0.0
        %3478 = vmatpush1.msra.mxu0 %v3368
        %3479 = vmatprep.subr.mxu0 0.0
        %3480 = vmatpush1.msra.mxu0 %v3369
        %3481 = vmatprep.subr.mxu0 0.0
        %3482 = vmatpush1.msra.mxu0 %v3370
        %3483 = vmatprep.subr.mxu0 0.0
        %3484 = vmatpush1.msra.mxu0 %v3371
        %3485 = vmatprep.subr.mxu0 0.0
        %3486 = vmatpush1.msra.mxu0 %v3372
        %3487 = vmatprep.subr.mxu0 0.0
        %3488 = vmatpush1.msra.mxu0 %v3373
        %3489 = vmatprep.subr.mxu0 0.0
        %3490 = vmatpush1.msra.mxu0 %v3374
        %3491 = vmatprep.subr.mxu0 0.0
        %3492 = vmatpush1.msra.mxu0 %v3375
        %3493 = vmatprep.subr.mxu0 0.0
        %3494 = vmatpush1.msra.mxu0 %v3376
        %3495 = vmatprep.subr.mxu0 0.0
        %3496 = vmatpush1.msra.mxu0 %v3377
        %3497 = vmatprep.subr.mxu0 0.0
        %3498 = vmatpush1.msra.mxu0 %v3378
        %3499 = vmatprep.subr.mxu0 0.0
        %3500 = vmatpush1.msra.mxu0 %v3379
        %3501 = vmatprep.subr.mxu0 0.0
        %3502 = vmatpush1.msra.mxu0 %v3380
        %3503 = vmatprep.subr.mxu0 0.0
        %3504 = vmatpush1.msra.mxu0 %v3381
        %3505 = vmatprep.subr.mxu0 0.0
        %3506 = vmatpush1.msra.mxu0 %v3382
        %3507 = vmatprep.subr.mxu0 0.0
        %3508 = vmatpush1.msra.mxu0 %v3383
        %3509 = vmatprep.subr.mxu0 0.0
        %3510 = vmatpush1.msra.mxu0 %v3384
        %3511 = vmatprep.subr.mxu0 0.0
        %3512 = vmatpush1.msra.mxu0 %v3385
        %3513 = vmatprep.subr.mxu0 0.0
        %3514 = vmatpush1.msra.mxu0 %v3386
        %3515 = vmatprep.subr.mxu0 0.0
        %3516 = vmatpush1.msra.mxu0 %v3387
        %3517 = vmatprep.subr.mxu0 0.0
        %3518 = vmatpush1.msra.mxu0 %v3388
        %3519 = vmatprep.subr.mxu0 0.0
        %3520 = vmatpush1.msra.mxu0 %v3389
        %3521 = vmatprep.subr.mxu0 0.0
        %3522 = vmatpush1.msra.mxu0 %v3390
        %3523 = vmatprep.subr.mxu0 0.0
        %3524 = vmatpush1.msra.mxu0 %v3391
        %3525 = vmatprep.subr.mxu0 0.0
        %3526 = vmatpush1.msra.mxu0 %v3392
        %3527 = vmatprep.subr.mxu0 0.0
        %3528 = vmatpush1.msra.mxu0 %v3393
        %3529 = vmatprep.subr.mxu0 0.0
        %3530 = vmatpush1.msra.mxu0 %v3394
        %3531 = vmatprep.subr.mxu0 0.0
        %3532 = vmatpush1.msra.mxu0 %v3395
        %3533 = vmatprep.subr.mxu0 0.0
        %3534 = vmatpush1.msra.mxu0 %v3396
        %3535 = vmatprep.subr.mxu0 0.0
        %3536 = vmatpush1.msra.mxu0 %v3397
        %3537 = vmatprep.mubr.f32.mxu0 %v3334
        %3538 = vmatmul.mubr.f32.gmra.mrb[0].mxu0 %v3238
        %v3539 = vpop.f32.mrb[0].mxu0
        %v3540 = vadd.f32 %v3407, %v3539
        %v3541 = vpop.f32.mrb[0].mxu0
        %3542 = vmatprep.mubr.f32.mxu0 %v3335
        %3543 = vmatmul.mubr.f32.gmra.mrb[0].mxu0 %v3239
        %v3544 = vpop.f32.mrb[0].mxu0
        %v3545 = vadd.f32 %v3407, %v3544
        %v3546 = vpop.f32.mrb[0].mxu0
        %3547 = vmatprep.mubr.f32.mxu0 %v3336
        %3548 = vmatmul.mubr.f32.gmra.mrb[0].mxu0 %v3240
        %v3549 = vpop.f32.mrb[0].mxu0
        %v3550 = vadd.f32 %v3407, %v3549
        %v3551 = vpop.f32.mrb[0].mxu0
        %3552 = vmatprep.mubr.f32.mxu0 %v3337
        %3553 = vmatmul.mubr.f32.gmra.mrb[0].mxu0 %v3241
        %v3554 = vpop.f32.mrb[0].mxu0
        %v3555 = vadd.f32 %v3407, %v3554
        %v3556 = vpop.f32.mrb[0].mxu0
        %3557 = vmatprep.mubr.f32.mxu0 %v3338
        %3558 = vmatmul.mubr.f32.gmra.mrb[0].mxu0 %v3242
        %v3559 = vpop.f32.mrb[0].mxu0
        %v3560 = vadd.f32 %v3407, %v3559
        %v3561 = vpop.f32.mrb[0].mxu0
        %3562 = vmatprep.mubr.f32.mxu0 %v3339
        %3563 = vmatmul.mubr.f32.gmra.mrb[0].mxu0 %v3243
        %v3564 = vpop.f32.mrb[0].mxu0
        %v3565 = vadd.f32 %v3407, %v3564
        %v3566 = vpop.f32.mrb[0].mxu0
        %3567 = vmatprep.mubr.f32.mxu0 %v3340
        %3568 = vmatmul.mubr.f32.gmra.mrb[0].mxu0 %v3244
        %v3569 = vpop.f32.mrb[0].mxu0
        %v3570 = vadd.f32 %v3407, %v3569
        %v3571 = vpop.f32.mrb[0].mxu0
        %3572 = vmatprep.mubr.f32.mxu0 %v3341
        %3573 = vmatmul.mubr.f32.gmra.mrb[0].mxu0 %v3245
        %v3574 = vpop.f32.mrb[0].mxu0
        %v3575 = vadd.f32 %v3407, %v3574
        %v3576 = vpop.f32.mrb[0].mxu0
        %3577 = vmatprep.mubr.f32.mxu0 %v3342
        %3578 = vmatmul.mubr.f32.gmra.mrb[0].mxu0 %v3246
        %v3579 = vpop.f32.mrb[0].mxu0
        %v3580 = vadd.f32 %v3407, %v3579
        %v3581 = vpop.f32.mrb[0].mxu0
        %3582 = vmatprep.mubr.f32.mxu0 %v3343
        %3583 = vmatmul.mubr.f32.gmra.mrb[0].mxu0 %v3247
        %v3584 = vpop.f32.mrb[0].mxu0
        %v3585 = vadd.f32 %v3407, %v3584
        %v3586 = vpop.f32.mrb[0].mxu0
        %3587 = vmatprep.mubr.f32.mxu0 %v3344
        %3588 = vmatmul.mubr.f32.gmra.mrb[0].mxu0 %v3248
        %v3589 = vpop.f32.mrb[0].mxu0
        %v3590 = vadd.f32 %v3407, %v3589
        %v3591 = vpop.f32.mrb[0].mxu0
        %3592 = vmatprep.mubr.f32.mxu0 %v3345
        %3593 = vmatmul.mubr.f32.gmra.mrb[0].mxu0 %v3249
        %v3594 = vpop.f32.mrb[0].mxu0
        %v3595 = vadd.f32 %v3407, %v3594
        %v3596 = vpop.f32.mrb[0].mxu0
        %3597 = vmatprep.mubr.f32.mxu0 %v3346
        %3598 = vmatmul.mubr.f32.gmra.mrb[0].mxu0 %v3250
        %v3599 = vpop.f32.mrb[0].mxu0
        %v3600 = vadd.f32 %v3407, %v3599
        %v3601 = vpop.f32.mrb[0].mxu0
        %3602 = vmatprep.mubr.f32.mxu0 %v3347
        %3603 = vmatmul.mubr.f32.gmra.mrb[0].mxu0 %v3251
        %v3604 = vpop.f32.mrb[0].mxu0
        %v3605 = vadd.f32 %v3407, %v3604
        %v3606 = vpop.f32.mrb[0].mxu0
        %3607 = vmatprep.mubr.f32.mxu0 %v3348
        %3608 = vmatmul.mubr.f32.gmra.mrb[0].mxu0 %v3252
        %v3609 = vpop.f32.mrb[0].mxu0
        %v3610 = vadd.f32 %v3407, %v3609
        %v3611 = vpop.f32.mrb[0].mxu0
        %3612 = vmatprep.mubr.f32.mxu0 %v3349
        %3613 = vmatmul.mubr.f32.gmra.mrb[0].mxu0 %v3253
        %v3614 = vpop.f32.mrb[0].mxu0
        %v3615 = vadd.f32 %v3407, %v3614
        %v3616 = vpop.f32.mrb[0].mxu0
        %3617 = vmatprep.mubr.f32.mxu0 %v3350
        %3618 = vmatmul.mubr.f32.gmra.mrb[0].mxu0 %v3254
        %v3619 = vpop.f32.mrb[0].mxu0
        %v3620 = vadd.f32 %v3407, %v3619
        %v3621 = vpop.f32.mrb[0].mxu0
        %3622 = vmatprep.mubr.f32.mxu0 %v3351
        %3623 = vmatmul.mubr.f32.gmra.mrb[0].mxu0 %v3255
        %v3624 = vpop.f32.mrb[0].mxu0
        %v3625 = vadd.f32 %v3407, %v3624
        %v3626 = vpop.f32.mrb[0].mxu0
        %3627 = vmatprep.mubr.f32.mxu0 %v3352
        %3628 = vmatmul.mubr.f32.gmra.mrb[0].mxu0 %v3256
        %v3629 = vpop.f32.mrb[0].mxu0
        %v3630 = vadd.f32 %v3407, %v3629
        %v3631 = vpop.f32.mrb[0].mxu0
        %3632 = vmatprep.mubr.f32.mxu0 %v3353
        %3633 = vmatmul.mubr.f32.gmra.mrb[0].mxu0 %v3257
        %v3634 = vpop.f32.mrb[0].mxu0
        %v3635 = vadd.f32 %v3407, %v3634
        %v3636 = vpop.f32.mrb[0].mxu0
        %3637 = vmatprep.mubr.f32.mxu0 %v3354
        %3638 = vmatmul.mubr.f32.gmra.mrb[0].mxu0 %v3258
        %v3639 = vpop.f32.mrb[0].mxu0
        %v3640 = vadd.f32 %v3407, %v3639
        %v3641 = vpop.f32.mrb[0].mxu0
        %3642 = vmatprep.mubr.f32.mxu0 %v3355
        %3643 = vmatmul.mubr.f32.gmra.mrb[0].mxu0 %v3259
        %v3644 = vpop.f32.mrb[0].mxu0
        %v3645 = vadd.f32 %v3407, %v3644
        %v3646 = vpop.f32.mrb[0].mxu0
        %3647 = vmatprep.mubr.f32.mxu0 %v3356
        %3648 = vmatmul.mubr.f32.gmra.mrb[0].mxu0 %v3260
        %v3649 = vpop.f32.mrb[0].mxu0
        %v3650 = vadd.f32 %v3407, %v3649
        %v3651 = vpop.f32.mrb[0].mxu0
        %3652 = vmatprep.mubr.f32.mxu0 %v3357
        %3653 = vmatmul.mubr.f32.gmra.mrb[0].mxu0 %v3261
        %v3654 = vpop.f32.mrb[0].mxu0
        %v3655 = vadd.f32 %v3407, %v3654
        %v3656 = vpop.f32.mrb[0].mxu0
        %3657 = vmatprep.mubr.f32.mxu0 %v3358
        %3658 = vmatmul.mubr.f32.gmra.mrb[0].mxu0 %v3262
        %v3659 = vpop.f32.mrb[0].mxu0
        %v3660 = vadd.f32 %v3407, %v3659
        %v3661 = vpop.f32.mrb[0].mxu0
        %3662 = vmatprep.mubr.f32.mxu0 %v3359
        %3663 = vmatmul.mubr.f32.gmra.mrb[0].mxu0 %v3263
        %v3664 = vpop.f32.mrb[0].mxu0
        %v3665 = vadd.f32 %v3407, %v3664
        %v3666 = vpop.f32.mrb[0].mxu0
        %3667 = vmatprep.mubr.f32.mxu0 %v3360
        %3668 = vmatmul.mubr.f32.gmra.mrb[0].mxu0 %v3264
        %v3669 = vpop.f32.mrb[0].mxu0
        %v3670 = vadd.f32 %v3407, %v3669
        %v3671 = vpop.f32.mrb[0].mxu0
        %3672 = vmatprep.mubr.f32.mxu0 %v3361
        %3673 = vmatmul.mubr.f32.gmra.mrb[0].mxu0 %v3265
        %v3674 = vpop.f32.mrb[0].mxu0
        %v3675 = vadd.f32 %v3407, %v3674
        %v3676 = vpop.f32.mrb[0].mxu0
        %3677 = vmatprep.mubr.f32.mxu0 %v3362
        %3678 = vmatmul.mubr.f32.gmra.mrb[0].mxu0 %v3266
        %v3679 = vpop.f32.mrb[0].mxu0
        %v3680 = vadd.f32 %v3407, %v3679
        %v3681 = vpop.f32.mrb[0].mxu0
        %3682 = vmatprep.mubr.f32.mxu0 %v3363
        %3683 = vmatmul.mubr.f32.gmra.mrb[0].mxu0 %v3267
        %v3684 = vpop.f32.mrb[0].mxu0
        %v3685 = vadd.f32 %v3407, %v3684
        %v3686 = vpop.f32.mrb[0].mxu0
        %3687 = vmatprep.mubr.f32.mxu0 %v3364
        %3688 = vmatmul.mubr.f32.gmra.mrb[0].mxu0 %v3268
        %v3689 = vpop.f32.mrb[0].mxu0
        %v3690 = vadd.f32 %v3407, %v3689
        %v3691 = vpop.f32.mrb[0].mxu0
        %3692 = vmatprep.mubr.f32.mxu0 %v3365
        %3693 = vmatmul.mubr.f32.gmra.mrb[0].mxu0 %v3269
        %v3694 = vpop.f32.mrb[0].mxu0
        %v3695 = vadd.f32 %v3407, %v3694
        %v3696 = vpop.f32.mrb[0].mxu0
        %3697 = vdwg.mxu0
        %3698 = vmatprep.subr.mxu0 0.0
        %3699 = vmatpush1.msra.mxu0 %v3398
        %3700 = vmatprep.subr.mxu0 0.0
        %3701 = vmatpush1.msra.mxu0 %v3399
        %3702 = vmatprep.subr.mxu0 0.0
        %3703 = vmatpush1.msra.mxu0 %v3400
        %3704 = vmatprep.subr.mxu0 0.0
        %3705 = vmatpush1.msra.mxu0 %v3401
        %3706 = vmatprep.subr.mxu0 0.0
        %3707 = vmatpush1.msra.mxu0 0.0
        %3708 = vmatprep.subr.mxu0 0.0
        %3709 = vmatpush1.msra.mxu0 0.0
        %3710 = vmatprep.subr.mxu0 0.0
        %3711 = vmatpush1.msra.mxu0 0.0
        %3712 = vmatprep.subr.mxu0 0.0
        %3713 = vmatpush1.msra.mxu0 0.0
        %3714 = vmatprep.subr.mxu0 0.0
        %3715 = vmatpush1.msra.mxu0 0.0
        %3716 = vmatprep.subr.mxu0 0.0
        %3717 = vmatpush1.msra.mxu0 0.0
        %3718 = vmatprep.subr.mxu0 0.0
        %3719 = vmatpush1.msra.mxu0 0.0
        %3720 = vmatprep.subr.mxu0 0.0
        %3721 = vmatpush1.msra.mxu0 0.0
        %3722 = vmatprep.subr.mxu0 0.0
        %3723 = vmatpush1.msra.mxu0 0.0
        %3724 = vmatprep.subr.mxu0 0.0
        %3725 = vmatpush1.msra.mxu0 0.0
        %3726 = vmatprep.subr.mxu0 0.0
        %3727 = vmatpush1.msra.mxu0 0.0
        %3728 = vmatprep.subr.mxu0 0.0
        %3729 = vmatpush1.msra.mxu0 0.0
        %3730 = vmatprep.subr.mxu0 0.0
        %3731 = vmatpush1.msra.mxu0 0.0
        %3732 = vmatprep.subr.mxu0 0.0
        %3733 = vmatpush1.msra.mxu0 0.0
        %3734 = vmatprep.subr.mxu0 0.0
        %3735 = vmatpush1.msra.mxu0 0.0
        %3736 = vmatprep.subr.mxu0 0.0
        %3737 = vmatpush1.msra.mxu0 0.0
        %3738 = vmatprep.subr.mxu0 0.0
        %3739 = vmatpush1.msra.mxu0 0.0
        %3740 = vmatprep.subr.mxu0 0.0
        %3741 = vmatpush1.msra.mxu0 0.0
        %3742 = vmatprep.subr.mxu0 0.0
        %3743 = vmatpush1.msra.mxu0 0.0
        %3744 = vmatprep.subr.mxu0 0.0
        %3745 = vmatpush1.msra.mxu0 0.0
        %3746 = vmatprep.subr.mxu0 0.0
        %3747 = vmatpush1.msra.mxu0 0.0
        %3748 = vmatprep.subr.mxu0 0.0
        %3749 = vmatpush1.msra.mxu0 0.0
        %3750 = vmatprep.subr.mxu0 0.0
        %3751 = vmatpush1.msra.mxu0 0.0
        %3752 = vmatprep.subr.mxu0 0.0
        %3753 = vmatpush1.msra.mxu0 0.0
        %3754 = vmatprep.subr.mxu0 0.0
        %3755 = vmatpush1.msra.mxu0 0.0
        %3756 = vmatprep.subr.mxu0 0.0
        %3757 = vmatpush1.msra.mxu0 0.0
        %3758 = vmatprep.subr.mxu0 0.0
        %3759 = vmatpush1.msra.mxu0 0.0
        %3760 = vmatprep.subr.mxu0 0.0
        %3761 = vmatpush1.msra.mxu0 0.0
        %3762 = vmatprep.mubr.f32.mxu0 0.0
        %3763 = vmatmul.mubr.f32.gmra.mrb[0].mxu0 %v3409
        %v3764 = vpop.f32.mrb[0].mxu0
        %v3765 = vadd.f32 %v3540, %v3764
        %v3766 = vpop.f32.mrb[0].mxu0
        %3767 = vmatprep.mubr.f32.mxu0 0.0
        %3768 = vmatmul.mubr.f32.gmra.mrb[0].mxu0 %v3411
        %v3769 = vpop.f32.mrb[0].mxu0
        %v3770 = vadd.f32 %v3545, %v3769
        %v3771 = vpop.f32.mrb[0].mxu0
        %3772 = vmatprep.mubr.f32.mxu0 0.0
        %3773 = vmatmul.mubr.f32.gmra.mrb[0].mxu0 %v3413
        %v3774 = vpop.f32.mrb[0].mxu0
        %v3775 = vadd.f32 %v3550, %v3774
        %v3776 = vpop.f32.mrb[0].mxu0
        %3777 = vmatprep.mubr.f32.mxu0 0.0
        %3778 = vmatmul.mubr.f32.gmra.mrb[0].mxu0 %v3415
        %v3779 = vpop.f32.mrb[0].mxu0
        %v3780 = vadd.f32 %v3555, %v3779
        %v3781 = vpop.f32.mrb[0].mxu0
        %3782 = vmatprep.mubr.f32.mxu0 0.0
        %3783 = vmatmul.mubr.f32.gmra.mrb[0].mxu0 %v3417
        %v3784 = vpop.f32.mrb[0].mxu0
        %v3785 = vadd.f32 %v3560, %v3784
        %v3786 = vpop.f32.mrb[0].mxu0
        %3787 = vmatprep.mubr.f32.mxu0 0.0
        %3788 = vmatmul.mubr.f32.gmra.mrb[0].mxu0 %v3419
        %v3789 = vpop.f32.mrb[0].mxu0
        %v3790 = vadd.f32 %v3565, %v3789
        %v3791 = vpop.f32.mrb[0].mxu0
        %3792 = vmatprep.mubr.f32.mxu0 0.0
        %3793 = vmatmul.mubr.f32.gmra.mrb[0].mxu0 %v3421
        %v3794 = vpop.f32.mrb[0].mxu0
        %v3795 = vadd.f32 %v3570, %v3794
        %v3796 = vpop.f32.mrb[0].mxu0
        %3797 = vmatprep.mubr.f32.mxu0 0.0
        %3798 = vmatmul.mubr.f32.gmra.mrb[0].mxu0 %v3423
        %v3799 = vpop.f32.mrb[0].mxu0
        %v3800 = vadd.f32 %v3575, %v3799
        %v3801 = vpop.f32.mrb[0].mxu0
        %3802 = vmatprep.mubr.f32.mxu0 0.0
        %3803 = vmatmul.mubr.f32.gmra.mrb[0].mxu0 %v3425
        %v3804 = vpop.f32.mrb[0].mxu0
        %v3805 = vadd.f32 %v3580, %v3804
        %v3806 = vpop.f32.mrb[0].mxu0
        %3807 = vmatprep.mubr.f32.mxu0 0.0
        %3808 = vmatmul.mubr.f32.gmra.mrb[0].mxu0 %v3427
        %v3809 = vpop.f32.mrb[0].mxu0
        %v3810 = vadd.f32 %v3585, %v3809
        %v3811 = vpop.f32.mrb[0].mxu0
        %3812 = vmatprep.mubr.f32.mxu0 0.0
        %3813 = vmatmul.mubr.f32.gmra.mrb[0].mxu0 %v3429
        %v3814 = vpop.f32.mrb[0].mxu0
        %v3815 = vadd.f32 %v3590, %v3814
        %v3816 = vpop.f32.mrb[0].mxu0
        %3817 = vmatprep.mubr.f32.mxu0 0.0
        %3818 = vmatmul.mubr.f32.gmra.mrb[0].mxu0 %v3431
        %v3819 = vpop.f32.mrb[0].mxu0
        %v3820 = vadd.f32 %v3595, %v3819
        %v3821 = vpop.f32.mrb[0].mxu0
        %3822 = vmatprep.mubr.f32.mxu0 0.0
        %3823 = vmatmul.mubr.f32.gmra.mrb[0].mxu0 %v3433
        %v3824 = vpop.f32.mrb[0].mxu0
        %v3825 = vadd.f32 %v3600, %v3824
        %v3826 = vpop.f32.mrb[0].mxu0
        %3827 = vmatprep.mubr.f32.mxu0 0.0
        %3828 = vmatmul.mubr.f32.gmra.mrb[0].mxu0 %v3435
        %v3829 = vpop.f32.mrb[0].mxu0
        %v3830 = vadd.f32 %v3605, %v3829
        %v3831 = vpop.f32.mrb[0].mxu0
        %3832 = vmatprep.mubr.f32.mxu0 0.0
        %3833 = vmatmul.mubr.f32.gmra.mrb[0].mxu0 %v3437
        %v3834 = vpop.f32.mrb[0].mxu0
        %v3835 = vadd.f32 %v3610, %v3834
        %v3836 = vpop.f32.mrb[0].mxu0
        %3837 = vmatprep.mubr.f32.mxu0 0.0
        %3838 = vmatmul.mubr.f32.gmra.mrb[0].mxu0 %v3439
        %v3839 = vpop.f32.mrb[0].mxu0
        %v3840 = vadd.f32 %v3615, %v3839
        %v3841 = vpop.f32.mrb[0].mxu0
        %3842 = vmatprep.mubr.f32.mxu0 0.0
        %3843 = vmatmul.mubr.f32.gmra.mrb[0].mxu0 %v3441
        %v3844 = vpop.f32.mrb[0].mxu0
        %v3845 = vadd.f32 %v3620, %v3844
        %v3846 = vpop.f32.mrb[0].mxu0
        %3847 = vmatprep.mubr.f32.mxu0 0.0
        %3848 = vmatmul.mubr.f32.gmra.mrb[0].mxu0 %v3443
        %v3849 = vpop.f32.mrb[0].mxu0
        %v3850 = vadd.f32 %v3625, %v3849
        %v3851 = vpop.f32.mrb[0].mxu0
        %3852 = vmatprep.mubr.f32.mxu0 0.0
        %3853 = vmatmul.mubr.f32.gmra.mrb[0].mxu0 %v3445
        %v3854 = vpop.f32.mrb[0].mxu0
        %v3855 = vadd.f32 %v3630, %v3854
        %v3856 = vpop.f32.mrb[0].mxu0
        %3857 = vmatprep.mubr.f32.mxu0 0.0
        %3858 = vmatmul.mubr.f32.gmra.mrb[0].mxu0 %v3447
        %v3859 = vpop.f32.mrb[0].mxu0
        %v3860 = vadd.f32 %v3635, %v3859
        %v3861 = vpop.f32.mrb[0].mxu0
        %3862 = vmatprep.mubr.f32.mxu0 0.0
        %3863 = vmatmul.mubr.f32.gmra.mrb[0].mxu0 %v3449
        %v3864 = vpop.f32.mrb[0].mxu0
        %v3865 = vadd.f32 %v3640, %v3864
        %v3866 = vpop.f32.mrb[0].mxu0
        %3867 = vmatprep.mubr.f32.mxu0 0.0
        %3868 = vmatmul.mubr.f32.gmra.mrb[0].mxu0 %v3451
        %v3869 = vpop.f32.mrb[0].mxu0
        %v3870 = vadd.f32 %v3645, %v3869
        %v3871 = vpop.f32.mrb[0].mxu0
        %3872 = vmatprep.mubr.f32.mxu0 0.0
        %3873 = vmatmul.mubr.f32.gmra.mrb[0].mxu0 %v3453
        %v3874 = vpop.f32.mrb[0].mxu0
        %v3875 = vadd.f32 %v3650, %v3874
        %v3876 = vpop.f32.mrb[0].mxu0
        %3877 = vmatprep.mubr.f32.mxu0 0.0
        %3878 = vmatmul.mubr.f32.gmra.mrb[0].mxu0 %v3455
        %v3879 = vpop.f32.mrb[0].mxu0
        %v3880 = vadd.f32 %v3655, %v3879
        %v3881 = vpop.f32.mrb[0].mxu0
        %3882 = vmatprep.mubr.f32.mxu0 0.0
        %3883 = vmatmul.mubr.f32.gmra.mrb[0].mxu0 %v3457
        %v3884 = vpop.f32.mrb[0].mxu0
        %v3885 = vadd.f32 %v3660, %v3884
        %v3886 = vpop.f32.mrb[0].mxu0
        %3887 = vmatprep.mubr.f32.mxu0 0.0
        %3888 = vmatmul.mubr.f32.gmra.mrb[0].mxu0 %v3459
        %v3889 = vpop.f32.mrb[0].mxu0
        %v3890 = vadd.f32 %v3665, %v3889
        %v3891 = vpop.f32.mrb[0].mxu0
        %3892 = vmatprep.mubr.f32.mxu0 0.0
        %3893 = vmatmul.mubr.f32.gmra.mrb[0].mxu0 %v3461
        %v3894 = vpop.f32.mrb[0].mxu0
        %v3895 = vadd.f32 %v3670, %v3894
        %v3896 = vpop.f32.mrb[0].mxu0
        %3897 = vmatprep.mubr.f32.mxu0 0.0
        %3898 = vmatmul.mubr.f32.gmra.mrb[0].mxu0 %v3463
        %v3899 = vpop.f32.mrb[0].mxu0
        %v3900 = vadd.f32 %v3675, %v3899
        %v3901 = vpop.f32.mrb[0].mxu0
        %3902 = vmatprep.mubr.f32.mxu0 0.0
        %3903 = vmatmul.mubr.f32.gmra.mrb[0].mxu0 %v3465
        %v3904 = vpop.f32.mrb[0].mxu0
        %v3905 = vadd.f32 %v3680, %v3904
        %v3906 = vpop.f32.mrb[0].mxu0
        %3907 = vmatprep.mubr.f32.mxu0 0.0
        %3908 = vmatmul.mubr.f32.gmra.mrb[0].mxu0 %v3467
        %v3909 = vpop.f32.mrb[0].mxu0
        %v3910 = vadd.f32 %v3685, %v3909
        %v3911 = vpop.f32.mrb[0].mxu0
        %3912 = vmatprep.mubr.f32.mxu0 0.0
        %3913 = vmatmul.mubr.f32.gmra.mrb[0].mxu0 %v3469
        %v3914 = vpop.f32.mrb[0].mxu0
        %v3915 = vadd.f32 %v3690, %v3914
        %v3916 = vpop.f32.mrb[0].mxu0
        %3917 = vmatprep.mubr.f32.mxu0 0.0
        %3918 = vmatmul.mubr.f32.gmra.mrb[0].mxu0 %v3471
        %v3919 = vpop.f32.mrb[0].mxu0
        %v3920 = vadd.f32 %v3695, %v3919
        %v3921 = vpop.f32.mrb[0].mxu0
        %3922 = vdwg.mxu0
        %v3923 = vsel %vm412, %v3765, 0.0
        %v3924 = vsel %vm412, %v3770, 0.0
        %v3925 = vadd.f32 %v3923, %v3924
        %v3926 = vsel %vm412, %v3775, 0.0
        %v3927 = vadd.f32 %v3925, %v3926
        %v3928 = vsel %vm412, %v3780, 0.0
        %v3929 = vadd.f32 %v3927, %v3928
        %v3930 = vsel %vm412, %v3785, 0.0
        %v3931 = vadd.f32 %v3929, %v3930
        %v3932 = vsel %vm412, %v3790, 0.0
        %v3933 = vadd.f32 %v3931, %v3932
        %v3934 = vsel %vm412, %v3795, 0.0
        %v3935 = vadd.f32 %v3933, %v3934
        %v3936 = vsel %vm412, %v3800, 0.0
        %v3937 = vadd.f32 %v3935, %v3936
        %v3938 = vsel %vm412, %v3805, 0.0
        %v3939 = vadd.f32 %v3937, %v3938
        %v3940 = vsel %vm412, %v3810, 0.0
        %v3941 = vadd.f32 %v3939, %v3940
        %v3942 = vsel %vm412, %v3815, 0.0
        %v3943 = vadd.f32 %v3941, %v3942
        %v3944 = vsel %vm412, %v3820, 0.0
        %v3945 = vadd.f32 %v3943, %v3944
        %v3946 = vsel %vm412, %v3825, 0.0
        %v3947 = vadd.f32 %v3945, %v3946
        %v3948 = vsel %vm412, %v3830, 0.0
        %v3949 = vadd.f32 %v3947, %v3948
        %v3950 = vsel %vm412, %v3835, 0.0
        %v3951 = vadd.f32 %v3949, %v3950
        %v3952 = vsel %vm412, %v3840, 0.0
        %v3953 = vadd.f32 %v3951, %v3952
        %v3954 = vsel %vm412, %v3845, 0.0
        %v3955 = vadd.f32 %v3953, %v3954
        %v3956 = vsel %vm412, %v3850, 0.0
        %v3957 = vadd.f32 %v3955, %v3956
        %v3958 = vsel %vm412, %v3855, 0.0
        %v3959 = vadd.f32 %v3957, %v3958
        %v3960 = vsel %vm412, %v3860, 0.0
        %v3961 = vadd.f32 %v3959, %v3960
        %v3962 = vsel %vm412, %v3865, 0.0
        %v3963 = vadd.f32 %v3961, %v3962
        %v3964 = vsel %vm412, %v3870, 0.0
        %v3965 = vadd.f32 %v3963, %v3964
        %v3966 = vsel %vm412, %v3875, 0.0
        %v3967 = vadd.f32 %v3965, %v3966
        %v3968 = vsel %vm412, %v3880, 0.0
        %v3969 = vadd.f32 %v3967, %v3968
        %v3970 = vsel %vm412, %v3885, 0.0
        %v3971 = vadd.f32 %v3969, %v3970
        %v3972 = vsel %vm412, %v3890, 0.0
        %v3973 = vadd.f32 %v3971, %v3972
        %v3974 = vsel %vm412, %v3895, 0.0
        %v3975 = vadd.f32 %v3973, %v3974
        %v3976 = vsel %vm412, %v3900, 0.0
        %v3977 = vadd.f32 %v3975, %v3976
        %v3978 = vsel %vm412, %v3905, 0.0
        %v3979 = vadd.f32 %v3977, %v3978
        %v3980 = vsel %vm412, %v3910, 0.0
        %v3981 = vadd.f32 %v3979, %v3980
        %v3982 = vsel %vm412, %v3915, 0.0
        %v3983 = vadd.f32 %v3981, %v3982
        %v3984 = vsel %vm412, %v3920, 0.0
        %v3985 = vadd.f32 %v3983, %v3984
        %v3986 = vrot.slane %v3985, 4
        %v3987 = vadd.f32 %v3985, %v3986
        %v3988 = vrot.slane %v3987, 2
        %v3989 = vadd.f32 %v3987, %v3988
        %v3990 = vrot.slane %v3989, 1
        %v3991 = vadd.f32 %v3989, %v3990
        %v3992 = vrcp.pop 256.0
        %v3993 = vmul.f32 %v3991, %v3992
        %v3994 = vld [vmem:[%s5] sm:$0xff]
        %v3995 = vld [vmem:[%s5 + $0x8] sm:$0xff]
        %v3996 = vld [vmem:[%s5 + $0x10] sm:$0xff]
        %v3997 = vld [vmem:[%s5 + $0x18] sm:$0xff]
        %v3998 = vld [vmem:[%s6] sm:$0x1]
        %v4000 = vsel %vm412, %v3993, 0
        %4002 = vmatprep.subr.mxu0 0.0
        %4003 = vmatpush1.msra.mxu0 %v3994
        %4004 = vmatprep.subr.mxu0 0.0
        %4005 = vmatpush1.msra.mxu0 %v3995
        %4006 = vmatprep.subr.mxu0 0.0
        %4007 = vmatpush1.msra.mxu0 %v3996
        %4008 = vmatprep.subr.mxu0 0.0
        %4009 = vmatpush1.msra.mxu0 %v3997
        %4010 = vmatprep.subr.mxu0 0.0
        %4011 = vmatpush1.msra.mxu0 0.0
        %4012 = vmatprep.subr.mxu0 0.0
        %4013 = vmatpush1.msra.mxu0 0.0
        %4014 = vmatprep.subr.mxu0 0.0
        %4015 = vmatpush1.msra.mxu0 0.0
        %4016 = vmatprep.subr.mxu0 0.0
        %4017 = vmatpush1.msra.mxu0 0.0
        %4018 = vmatprep.subr.mxu0 0.0
        %4019 = vmatpush1.msra.mxu0 0.0
        %4020 = vmatprep.subr.mxu0 0.0
        %4021 = vmatpush1.msra.mxu0 0.0
        %4022 = vmatprep.subr.mxu0 0.0
        %4023 = vmatpush1.msra.mxu0 0.0
        %4024 = vmatprep.subr.mxu0 0.0
        %4025 = vmatpush1.msra.mxu0 0.0
        %4026 = vmatprep.subr.mxu0 0.0
        %4027 = vmatpush1.msra.mxu0 0.0
        %4028 = vmatprep.subr.mxu0 0.0
        %4029 = vmatpush1.msra.mxu0 0.0
        %4030 = vmatprep.subr.mxu0 0.0
        %4031 = vmatpush1.msra.mxu0 0.0
        %4032 = vmatprep.subr.mxu0 0.0
        %4033 = vmatpush1.msra.mxu0 0.0
        %4034 = vmatprep.subr.mxu0 0.0
        %4035 = vmatpush1.msra.mxu0 0.0
        %4036 = vmatprep.subr.mxu0 0.0
        %4037 = vmatpush1.msra.mxu0 0.0
        %4038 = vmatprep.subr.mxu0 0.0
        %4039 = vmatpush1.msra.mxu0 0.0
        %4040 = vmatprep.subr.mxu0 0.0
        %4041 = vmatpush1.msra.mxu0 0.0
        %4042 = vmatprep.subr.mxu0 0.0
        %4043 = vmatpush1.msra.mxu0 0.0
        %4044 = vmatprep.subr.mxu0 0.0
        %4045 = vmatpush1.msra.mxu0 0.0
        %4046 = vmatprep.subr.mxu0 0.0
        %4047 = vmatpush1.msra.mxu0 0.0
        %4048 = vmatprep.subr.mxu0 0.0
        %4049 = vmatpush1.msra.mxu0 0.0
        %4050 = vmatprep.subr.mxu0 0.0
        %4051 = vmatpush1.msra.mxu0 0.0
        %4052 = vmatprep.subr.mxu0 0.0
        %4053 = vmatpush1.msra.mxu0 0.0
        %4054 = vmatprep.subr.mxu0 0.0
        %4055 = vmatpush1.msra.mxu0 0.0
        %4056 = vmatprep.subr.mxu0 0.0
        %4057 = vmatpush1.msra.mxu0 0.0
        %4058 = vmatprep.subr.mxu0 0.0
        %4059 = vmatpush1.msra.mxu0 0.0
        %4060 = vmatprep.subr.mxu0 0.0
        %4061 = vmatpush1.msra.mxu0 0.0
        %4062 = vmatprep.subr.mxu0 0.0
        %4063 = vmatpush1.msra.mxu0 0.0
        %4064 = vmatprep.subr.mxu0 0.0
        %4065 = vmatpush1.msra.mxu0 0.0
        %4066 = vmatprep.mubr.f32.mxu0 0.0
        %4067 = vmatmul.mubr.f32.gmra.mrb[0].mxu0 %v4000
        %v4068 = vpop.f32.mrb[0].mxu0
        %v4069 = vadd.f32 %v3998, %v4068
        %v4070 = vpop.f32.mrb[0].mxu0
        %4071 = vdwg.mxu0
        %v4072 = vmax.f32 %v4069, 0.0
        %v4073 = vld [vmem:[%s7] sm:$0xf]
        %v4074 = vld [vmem:[%s8] sm:$0x1]
        %vm4075 = vcmask 31744
        %v4077 = vsel %vm4075, %v4072, 0
        %vm4079 = vcmask 1043456
        %v4081 = vsel %vm4079, %v4073, 0
        %4083 = vmatprep.subr.mxu0 0.0
        %4084 = vmatpush1.msra.mxu0 %v4081
        %4085 = vmatprep.subr.mxu0 0.0
        %4086 = vmatpush1.msra.mxu0 0.0
        %4087 = vmatprep.subr.mxu0 0.0
        %4088 = vmatpush1.msra.mxu0 0.0
        %4089 = vmatprep.subr.mxu0 0.0
        %4090 = vmatpush1.msra.mxu0 0.0
        %4091 = vmatprep.subr.mxu0 0.0
        %4092 = vmatpush1.msra.mxu0 0.0
        %4093 = vmatprep.subr.mxu0 0.0
        %4094 = vmatpush1.msra.mxu0 0.0
        %4095 = vmatprep.subr.mxu0 0.0
        %4096 = vmatpush1.msra.mxu0 0.0
        %4097 = vmatprep.subr.mxu0 0.0
        %4098 = vmatpush1.msra.mxu0 0.0
        %4099 = vmatprep.subr.mxu0 0.0
        %4100 = vmatpush1.msra.mxu0 0.0
        %4101 = vmatprep.subr.mxu0 0.0
        %4102 = vmatpush1.msra.mxu0 0.0
        %4103 = vmatprep.subr.mxu0 0.0
        %4104 = vmatpush1.msra.mxu0 0.0
        %4105 = vmatprep.subr.mxu0 0.0
        %4106 = vmatpush1.msra.mxu0 0.0
        %4107 = vmatprep.subr.mxu0 0.0
        %4108 = vmatpush1.msra.mxu0 0.0
        %4109 = vmatprep.subr.mxu0 0.0
        %4110 = vmatpush1.msra.mxu0 0.0
        %4111 = vmatprep.subr.mxu0 0.0
        %4112 = vmatpush1.msra.mxu0 0.0
        %4113 = vmatprep.subr.mxu0 0.0
        %4114 = vmatpush1.msra.mxu0 0.0
        %4115 = vmatprep.subr.mxu0 0.0
        %4116 = vmatpush1.msra.mxu0 0.0
        %4117 = vmatprep.subr.mxu0 0.0
        %4118 = vmatpush1.msra.mxu0 0.0
        %4119 = vmatprep.subr.mxu0 0.0
        %4120 = vmatpush1.msra.mxu0 0.0
        %4121 = vmatprep.subr.mxu0 0.0
        %4122 = vmatpush1.msra.mxu0 0.0
        %4123 = vmatprep.subr.mxu0 0.0
        %4124 = vmatpush1.msra.mxu0 0.0
        %4125 = vmatprep.subr.mxu0 0.0
        %4126 = vmatpush1.msra.mxu0 0.0
        %4127 = vmatprep.subr.mxu0 0.0
        %4128 = vmatpush1.msra.mxu0 0.0
        %4129 = vmatprep.subr.mxu0 0.0
        %4130 = vmatpush1.msra.mxu0 0.0
        %4131 = vmatprep.subr.mxu0 0.0
        %4132 = vmatpush1.msra.mxu0 0.0
        %4133 = vmatprep.subr.mxu0 0.0
        %4134 = vmatpush1.msra.mxu0 0.0
        %4135 = vmatprep.subr.mxu0 0.0
        %4136 = vmatpush1.msra.mxu0 0.0
        %4137 = vmatprep.subr.mxu0 0.0
        %4138 = vmatpush1.msra.mxu0 0.0
        %4139 = vmatprep.subr.mxu0 0.0
        %4140 = vmatpush1.msra.mxu0 0.0
        %4141 = vmatprep.subr.mxu0 0.0
        %4142 = vmatpush1.msra.mxu0 0.0
        %4143 = vmatprep.subr.mxu0 0.0
        %4144 = vmatpush1.msra.mxu0 0.0
        %4145 = vmatprep.subr.mxu0 0.0
        %4146 = vmatpush1.msra.mxu0 0.0
        %4147 = vmatprep.mubr.f32.mxu0 0.0
        %4148 = vmatmul.mubr.f32.gmra.mrb[0].mxu0 %v4077
        %v4149 = vpop.f32.mrb[0].mxu0
        %v4150 = vadd.f32 %v4074, %v4149
        %v4151 = vpop.f32.mrb[0].mxu0
        %4152 = vdwg.mxu0
        %v4153 = vxor.u32 %v4150, 2147483648
        %v4154 = vmul.f32 %v4153, 1.442695
        %v4155 = vpow.pop %v4154
        %v4156 = vadd.f32 %v4155, 1.0
        %v4157 = vrcp.pop %v4156
        %v4158 = vmul.f32 1.0, %v4157
        %v4159 = vlaneseq
        %v4160 = vshrl.u32 %v4159, 7
        %v4161 = vsub.s32 0, %v4160
        %v4162 = vrot.slane %v4158, %v4161
        %v4163 = vmul.f32 %v3765, %v4162
        %v4164 = vmul.f32 %v3770, %v4162
        %v4165 = vmul.f32 %v3775, %v4162
        %v4166 = vmul.f32 %v3780, %v4162
        %v4167 = vmul.f32 %v3785, %v4162
        %v4168 = vmul.f32 %v3790, %v4162
        %v4169 = vmul.f32 %v3795, %v4162
        %v4170 = vmul.f32 %v3800, %v4162
        %v4171 = vmul.f32 %v3805, %v4162
        %v4172 = vmul.f32 %v3810, %v4162
        %v4173 = vmul.f32 %v3815, %v4162
        %v4174 = vmul.f32 %v3820, %v4162
        %v4175 = vmul.f32 %v3825, %v4162
        %v4176 = vmul.f32 %v3830, %v4162
        %v4177 = vmul.f32 %v3835, %v4162
        %v4178 = vmul.f32 %v3840, %v4162
        %v4179 = vmul.f32 %v3845, %v4162
        %v4180 = vmul.f32 %v3850, %v4162
        %v4181 = vmul.f32 %v3855, %v4162
        %v4182 = vmul.f32 %v3860, %v4162
        %v4183 = vmul.f32 %v3865, %v4162
        %v4184 = vmul.f32 %v3870, %v4162
        %v4185 = vmul.f32 %v3875, %v4162
        %v4186 = vmul.f32 %v3880, %v4162
        %v4187 = vmul.f32 %v3885, %v4162
        %v4188 = vmul.f32 %v3890, %v4162
        %v4189 = vmul.f32 %v3895, %v4162
        %v4190 = vmul.f32 %v3900, %v4162
        %v4191 = vmul.f32 %v3905, %v4162
        %v4192 = vmul.f32 %v3910, %v4162
        %v4193 = vmul.f32 %v3915, %v4162
        %v4194 = vmul.f32 %v3920, %v4162
        %v4195 = vadd.f32 %v380, %v4163
        %v4196 = vadd.f32 %v381, %v4164
        %v4197 = vadd.f32 %v382, %v4165
        %v4198 = vadd.f32 %v383, %v4166
        %v4199 = vadd.f32 %v384, %v4167
        %v4200 = vadd.f32 %v385, %v4168
        %v4201 = vadd.f32 %v386, %v4169
        %v4202 = vadd.f32 %v387, %v4170
        %v4203 = vadd.f32 %v388, %v4171
        %v4204 = vadd.f32 %v389, %v4172
        %v4205 = vadd.f32 %v390, %v4173
        %v4206 = vadd.f32 %v391, %v4174
        %v4207 = vadd.f32 %v392, %v4175
        %v4208 = vadd.f32 %v393, %v4176
        %v4209 = vadd.f32 %v394, %v4177
        %v4210 = vadd.f32 %v395, %v4178
        %v4211 = vadd.f32 %v396, %v4179
        %v4212 = vadd.f32 %v397, %v4180
        %v4213 = vadd.f32 %v398, %v4181
        %v4214 = vadd.f32 %v399, %v4182
        %v4215 = vadd.f32 %v400, %v4183
        %v4216 = vadd.f32 %v401, %v4184
        %v4217 = vadd.f32 %v402, %v4185
        %v4218 = vadd.f32 %v403, %v4186
        %v4219 = vadd.f32 %v404, %v4187
        %v4220 = vadd.f32 %v405, %v4188
        %v4221 = vadd.f32 %v406, %v4189
        %v4222 = vadd.f32 %v407, %v4190
        %v4223 = vadd.f32 %v408, %v4191
        %v4224 = vadd.f32 %v409, %v4192
        %v4225 = vadd.f32 %v410, %v4193
        %v4226 = vadd.f32 %v411, %v4194
        %4227 = vst.msk [vmem:[%s379] sm:$0xff] %vm412, %v4195
        %4228 = vst.msk [vmem:[%s379 + $0x8] sm:$0xff] %vm412, %v4196
        %4229 = vst.msk [vmem:[%s379 + $0x10] sm:$0xff] %vm412, %v4197
        %4230 = vst.msk [vmem:[%s379 + $0x18] sm:$0xff] %vm412, %v4198
        %4231 = vst.msk [vmem:[%s379 + $0x20] sm:$0xff] %vm412, %v4199
        %4232 = vst.msk [vmem:[%s379 + $0x28] sm:$0xff] %vm412, %v4200
        %4233 = vst.msk [vmem:[%s379 + $0x30] sm:$0xff] %vm412, %v4201
        %4234 = vst.msk [vmem:[%s379 + $0x38] sm:$0xff] %vm412, %v4202
        %4235 = vst.msk [vmem:[%s379 + $0x40] sm:$0xff] %vm412, %v4203
        %4236 = vst.msk [vmem:[%s379 + $0x48] sm:$0xff] %vm412, %v4204
        %4237 = vst.msk [vmem:[%s379 + $0x50] sm:$0xff] %vm412, %v4205
        %4238 = vst.msk [vmem:[%s379 + $0x58] sm:$0xff] %vm412, %v4206
        %4239 = vst.msk [vmem:[%s379 + $0x60] sm:$0xff] %vm412, %v4207
        %4240 = vst.msk [vmem:[%s379 + $0x68] sm:$0xff] %vm412, %v4208
        %4241 = vst.msk [vmem:[%s379 + $0x70] sm:$0xff] %vm412, %v4209
        %4242 = vst.msk [vmem:[%s379 + $0x78] sm:$0xff] %vm412, %v4210
        %4243 = vst.msk [vmem:[%s379 + $0x80] sm:$0xff] %vm412, %v4211
        %4244 = vst.msk [vmem:[%s379 + $0x88] sm:$0xff] %vm412, %v4212
        %4245 = vst.msk [vmem:[%s379 + $0x90] sm:$0xff] %vm412, %v4213
        %4246 = vst.msk [vmem:[%s379 + $0x98] sm:$0xff] %vm412, %v4214
        %4247 = vst.msk [vmem:[%s379 + $0xa0] sm:$0xff] %vm412, %v4215
        %4248 = vst.msk [vmem:[%s379 + $0xa8] sm:$0xff] %vm412, %v4216
        %4249 = vst.msk [vmem:[%s379 + $0xb0] sm:$0xff] %vm412, %v4217
        %4250 = vst.msk [vmem:[%s379 + $0xb8] sm:$0xff] %vm412, %v4218
        %4251 = vst.msk [vmem:[%s379 + $0xc0] sm:$0xff] %vm412, %v4219
        %4252 = vst.msk [vmem:[%s379 + $0xc8] sm:$0xff] %vm412, %v4220
        %4253 = vst.msk [vmem:[%s379 + $0xd0] sm:$0xff] %vm412, %v4221
        %4254 = vst.msk [vmem:[%s379 + $0xd8] sm:$0xff] %vm412, %v4222
        %4255 = vst.msk [vmem:[%s379 + $0xe0] sm:$0xff] %vm412, %v4223
        %4256 = vst.msk [vmem:[%s379 + $0xe8] sm:$0xff] %vm412, %v4224
        %4257 = vst.msk [vmem:[%s379 + $0xf0] sm:$0xff] %vm412, %v4225
        %4258 = vst.msk [vmem:[%s379 + $0xf8] sm:$0xff] %vm412, %v4226
        %s4259 = sand.u32 %s229, 1
        %s4260 = scalar_lea.sflag [#allocation5], %s4259
        %s4261 = sand.u32 %s229, 1
        %s4262 = smul.addr %s4261, 256
        %s4263 = scalar_lea.vmem [#allocation9], %s4262
        // Predicated region
        $region69: #{light_residual_block.1} parent=55 // pred_check
          %p4264 = pneg %p239
        $region70: #{light_residual_block.1} parent=55 // pred_check_branch
          %4266 = sbr.rel (%p4264) target = $region72
        $region71: #{light_residual_block.1} parent=55 // pred_region
          %s4268 = ssub.s32 4096, 4096
          %4269 = vsyncadd %s4260, %s4268
          %s4270 = smul.addr %s27, 32
          %s4271 = smul.addr %s4270, 128
          %s4272 = scalar_lea.hbm %s9, %s4271
          %s4273 = sshll.u32 %s4263, 4
          %s4274 = int_to_ptr.vmem [resolvable:$true] %s4273
          %4279 = dma.vmem_to_hbm [thread:$0]  %s4274, 4096, %s4272, %s4260, 128, 128, 8
        $region72: #{light_residual_block.1} parent=55 // pred_fallthru
          _
      $region56: #{light_residual_block.1} parent=5 // pred_fallthru
        _
      %p4280 = scmp.le.s32.totalorder 2, %s22
      // Predicated region
      $region73: #{light_residual_block.1} parent=5 // pred_check
        %p4281 = pneg %p4280
      $region74: #{light_residual_block.1} parent=5 // pred_check_branch
        %4283 = sbr.rel (%p4281) target = $region76
      $region75: #{light_residual_block.1} parent=5 // pred_region
        %s4284 = ssub.s32 %s22, 2
        // Predicated region
        $region77: #{light_residual_block.1} parent=75 // pred_check
          %p4285 = pneg %p245
        $region78: #{light_residual_block.1} parent=75 // pred_check_branch
          %4287 = sbr.rel (%p4285) target = $region80
        $region79: #{light_residual_block.1} parent=75 // pred_region
          %s4288 = sand.u32 %s230, 1
          %s4289 = scalar_lea.sflag [#allocation5], %s4288
          %s4290 = sand.u32 %s230, 1
          %s4291 = smul.addr %s4290, 256
          %s4292 = scalar_lea.vmem [#allocation9], %s4291
          %4293 = dma.done %s4289, 4096
        $region80: #{light_residual_block.1} parent=75 // pred_fallthru
          _
      $region76: #{light_residual_block.1} parent=5 // pred_fallthru
        _
    $region6: #{light_residual_block.1} parent=1 // loop_footer
      %s26 = sadd.s32 1, %s22
    $region7: #{light_residual_block.1} parent=1 // loop_footer_branch
      %21 = sbr.rel target = $region3
    $region8: #{light_residual_block.1} parent=1 // loop_exit
      _
    %4294 = vsyncpa [#allocation4], 1
    %s4295 = scalar_lea.sflag [#allocation4], 1
    %4296 = vsyncpa %s4295, 1
    %4297 = vsyncpa [#allocation7], 1
    %4298 = vsyncpa [#allocation5], 1
    %s4299 = scalar_lea.sflag [#allocation5], 1
    %4300 = vsyncpa %s4299, 1

</llo_original>
